<compile_context>
chip_gen: v7x
topology: tpu7x:2x2x1
jax: 0.10.0
libtpu: 0.0.40
codegen_flags: <defaults>
</compile_context>

<pallas_src>
import numpy as np
import jax
import jax.numpy as jnp
from jax.experimental import pallas as pl
from jax.experimental.pallas import tpu as pltpu

FPAD = 128             # padded (lane-dense) feature width for every feature tensor
TARGET_MXU_ROWS = 256  # edge rows per block to target (~128 for v5e, 256-512 v6e/v7x)


# ---------------------------------------------------------------------------
# Kernel: G_BLK graphs per grid step, all N GNN rounds in-VMEM.
#
# Weight slab layout (w1s/w2s bf16, biases f32; zero rows/cols outside the true
# fan-in / fan-out, hidden width padded to MPAD=128):
#   w1s [12, FPAD, MPAD]  first-layer weights, split by concat component:
#       0..3  EdgeModel phi_e            [x_src | x_dst | e | u]
#       4     NodeModel_A   agg phi      [e']
#       5..7  NodeModel_A   phi_x        [x | e_agg | u]
#       8     GlobalModel_A agg phi      [x']
#       9..10 GlobalModel_A phi_u        [x_agg | u]
#       11    readout mlp                [u]
#   b1s [6, MPAD], w2s [6, MPAD, FPAD], b2s [6, FPAD] indexed by MLP:
#       0 edge, 1 node-agg, 2 node, 3 glob-agg, 4 global, 5 readout
# ---------------------------------------------------------------------------
def gnn_nagg_a_kernel(x_ref, e_ref, u_ref, ei_ref,
                      w1_ref, b1_ref, w2_ref, b2_ref, out_ref):
    f32, bf16 = jnp.float32, jnp.bfloat16
    rn = x_ref.shape[1]          # node rows in block  (= g_blk * n_per)
    re = e_ref.shape[1]          # edge rows in block  (= g_blk * e_per)
    g = u_ref.shape[1]           # graphs in block
    n_steps = out_ref.shape[1]
    n_per, e_per = rn // g, re // g

    def mm(a, b):                # bf16 x bf16 -> f32 accumulate (native MXU path)
        return jnp.dot(a, b, preferred_element_type=f32)

    def scatter(onehot, vals):   # onehot^T @ vals : [R,C]x[R,M] -> [C,M], f32 accumulate
        return jax.lax.dot_general(onehot, vals, (((0,), (0,)), ((), ())),
                                   preferred_element_type=f32)

    # --- step-invariant one-hots built in-kernel from int32 ids (bf16 MXU operands) ---
    # TODO(synk): for very large graphs, tile these over node-column chunks instead of
    #             materializing the full [re, rn] matrix.
    src = ei_ref[0, :, 0:1]                                      # [re,1] block-local src id
    dst = ei_ref[0, :, 1:2]                                      # [re,1] block-local dst id
    col = jax.lax.broadcasted_iota(jnp.int32, (re, rn), 1)
    s_src = (col == src).astype(bf16)                            # [re, rn]
    s_dst = (col == dst).astype(bf16)                            # [re, rn]

    # edge->graph and node->graph membership (block-diagonal batch structure)
    er = jax.lax.broadcasted_iota(jnp.int32, (re, g), 0)
    ec = jax.lax.broadcasted_iota(jnp.int32, (re, g), 1)
    de = er - ec * e_per
    m_edge = ((de >= 0) & (de < e_per)).astype(bf16)             # [re, g]
    nr = jax.lax.broadcasted_iota(jnp.int32, (rn, g), 0)
    nc = jax.lax.broadcasted_iota(jnp.int32, (rn, g), 1)
    dn = nr - nc * n_per
    m_node = ((dn >= 0) & (dn < n_per)).astype(bf16)             # [rn, g]

    def gnn_round(step, carry):
        x, e, u = carry                                          # x,e bf16; u f32
        u_b = u.astype(bf16)

        # ---- EdgeModel: e' = phi_e([x_src, x_dst, e, u])  (project -> gather) ----
        px_s = mm(x, w1_ref[0]).astype(bf16)                     # [rn, M]
        px_d = mm(x, w1_ref[1]).astype(bf16)                     # [rn, M]
        pu_e = mm(u_b, w1_ref[3]).astype(bf16)                   # [g,  M]
        h_e = (mm(s_src, px_s) + mm(s_dst, px_d)                 # gather x[src], x[dst]
               + mm(e, w1_ref[2]) + mm(m_edge, pu_e)             # e term + u[batch_e]
               + b1_ref[0:1, :])
        h_e = jnp.maximum(h_e, 0.0).astype(bf16)                 # [re, M]
        e_new = (mm(h_e, w2_ref[0]) + b2_ref[0:1, :]).astype(bf16)   # [re, FPAD]

        # ---- NodeModel_A: x' = phi_x([x, scatter_dst(phi_ea(e')), u]) (project -> scatter)
        h_ea = jnp.maximum(mm(e_new, w1_ref[4]) + b1_ref[1:2, :], 0.0).astype(bf16)
        phi_e = (mm(h_ea, w2_ref[1]) + b2_ref[1:2, :]).astype(bf16)  # [re, FPAD]
        pphi = mm(phi_e, w1_ref[6]).astype(bf16)                     # [re, M]
        pu_n = mm(u_b, w1_ref[7]).astype(bf16)                       # [g,  M]
        h_x = (mm(x, w1_ref[5]) + scatter(s_dst, pphi)               # scatter-add to dst
               + mm(m_node, pu_n) + b1_ref[2:3, :])
        h_x = jnp.maximum(h_x, 0.0).astype(bf16)                     # [rn, M]
        x_new = (mm(h_x, w2_ref[2]) + b2_ref[2:3, :]).astype(bf16)   # [rn, FPAD]

        # ---- GlobalModel_NodeOnly_A: u' = phi_u([segment_sum(phi_xa(x')), u]) ----
        h_xa = jnp.maximum(mm(x_new, w1_ref[8]) + b1_ref[3:4, :], 0.0).astype(bf16)
        phi_x = (mm(h_xa, w2_ref[3]) + b2_ref[3:4, :]).astype(bf16)  # [rn, FPAD]
        x_agg = scatter(m_node, phi_x).astype(bf16)                  # [g, FPAD] per-graph sum
        h_u = jnp.maximum(mm(x_agg, w1_ref[9]) + mm(u_b, w1_ref[10])
                          + b1_ref[4:5, :], 0.0).astype(bf16)        # [g, M]
        u_new = mm(h_u, w2_ref[4]) + b2_ref[4:5, :]                  # [g, FPAD] f32

        # ---- readout: out_list.append(mlp(u')) ----
        h_o = jnp.maximum(mm(u_new.astype(bf16), w1_ref[11]) + b1_ref[5:6, :],
                          0.0).astype(bf16)
        out_ref[0, pl.ds(step, 1), :, :] = (mm(h_o, w2_ref[5]) + b2_ref[5:6, :])[None]

        return x_new, e_new, u_new

    jax.lax.fori_loop(0, n_steps, gnn_round,
                      (x_ref[0], e_ref[0], u_ref[0]),
                      unroll=n_steps <= 8)


# ---------------------------------------------------------------------------
# Parameter construction (PyTorch-Linear-style uniform init), packed into 4 slabs
# (bf16 weights, f32 biases, hidden width padded to MPAD).
# ---------------------------------------------------------------------------
def init_params(key, mlp_layers, f_dict):
    m = mlp_layers[0]
    mpad = max(128, ((m + 127) // 128) * 128)
    fe, fx, fu, h, fout = (f_dict[k] for k in ("f_e", "f_x", "f_u", "h", "f_out"))
    assert max(fe, fx, fu, h, fout) <= FPAD

    # (first-layer concat components, second-layer output width)
    mlps = [
        ([fx, fx, fe, fu], fe),   # EdgeModel phi_e
        ([fe], h),                # NodeModel_A aggregation phi
        ([fx, h, fu], fx),        # NodeModel_A phi_x
        ([fx], h),                # GlobalModel_NodeOnly_A aggregation phi
        ([h, fu], fu),            # GlobalModel_NodeOnly_A phi_u
        ([fu], fout),             # readout mlp
    ]
    n_blk = sum(len(c) for c, _ in mlps)

    w1s = np.zeros((n_blk, FPAD, mpad), np.float32)
    b1s = np.zeros((len(mlps), mpad), np.float32)
    w2s = np.zeros((len(mlps), mpad, FPAD), np.float32)
    b2s = np.zeros((len(mlps), FPAD), np.float32)

    keys = jax.random.split(key, len(mlps))
    blk = 0
    for i, (comps, f_out_i) in enumerate(mlps):
        k_in = sum(comps)
        k1, k2, k3, k4 = jax.random.split(keys[i], 4)
        bnd1 = 1.0 / float(k_in) ** 0.5
        w1 = np.asarray(jax.random.uniform(k1, (k_in, m), jnp.float32, -bnd1, bnd1))
        b1 = np.asarray(jax.random.uniform(k2, (m,), jnp.float32, -bnd1, bnd1))
        bnd2 = 1.0 / float(m) ** 0.5
        w2 = np.asarray(jax.random.uniform(k3, (m, f_out_i), jnp.float32, -bnd2, bnd2))
        b2 = np.asarray(jax.random.uniform(k4, (f_out_i,), jnp.float32, -bnd2, bnd2))
        r = 0
        for c in comps:
            w1s[blk, :c, :m] = w1[r:r + c]
            r += c
            blk += 1
        b1s[i, :m] = b1
        w2s[i, :m, :f_out_i] = w2
        b2s[i, :f_out_i] = b2

    return {"w1s": jnp.asarray(w1s, jnp.bfloat16), "b1s": jnp.asarray(b1s),
            "w2s": jnp.asarray(w2s, jnp.bfloat16), "b2s": jnp.asarray(b2s),
            "mlp_hidden": m, "mpad": mpad}


def _nbytes(a):
    return int(np.prod(a.shape)) * a.dtype.itemsize


def _choose_gblk(n_graphs, e_per, target_rows=TARGET_MXU_ROWS):
    """Largest graph-block size dividing n_graphs s.t. edge rows <= target and the
    grid still has >=2 steps (so both v7x TensorCores get work)."""
    best = 1
    for g in range(1, n_graphs + 1):
        if n_graphs % g != 0:
            continue
        if g * e_per > target_rows:
            continue
        if n_graphs >= 2 and n_graphs // g < 2:
            continue
        best = g
    return best


# ---------------------------------------------------------------------------
# Forward wrapper: PyG-style flat (x, edge_index, e, u, batch) -> list of N outputs.
# ---------------------------------------------------------------------------
def gnn_nagg_a_forward(params, x, edge_index, e, u, batch, n_steps, f_dict):
    fe, fx, fu, _, fout = (f_dict[k] for k in ("f_e", "f_x", "f_u", "h", "f_out"))

    n_graphs = int(u.shape[0])
    n_total, e_total = int(x.shape[0]), int(e.shape[0])
    assert n_total % n_graphs == 0 and e_total % n_graphs == 0, \
        "equal per-graph node/edge counts required"          # TODO(synk): pad ragged graphs
    n_per, e_per = n_total // n_graphs, e_total // n_graphs

    batch_np = np.asarray(batch)
    assert np.array_equal(batch_np, np.repeat(np.arange(n_graphs), n_per)), \
        "nodes must be contiguous and sorted by graph"

    # Host-side glue: group edges by graph, convert to block-local node ids.
    ei_np = np.asarray(edge_index).astype(np.int64)
    g_of_edge = ei_np[0] // n_per
    assert np.array_equal(ei_np[1] // n_per, g_of_edge), "edges must not cross graphs"
    order = np.argsort(g_of_edge, kind="stable")
    ei_np = ei_np[:, order]
    g_of_edge = g_of_edge[order]
    assert np.all(np.bincount(g_of_edge, minlength=n_graphs) == e_per)
    e_sorted = np.asarray(e)[order]

    # Graph batching: G_BLK graphs per grid step (block-diagonal one-hot in-kernel).
    g_blk = _choose_gblk(n_graphs, e_per)
    n_blocks = n_graphs // g_blk
    rn, re = g_blk * n_per, g_blk * e_per

    ei_local = ei_np - (g_of_edge * n_per)[None, :]              # graph-local ids
    ei_block = ei_local + ((g_of_edge % g_blk) * n_per)[None, :]  # block-local ids
    ei_arr = jnp.asarray(ei_block.T.reshape(n_blocks, re, 2).astype(np.int32))

    # Per-block, lane-dense (zero-padded to FPAD) feature tensors; bf16 node/edge inputs.
    xg = jnp.pad(jnp.asarray(x).reshape(n_graphs, n_per, fx),
                 ((0, 0), (0, 0), (0, FPAD - fx))
                 ).reshape(n_blocks, rn, FPAD).astype(jnp.bfloat16)
    eg = jnp.pad(jnp.asarray(e_sorted).reshape(n_graphs, e_per, fe),
                 ((0, 0), (0, 0), (0, FPAD - fe))
                 ).reshape(n_blocks, re, FPAD).astype(jnp.bfloat16)
    ug = jnp.pad(jnp.asarray(u).reshape(n_graphs, 1, fu),
                 ((0, 0), (0, 0), (0, FPAD - fu))
                 ).reshape(n_blocks, g_blk, FPAD).astype(jnp.float32)

    w1s, b1s, w2s, b2s = params["w1s"], params["b1s"], params["w2s"], params["b2s"]
    M = params["mpad"]

    in_specs = [
        pl.BlockSpec((1, rn, FPAD), lambda g: (g, 0, 0)),     # x
        pl.BlockSpec((1, re, FPAD), lambda g: (g, 0, 0)),     # e
        pl.BlockSpec((1, g_blk, FPAD), lambda g: (g, 0, 0)),  # u0
        pl.BlockSpec((1, re, 2), lambda g: (g, 0, 0)),        # block-local edge ids
        pl.BlockSpec(w1s.shape, lambda g: (0, 0, 0)),         # weight slabs (constant index)
        pl.BlockSpec(b1s.shape, lambda g: (0, 0)),
        pl.BlockSpec(w2s.shape, lambda g: (0, 0, 0)),
        pl.BlockSpec(b2s.shape, lambda g: (0, 0)),
    ]
    out_specs = pl.BlockSpec((1, n_steps, g_blk, FPAD), lambda g: (g, 0, 0, 0))

    # VMEM footprint: double-buffered per-block I/O + weights + in-kernel temporaries
    # (the [re, rn] one-hots and live activation slabs), with headroom, capped for v7x.
    io_per_block = ((_nbytes(xg) + _nbytes(eg) + _nbytes(ug) + _nbytes(ei_arr)) // n_blocks
                    + n_steps * g_blk * FPAD * 4)
    weights = _nbytes(w1s) + _nbytes(b1s) + _nbytes(w2s) + _nbytes(b2s)
    temps = (2 * re * rn * 2                         # s_src / s_dst (bf16)
             + (re + rn) * g_blk * 2                 # graph-membership one-hots (bf16)
             + 10 * (re + rn) * max(FPAD, M) * 4)    # live f32 activation slabs
    footprint = 2 * io_per_block + 2 * weights + temps
    vmem_limit = int(min(48 << 20, max(32 << 20, 2 * footprint)))

    # Advisory cost estimate so XLA schedules surrounding ops around the call.
    macs_blk_step = (
        3 * re * rn * M                       # src/dst gathers + dst scatter (one-hots)
        + (2 * rn + re) * FPAD * M            # x/e first-layer projections
        + (re + rn) * g_blk * M               # per-graph u broadcasts
        + rn * g_blk * FPAD                   # per-graph node sum
        + re * 2 * (FPAD * M + M * FPAD)      # edge 2nd layer, node-agg mlp, phi_e proj
        + rn * 2 * (FPAD * M + M * FPAD)      # node x-term/2nd layer, global-agg mlp
        + g_blk * (5 * FPAD * M + 3 * M * FPAD)   # phi_u, readout (tiny)
    )
    inputs = (xg, eg, ug, ei_arr, w1s, b1s, w2s, b2s)
    out_bytes = n_blocks * n_steps * g_blk * FPAD * 4
    cost = pl.CostEstimate(
        flops=int(2 * n_blocks * n_steps * macs_blk_step),
        transcendentals=0,
        bytes_accessed=int(sum(_nbytes(a) for a in inputs) + out_bytes),
    )

    out = pl.pallas_call(
        gnn_nagg_a_kernel,
        out_shape=jax.ShapeDtypeStruct((n_blocks, n_steps, g_blk, FPAD), jnp.float32),
        grid=(n_blocks,),
        in_specs=in_specs,
        out_specs=out_specs,
        compiler_params=pltpu.CompilerParams(
            dimension_semantics=("parallel",),      # graph-blocks split across TensorCores
            vmem_limit_bytes=vmem_limit,
        ),
        cost_estimate=cost,
    )(*inputs)

    # forward() returns a list with one entry per GNN round.
    return [out[:, i].reshape(n_graphs, FPAD)[:, :fout] for i in range(n_steps)]


if __name__ == "__main__":
    key = jax.random.PRNGKey(0)
    k_par, k_x, k_e, k_u = jax.random.split(key, 4)

    # Small shapes consistent with the module.
    f_dict = {"f_e": 4, "f_x": 4, "f_u": 8, "h": 16, "f_out": 2}
    mlp_layers = [32]
    N_STEPS = 2          # GNN_NAgg_A(mlp_layers, N=2, f_dict)
    G = 4                # graphs in the batch (-> 2 graphs per block, 2 grid steps)
    NODES = 16           # nodes per graph

    # Bidirectional ring per graph -> 32 edges per graph, global node ids.
    ar = np.arange(NODES)
    ring_src = np.concatenate([ar, (ar + 1) % NODES])
    ring_dst = np.concatenate([(ar + 1) % NODES, ar])
    src = np.concatenate([ring_src + g * NODES for g in range(G)])
    dst = np.concatenate([ring_dst + g * NODES for g in range(G)])
    edge_index = jnp.asarray(np.stack([src, dst]).astype(np.int32))
    batch = jnp.asarray(np.repeat(np.arange(G), NODES).astype(np.int32))

    params = init_params(k_par, mlp_layers, f_dict)
    x = jax.random.normal(k_x, (G * NODES, f_dict["f_x"]), jnp.float32)
    e = jax.random.normal(k_e, (int(edge_index.shape[1]), f_dict["f_e"]), jnp.float32)
    u = jax.random.normal(k_u, (G, f_dict["f_u"]), jnp.float32)

    out_list = gnn_nagg_a_forward(params, x, edge_index, e, u, batch, N_STEPS, f_dict)
    out_list = jax.block_until_ready(out_list)

    assert len(out_list) == N_STEPS
    for o in out_list:
        assert o.shape == (G, f_dict["f_out"])
        assert bool(jnp.all(jnp.isfinite(o)))
    print("KERNEL_OK")
</pallas_src>

<mosaic_0001>
module attributes {stable_mosaic.version = 11 : i64} {
  func.func @gnn_nagg_a_kernel(%arg0: i32, %arg1: memref<1x32x128xbf16, #tpu.memory_space<vmem>>, %arg2: memref<1x64x128xbf16, #tpu.memory_space<vmem>>, %arg3: memref<1x2x128xf32, #tpu.memory_space<vmem>>, %arg4: memref<1x64x2xi32, #tpu.memory_space<vmem>>, %arg5: memref<12x128x128xbf16, #tpu.memory_space<vmem>>, %arg6: memref<6x128xf32, #tpu.memory_space<vmem>>, %arg7: memref<6x128x128xbf16, #tpu.memory_space<vmem>>, %arg8: memref<6x128xf32, #tpu.memory_space<vmem>>, %arg9: memref<1x2x2x128xf32, #tpu.memory_space<vmem>>) attributes {dimension_semantics = [#tpu.dimension_semantics<parallel>], iteration_bounds = array<i64: 2>, scalar_prefetch = 0 : i64, scratch_operands = 0 : i64, tpu.core_type = #tpu.core_type<tc>, window_params = [{transform_indices = @transform_0, window_bounds = array<i64: 1, 32, 128>}, {transform_indices = @transform_1, window_bounds = array<i64: 1, 64, 128>}, {transform_indices = @transform_2, window_bounds = array<i64: 1, 2, 128>}, {transform_indices = @transform_3, window_bounds = array<i64: 1, 64, 2>}, {pipeline_mode = #tpu.pipeline_mode<synchronous>, transform_indices = @transform_4, window_bounds = array<i64: 12, 128, 128>}, {pipeline_mode = #tpu.pipeline_mode<synchronous>, transform_indices = @transform_5, window_bounds = array<i64: 6, 128>}, {pipeline_mode = #tpu.pipeline_mode<synchronous>, transform_indices = @transform_6, window_bounds = array<i64: 6, 128, 128>}, {pipeline_mode = #tpu.pipeline_mode<synchronous>, transform_indices = @transform_7, window_bounds = array<i64: 6, 128>}, {transform_indices = @transform_8, window_bounds = array<i64: 1, 2, 2, 128>}]} {
    %c0 = arith.constant 0 : index
    %c0_0 = arith.constant 0 : index
    %c0_1 = arith.constant 0 : index
    %0 = vector.load %arg4[%c0, %c0_0, %c0_1] : memref<1x64x2xi32, #tpu.memory_space<vmem>>, vector<1x64x1xi32>
    %1 = vector.shape_cast %0 : vector<1x64x1xi32> to vector<64x1xi32>
    %c0_2 = arith.constant 0 : index
    %c0_3 = arith.constant 0 : index
    %c1 = arith.constant 1 : index
    %2 = vector.load %arg4[%c0_2, %c0_3, %c1] : memref<1x64x2xi32, #tpu.memory_space<vmem>>, vector<1x64x1xi32>
    %3 = vector.shape_cast %2 : vector<1x64x1xi32> to vector<64x1xi32>
    %4 = tpu.iota {dimensions = array<i32: 1>} : vector<64x32xi32>
    %5 = vector.broadcast %1 : vector<64x1xi32> to vector<64x32xi32>
    %6 = arith.cmpi eq, %4, %5 : vector<64x32xi32>
    %7 = arith.extui %6 : vector<64x32xi1> to vector<64x32xi32>
    %8 = arith.sitofp %7 : vector<64x32xi32> to vector<64x32xf32>
    %9 = arith.truncf %8 : vector<64x32xf32> to vector<64x32xbf16>
    %10 = vector.broadcast %3 : vector<64x1xi32> to vector<64x32xi32>
    %11 = arith.cmpi eq, %4, %10 : vector<64x32xi32>
    %12 = arith.extui %11 : vector<64x32xi1> to vector<64x32xi32>
    %13 = arith.sitofp %12 : vector<64x32xi32> to vector<64x32xf32>
    %14 = arith.truncf %13 : vector<64x32xf32> to vector<64x32xbf16>
    %15 = tpu.iota {dimensions = array<i32: 0>} : vector<64x2xi32>
    %16 = tpu.iota {dimensions = array<i32: 1>} : vector<64x2xi32>
    %c32_i32 = arith.constant 32 : i32
    %17 = vector.broadcast %c32_i32 : i32 to vector<64x2xi32>
    %18 = arith.muli %16, %17 : vector<64x2xi32>
    %19 = arith.subi %15, %18 : vector<64x2xi32>
    %c0_i32 = arith.constant 0 : i32
    %20 = vector.broadcast %c0_i32 : i32 to vector<64x2xi32>
    %21 = arith.cmpi sge, %19, %20 : vector<64x2xi32>
    %c32_i32_4 = arith.constant 32 : i32
    %22 = vector.broadcast %c32_i32_4 : i32 to vector<64x2xi32>
    %23 = arith.cmpi slt, %19, %22 : vector<64x2xi32>
    %24 = arith.andi %21, %23 : vector<64x2xi1>
    %25 = arith.extui %24 : vector<64x2xi1> to vector<64x2xi32>
    %26 = arith.sitofp %25 : vector<64x2xi32> to vector<64x2xf32>
    %27 = arith.truncf %26 : vector<64x2xf32> to vector<64x2xbf16>
    %28 = tpu.iota {dimensions = array<i32: 0>} : vector<32x2xi32>
    %29 = tpu.iota {dimensions = array<i32: 1>} : vector<32x2xi32>
    %c16_i32 = arith.constant 16 : i32
    %30 = vector.broadcast %c16_i32 : i32 to vector<32x2xi32>
    %31 = arith.muli %29, %30 : vector<32x2xi32>
    %32 = arith.subi %28, %31 : vector<32x2xi32>
    %c0_i32_5 = arith.constant 0 : i32
    %33 = vector.broadcast %c0_i32_5 : i32 to vector<32x2xi32>
    %34 = arith.cmpi sge, %32, %33 : vector<32x2xi32>
    %c16_i32_6 = arith.constant 16 : i32
    %35 = vector.broadcast %c16_i32_6 : i32 to vector<32x2xi32>
    %36 = arith.cmpi slt, %32, %35 : vector<32x2xi32>
    %37 = arith.andi %34, %36 : vector<32x2xi1>
    %38 = arith.extui %37 : vector<32x2xi1> to vector<32x2xi32>
    %39 = arith.sitofp %38 : vector<32x2xi32> to vector<32x2xf32>
    %40 = arith.truncf %39 : vector<32x2xf32> to vector<32x2xbf16>
    %c0_7 = arith.constant 0 : index
    %c0_8 = arith.constant 0 : index
    %c0_9 = arith.constant 0 : index
    %41 = vector.load %arg1[%c0_7, %c0_8, %c0_9] : memref<1x32x128xbf16, #tpu.memory_space<vmem>>, vector<1x32x128xbf16>
    %42 = vector.shape_cast %41 : vector<1x32x128xbf16> to vector<32x128xbf16>
    %c0_10 = arith.constant 0 : index
    %c0_11 = arith.constant 0 : index
    %c0_12 = arith.constant 0 : index
    %43 = vector.load %arg2[%c0_10, %c0_11, %c0_12] : memref<1x64x128xbf16, #tpu.memory_space<vmem>>, vector<1x64x128xbf16>
    %44 = vector.shape_cast %43 : vector<1x64x128xbf16> to vector<64x128xbf16>
    %c0_13 = arith.constant 0 : index
    %c0_14 = arith.constant 0 : index
    %c0_15 = arith.constant 0 : index
    %45 = vector.load %arg3[%c0_13, %c0_14, %c0_15] : memref<1x2x128xf32, #tpu.memory_space<vmem>>, vector<1x2x128xf32>
    %46 = vector.shape_cast %45 : vector<1x2x128xf32> to vector<2x128xf32>
    %c0_i32_16 = arith.constant 0 : i32
    %47 = arith.truncf %46 : vector<2x128xf32> to vector<2x128xbf16>
    %c0_17 = arith.constant 0 : index
    %c0_18 = arith.constant 0 : index
    %c0_19 = arith.constant 0 : index
    %48 = vector.load %arg5[%c0_17, %c0_18, %c0_19] : memref<12x128x128xbf16, #tpu.memory_space<vmem>>, vector<1x128x128xbf16>
    %49 = vector.shape_cast %48 : vector<1x128x128xbf16> to vector<128x128xbf16>
    %cst = arith.constant dense<0.000000e+00> : vector<32x128xf32>
    %50 = tpu.matmul %42, %49, %cst {dimension_numbers = #tpu.dot_dimension_numbers<[1], [0], [0], [1], [0, 0, 1, 1], [], []>} : vector<32x128xbf16>, vector<128x128xbf16>, vector<32x128xf32> -> vector<32x128xf32>
    %51 = arith.truncf %50 : vector<32x128xf32> to vector<32x128xbf16>
    %c1_20 = arith.constant 1 : index
    %c0_21 = arith.constant 0 : index
    %c0_22 = arith.constant 0 : index
    %52 = vector.load %arg5[%c1_20, %c0_21, %c0_22] : memref<12x128x128xbf16, #tpu.memory_space<vmem>>, vector<1x128x128xbf16>
    %53 = vector.shape_cast %52 : vector<1x128x128xbf16> to vector<128x128xbf16>
    %cst_23 = arith.constant dense<0.000000e+00> : vector<32x128xf32>
    %54 = tpu.matmul %42, %53, %cst_23 {dimension_numbers = #tpu.dot_dimension_numbers<[1], [0], [0], [1], [0, 0, 1, 1], [], []>} : vector<32x128xbf16>, vector<128x128xbf16>, vector<32x128xf32> -> vector<32x128xf32>
    %55 = arith.truncf %54 : vector<32x128xf32> to vector<32x128xbf16>
    %c3 = arith.constant 3 : index
    %c0_24 = arith.constant 0 : index
    %c0_25 = arith.constant 0 : index
    %56 = vector.load %arg5[%c3, %c0_24, %c0_25] : memref<12x128x128xbf16, #tpu.memory_space<vmem>>, vector<1x128x128xbf16>
    %57 = vector.shape_cast %56 : vector<1x128x128xbf16> to vector<128x128xbf16>
    %cst_26 = arith.constant dense<0.000000e+00> : vector<2x128xf32>
    %58 = tpu.matmul %47, %57, %cst_26 {dimension_numbers = #tpu.dot_dimension_numbers<[1], [0], [0], [1], [0, 0, 1, 1], [], []>} : vector<2x128xbf16>, vector<128x128xbf16>, vector<2x128xf32> -> vector<2x128xf32>
    %59 = arith.truncf %58 : vector<2x128xf32> to vector<2x128xbf16>
    %cst_27 = arith.constant dense<0.000000e+00> : vector<64x128xf32>
    %60 = tpu.matmul %9, %51, %cst_27 {dimension_numbers = #tpu.dot_dimension_numbers<[1], [0], [0], [1], [0, 0, 1, 1], [], []>} : vector<64x32xbf16>, vector<32x128xbf16>, vector<64x128xf32> -> vector<64x128xf32>
    %cst_28 = arith.constant dense<0.000000e+00> : vector<64x128xf32>
    %61 = tpu.matmul %14, %55, %cst_28 {dimension_numbers = #tpu.dot_dimension_numbers<[1], [0], [0], [1], [0, 0, 1, 1], [], []>} : vector<64x32xbf16>, vector<32x128xbf16>, vector<64x128xf32> -> vector<64x128xf32>
    %62 = arith.addf %60, %61 : vector<64x128xf32>
    %c2 = arith.constant 2 : index
    %c0_29 = arith.constant 0 : index
    %c0_30 = arith.constant 0 : index
    %63 = vector.load %arg5[%c2, %c0_29, %c0_30] : memref<12x128x128xbf16, #tpu.memory_space<vmem>>, vector<1x128x128xbf16>
    %64 = vector.shape_cast %63 : vector<1x128x128xbf16> to vector<128x128xbf16>
    %cst_31 = arith.constant dense<0.000000e+00> : vector<64x128xf32>
    %65 = tpu.matmul %44, %64, %cst_31 {dimension_numbers = #tpu.dot_dimension_numbers<[1], [0], [0], [1], [0, 0, 1, 1], [], []>} : vector<64x128xbf16>, vector<128x128xbf16>, vector<64x128xf32> -> vector<64x128xf32>
    %66 = arith.addf %62, %65 : vector<64x128xf32>
    %cst_32 = arith.constant dense<0.000000e+00> : vector<64x128xf32>
    %67 = tpu.matmul %27, %59, %cst_32 {dimension_numbers = #tpu.dot_dimension_numbers<[1], [0], [0], [1], [0, 0, 1, 1], [], []>} : vector<64x2xbf16>, vector<2x128xbf16>, vector<64x128xf32> -> vector<64x128xf32>
    %68 = arith.addf %66, %67 : vector<64x128xf32>
    %c0_33 = arith.constant 0 : index
    %c0_34 = arith.constant 0 : index
    %69 = vector.load %arg6[%c0_33, %c0_34] : memref<6x128xf32, #tpu.memory_space<vmem>>, vector<1x128xf32>
    %70 = vector.broadcast %69 : vector<1x128xf32> to vector<64x128xf32>
    %71 = arith.addf %68, %70 : vector<64x128xf32>
    %cst_35 = arith.constant 0.000000e+00 : f32
    %72 = vector.broadcast %cst_35 : f32 to vector<64x128xf32>
    %73 = arith.maximumf %71, %72 : vector<64x128xf32>
    %74 = arith.truncf %73 : vector<64x128xf32> to vector<64x128xbf16>
    %c0_36 = arith.constant 0 : index
    %c0_37 = arith.constant 0 : index
    %c0_38 = arith.constant 0 : index
    %75 = vector.load %arg7[%c0_36, %c0_37, %c0_38] : memref<6x128x128xbf16, #tpu.memory_space<vmem>>, vector<1x128x128xbf16>
    %76 = vector.shape_cast %75 : vector<1x128x128xbf16> to vector<128x128xbf16>
    %cst_39 = arith.constant dense<0.000000e+00> : vector<64x128xf32>
    %77 = tpu.matmul %74, %76, %cst_39 {dimension_numbers = #tpu.dot_dimension_numbers<[1], [0], [0], [1], [0, 0, 1, 1], [], []>} : vector<64x128xbf16>, vector<128x128xbf16>, vector<64x128xf32> -> vector<64x128xf32>
    %c0_40 = arith.constant 0 : index
    %c0_41 = arith.constant 0 : index
    %78 = vector.load %arg8[%c0_40, %c0_41] : memref<6x128xf32, #tpu.memory_space<vmem>>, vector<1x128xf32>
    %79 = vector.broadcast %78 : vector<1x128xf32> to vector<64x128xf32>
    %80 = arith.addf %77, %79 : vector<64x128xf32>
    %81 = arith.truncf %80 : vector<64x128xf32> to vector<64x128xbf16>
    %c4 = arith.constant 4 : index
    %c0_42 = arith.constant 0 : index
    %c0_43 = arith.constant 0 : index
    %82 = vector.load %arg5[%c4, %c0_42, %c0_43] : memref<12x128x128xbf16, #tpu.memory_space<vmem>>, vector<1x128x128xbf16>
    %83 = vector.shape_cast %82 : vector<1x128x128xbf16> to vector<128x128xbf16>
    %cst_44 = arith.constant dense<0.000000e+00> : vector<64x128xf32>
    %84 = tpu.matmul %81, %83, %cst_44 {dimension_numbers = #tpu.dot_dimension_numbers<[1], [0], [0], [1], [0, 0, 1, 1], [], []>} : vector<64x128xbf16>, vector<128x128xbf16>, vector<64x128xf32> -> vector<64x128xf32>
    %c1_45 = arith.constant 1 : index
    %c0_46 = arith.constant 0 : index
    %85 = vector.load %arg6[%c1_45, %c0_46] : memref<6x128xf32, #tpu.memory_space<vmem>>, vector<1x128xf32>
    %86 = vector.broadcast %85 : vector<1x128xf32> to vector<64x128xf32>
    %87 = arith.addf %84, %86 : vector<64x128xf32>
    %cst_47 = arith.constant 0.000000e+00 : f32
    %88 = vector.broadcast %cst_47 : f32 to vector<64x128xf32>
    %89 = arith.maximumf %87, %88 : vector<64x128xf32>
    %90 = arith.truncf %89 : vector<64x128xf32> to vector<64x128xbf16>
    %c1_48 = arith.constant 1 : index
    %c0_49 = arith.constant 0 : index
    %c0_50 = arith.constant 0 : index
    %91 = vector.load %arg7[%c1_48, %c0_49, %c0_50] : memref<6x128x128xbf16, #tpu.memory_space<vmem>>, vector<1x128x128xbf16>
    %92 = vector.shape_cast %91 : vector<1x128x128xbf16> to vector<128x128xbf16>
    %cst_51 = arith.constant dense<0.000000e+00> : vector<64x128xf32>
    %93 = tpu.matmul %90, %92, %cst_51 {dimension_numbers = #tpu.dot_dimension_numbers<[1], [0], [0], [1], [0, 0, 1, 1], [], []>} : vector<64x128xbf16>, vector<128x128xbf16>, vector<64x128xf32> -> vector<64x128xf32>
    %c1_52 = arith.constant 1 : index
    %c0_53 = arith.constant 0 : index
    %94 = vector.load %arg8[%c1_52, %c0_53] : memref<6x128xf32, #tpu.memory_space<vmem>>, vector<1x128xf32>
    %95 = vector.broadcast %94 : vector<1x128xf32> to vector<64x128xf32>
    %96 = arith.addf %93, %95 : vector<64x128xf32>
    %97 = arith.truncf %96 : vector<64x128xf32> to vector<64x128xbf16>
    %c6 = arith.constant 6 : index
    %c0_54 = arith.constant 0 : index
    %c0_55 = arith.constant 0 : index
    %98 = vector.load %arg5[%c6, %c0_54, %c0_55] : memref<12x128x128xbf16, #tpu.memory_space<vmem>>, vector<1x128x128xbf16>
    %99 = vector.shape_cast %98 : vector<1x128x128xbf16> to vector<128x128xbf16>
    %cst_56 = arith.constant dense<0.000000e+00> : vector<64x128xf32>
    %100 = tpu.matmul %97, %99, %cst_56 {dimension_numbers = #tpu.dot_dimension_numbers<[1], [0], [0], [1], [0, 0, 1, 1], [], []>} : vector<64x128xbf16>, vector<128x128xbf16>, vector<64x128xf32> -> vector<64x128xf32>
    %101 = arith.truncf %100 : vector<64x128xf32> to vector<64x128xbf16>
    %c7 = arith.constant 7 : index
    %c0_57 = arith.constant 0 : index
    %c0_58 = arith.constant 0 : index
    %102 = vector.load %arg5[%c7, %c0_57, %c0_58] : memref<12x128x128xbf16, #tpu.memory_space<vmem>>, vector<1x128x128xbf16>
    %103 = vector.shape_cast %102 : vector<1x128x128xbf16> to vector<128x128xbf16>
    %cst_59 = arith.constant dense<0.000000e+00> : vector<2x128xf32>
    %104 = tpu.matmul %47, %103, %cst_59 {dimension_numbers = #tpu.dot_dimension_numbers<[1], [0], [0], [1], [0, 0, 1, 1], [], []>} : vector<2x128xbf16>, vector<128x128xbf16>, vector<2x128xf32> -> vector<2x128xf32>
    %105 = arith.truncf %104 : vector<2x128xf32> to vector<2x128xbf16>
    %c5 = arith.constant 5 : index
    %c0_60 = arith.constant 0 : index
    %c0_61 = arith.constant 0 : index
    %106 = vector.load %arg5[%c5, %c0_60, %c0_61] : memref<12x128x128xbf16, #tpu.memory_space<vmem>>, vector<1x128x128xbf16>
    %107 = vector.shape_cast %106 : vector<1x128x128xbf16> to vector<128x128xbf16>
    %cst_62 = arith.constant dense<0.000000e+00> : vector<32x128xf32>
    %108 = tpu.matmul %42, %107, %cst_62 {dimension_numbers = #tpu.dot_dimension_numbers<[1], [0], [0], [1], [0, 0, 1, 1], [], []>} : vector<32x128xbf16>, vector<128x128xbf16>, vector<32x128xf32> -> vector<32x128xf32>
    %cst_63 = arith.constant dense<0.000000e+00> : vector<32x128xf32>
    %109 = tpu.matmul %14, %101, %cst_63 {dimension_numbers = #tpu.dot_dimension_numbers<[0], [0], [1], [1], [0, 1, 1, 1], [], []>} : vector<64x32xbf16>, vector<64x128xbf16>, vector<32x128xf32> -> vector<32x128xf32>
    %110 = arith.addf %108, %109 : vector<32x128xf32>
    %cst_64 = arith.constant dense<0.000000e+00> : vector<32x128xf32>
    %111 = tpu.matmul %40, %105, %cst_64 {dimension_numbers = #tpu.dot_dimension_numbers<[1], [0], [0], [1], [0, 0, 1, 1], [], []>} : vector<32x2xbf16>, vector<2x128xbf16>, vector<32x128xf32> -> vector<32x128xf32>
    %112 = arith.addf %110, %111 : vector<32x128xf32>
    %c2_65 = arith.constant 2 : index
    %c0_66 = arith.constant 0 : index
    %113 = vector.load %arg6[%c2_65, %c0_66] : memref<6x128xf32, #tpu.memory_space<vmem>>, vector<1x128xf32>
    %114 = vector.broadcast %113 : vector<1x128xf32> to vector<32x128xf32>
    %115 = arith.addf %112, %114 : vector<32x128xf32>
    %cst_67 = arith.constant 0.000000e+00 : f32
    %116 = vector.broadcast %cst_67 : f32 to vector<32x128xf32>
    %117 = arith.maximumf %115, %116 : vector<32x128xf32>
    %118 = arith.truncf %117 : vector<32x128xf32> to vector<32x128xbf16>
    %c2_68 = arith.constant 2 : index
    %c0_69 = arith.constant 0 : index
    %c0_70 = arith.constant 0 : index
    %119 = vector.load %arg7[%c2_68, %c0_69, %c0_70] : memref<6x128x128xbf16, #tpu.memory_space<vmem>>, vector<1x128x128xbf16>
    %120 = vector.shape_cast %119 : vector<1x128x128xbf16> to vector<128x128xbf16>
    %cst_71 = arith.constant dense<0.000000e+00> : vector<32x128xf32>
    %121 = tpu.matmul %118, %120, %cst_71 {dimension_numbers = #tpu.dot_dimension_numbers<[1], [0], [0], [1], [0, 0, 1, 1], [], []>} : vector<32x128xbf16>, vector<128x128xbf16>, vector<32x128xf32> -> vector<32x128xf32>
    %c2_72 = arith.constant 2 : index
    %c0_73 = arith.constant 0 : index
    %122 = vector.load %arg8[%c2_72, %c0_73] : memref<6x128xf32, #tpu.memory_space<vmem>>, vector<1x128xf32>
    %123 = vector.broadcast %122 : vector<1x128xf32> to vector<32x128xf32>
    %124 = arith.addf %121, %123 : vector<32x128xf32>
    %125 = arith.truncf %124 : vector<32x128xf32> to vector<32x128xbf16>
    %c8 = arith.constant 8 : index
    %c0_74 = arith.constant 0 : index
    %c0_75 = arith.constant 0 : index
    %126 = vector.load %arg5[%c8, %c0_74, %c0_75] : memref<12x128x128xbf16, #tpu.memory_space<vmem>>, vector<1x128x128xbf16>
    %127 = vector.shape_cast %126 : vector<1x128x128xbf16> to vector<128x128xbf16>
    %cst_76 = arith.constant dense<0.000000e+00> : vector<32x128xf32>
    %128 = tpu.matmul %125, %127, %cst_76 {dimension_numbers = #tpu.dot_dimension_numbers<[1], [0], [0], [1], [0, 0, 1, 1], [], []>} : vector<32x128xbf16>, vector<128x128xbf16>, vector<32x128xf32> -> vector<32x128xf32>
    %c3_77 = arith.constant 3 : index
    %c0_78 = arith.constant 0 : index
    %129 = vector.load %arg6[%c3_77, %c0_78] : memref<6x128xf32, #tpu.memory_space<vmem>>, vector<1x128xf32>
    %130 = vector.broadcast %129 : vector<1x128xf32> to vector<32x128xf32>
    %131 = arith.addf %128, %130 : vector<32x128xf32>
    %cst_79 = arith.constant 0.000000e+00 : f32
    %132 = vector.broadcast %cst_79 : f32 to vector<32x128xf32>
    %133 = arith.maximumf %131, %132 : vector<32x128xf32>
    %134 = arith.truncf %133 : vector<32x128xf32> to vector<32x128xbf16>
    %c3_80 = arith.constant 3 : index
    %c0_81 = arith.constant 0 : index
    %c0_82 = arith.constant 0 : index
    %135 = vector.load %arg7[%c3_80, %c0_81, %c0_82] : memref<6x128x128xbf16, #tpu.memory_space<vmem>>, vector<1x128x128xbf16>
    %136 = vector.shape_cast %135 : vector<1x128x128xbf16> to vector<128x128xbf16>
    %cst_83 = arith.constant dense<0.000000e+00> : vector<32x128xf32>
    %137 = tpu.matmul %134, %136, %cst_83 {dimension_numbers = #tpu.dot_dimension_numbers<[1], [0], [0], [1], [0, 0, 1, 1], [], []>} : vector<32x128xbf16>, vector<128x128xbf16>, vector<32x128xf32> -> vector<32x128xf32>
    %c3_84 = arith.constant 3 : index
    %c0_85 = arith.constant 0 : index
    %138 = vector.load %arg8[%c3_84, %c0_85] : memref<6x128xf32, #tpu.memory_space<vmem>>, vector<1x128xf32>
    %139 = vector.broadcast %138 : vector<1x128xf32> to vector<32x128xf32>
    %140 = arith.addf %137, %139 : vector<32x128xf32>
    %141 = arith.truncf %140 : vector<32x128xf32> to vector<32x128xbf16>
    %cst_86 = arith.constant dense<0.000000e+00> : vector<2x128xf32>
    %142 = tpu.matmul %40, %141, %cst_86 {dimension_numbers = #tpu.dot_dimension_numbers<[0], [0], [1], [1], [0, 1, 1, 1], [], []>} : vector<32x2xbf16>, vector<32x128xbf16>, vector<2x128xf32> -> vector<2x128xf32>
    %143 = arith.truncf %142 : vector<2x128xf32> to vector<2x128xbf16>
    %c9 = arith.constant 9 : index
    %c0_87 = arith.constant 0 : index
    %c0_88 = arith.constant 0 : index
    %144 = vector.load %arg5[%c9, %c0_87, %c0_88] : memref<12x128x128xbf16, #tpu.memory_space<vmem>>, vector<1x128x128xbf16>
    %145 = vector.shape_cast %144 : vector<1x128x128xbf16> to vector<128x128xbf16>
    %cst_89 = arith.constant dense<0.000000e+00> : vector<2x128xf32>
    %146 = tpu.matmul %143, %145, %cst_89 {dimension_numbers = #tpu.dot_dimension_numbers<[1], [0], [0], [1], [0, 0, 1, 1], [], []>} : vector<2x128xbf16>, vector<128x128xbf16>, vector<2x128xf32> -> vector<2x128xf32>
    %c10 = arith.constant 10 : index
    %c0_90 = arith.constant 0 : index
    %c0_91 = arith.constant 0 : index
    %147 = vector.load %arg5[%c10, %c0_90, %c0_91] : memref<12x128x128xbf16, #tpu.memory_space<vmem>>, vector<1x128x128xbf16>
    %148 = vector.shape_cast %147 : vector<1x128x128xbf16> to vector<128x128xbf16>
    %cst_92 = arith.constant dense<0.000000e+00> : vector<2x128xf32>
    %149 = tpu.matmul %47, %148, %cst_92 {dimension_numbers = #tpu.dot_dimension_numbers<[1], [0], [0], [1], [0, 0, 1, 1], [], []>} : vector<2x128xbf16>, vector<128x128xbf16>, vector<2x128xf32> -> vector<2x128xf32>
    %150 = arith.addf %146, %149 : vector<2x128xf32>
    %c4_93 = arith.constant 4 : index
    %c0_94 = arith.constant 0 : index
    %151 = vector.load %arg6[%c4_93, %c0_94] : memref<6x128xf32, #tpu.memory_space<vmem>>, vector<1x128xf32>
    %152 = vector.broadcast %151 : vector<1x128xf32> to vector<2x128xf32>
    %153 = arith.addf %150, %152 : vector<2x128xf32>
    %cst_95 = arith.constant 0.000000e+00 : f32
    %154 = vector.broadcast %cst_95 : f32 to vector<2x128xf32>
    %155 = arith.maximumf %153, %154 : vector<2x128xf32>
    %156 = arith.truncf %155 : vector<2x128xf32> to vector<2x128xbf16>
    %c4_96 = arith.constant 4 : index
    %c0_97 = arith.constant 0 : index
    %c0_98 = arith.constant 0 : index
    %157 = vector.load %arg7[%c4_96, %c0_97, %c0_98] : memref<6x128x128xbf16, #tpu.memory_space<vmem>>, vector<1x128x128xbf16>
    %158 = vector.shape_cast %157 : vector<1x128x128xbf16> to vector<128x128xbf16>
    %cst_99 = arith.constant dense<0.000000e+00> : vector<2x128xf32>
    %159 = tpu.matmul %156, %158, %cst_99 {dimension_numbers = #tpu.dot_dimension_numbers<[1], [0], [0], [1], [0, 0, 1, 1], [], []>} : vector<2x128xbf16>, vector<128x128xbf16>, vector<2x128xf32> -> vector<2x128xf32>
    %c4_100 = arith.constant 4 : index
    %c0_101 = arith.constant 0 : index
    %160 = vector.load %arg8[%c4_100, %c0_101] : memref<6x128xf32, #tpu.memory_space<vmem>>, vector<1x128xf32>
    %161 = vector.broadcast %160 : vector<1x128xf32> to vector<2x128xf32>
    %162 = arith.addf %159, %161 : vector<2x128xf32>
    %163 = arith.truncf %162 : vector<2x128xf32> to vector<2x128xbf16>
    %c11 = arith.constant 11 : index
    %c0_102 = arith.constant 0 : index
    %c0_103 = arith.constant 0 : index
    %164 = vector.load %arg5[%c11, %c0_102, %c0_103] : memref<12x128x128xbf16, #tpu.memory_space<vmem>>, vector<1x128x128xbf16>
    %165 = vector.shape_cast %164 : vector<1x128x128xbf16> to vector<128x128xbf16>
    %cst_104 = arith.constant dense<0.000000e+00> : vector<2x128xf32>
    %166 = tpu.matmul %163, %165, %cst_104 {dimension_numbers = #tpu.dot_dimension_numbers<[1], [0], [0], [1], [0, 0, 1, 1], [], []>} : vector<2x128xbf16>, vector<128x128xbf16>, vector<2x128xf32> -> vector<2x128xf32>
    %c5_105 = arith.constant 5 : index
    %c0_106 = arith.constant 0 : index
    %167 = vector.load %arg6[%c5_105, %c0_106] : memref<6x128xf32, #tpu.memory_space<vmem>>, vector<1x128xf32>
    %168 = vector.broadcast %167 : vector<1x128xf32> to vector<2x128xf32>
    %169 = arith.addf %166, %168 : vector<2x128xf32>
    %cst_107 = arith.constant 0.000000e+00 : f32
    %170 = vector.broadcast %cst_107 : f32 to vector<2x128xf32>
    %171 = arith.maximumf %169, %170 : vector<2x128xf32>
    %172 = arith.truncf %171 : vector<2x128xf32> to vector<2x128xbf16>
    %c5_108 = arith.constant 5 : index
    %c0_109 = arith.constant 0 : index
    %c0_110 = arith.constant 0 : index
    %173 = vector.load %arg7[%c5_108, %c0_109, %c0_110] : memref<6x128x128xbf16, #tpu.memory_space<vmem>>, vector<1x128x128xbf16>
    %174 = vector.shape_cast %173 : vector<1x128x128xbf16> to vector<128x128xbf16>
    %cst_111 = arith.constant dense<0.000000e+00> : vector<2x128xf32>
    %175 = tpu.matmul %172, %174, %cst_111 {dimension_numbers = #tpu.dot_dimension_numbers<[1], [0], [0], [1], [0, 0, 1, 1], [], []>} : vector<2x128xbf16>, vector<128x128xbf16>, vector<2x128xf32> -> vector<2x128xf32>
    %c5_112 = arith.constant 5 : index
    %c0_113 = arith.constant 0 : index
    %176 = vector.load %arg8[%c5_112, %c0_113] : memref<6x128xf32, #tpu.memory_space<vmem>>, vector<1x128xf32>
    %177 = vector.broadcast %176 : vector<1x128xf32> to vector<2x128xf32>
    %178 = arith.addf %175, %177 : vector<2x128xf32>
    %179 = vector.shape_cast %178 : vector<2x128xf32> to vector<1x2x128xf32>
    %c0_114 = arith.constant 0 : index
    %180 = arith.index_cast %c0_i32_16 : i32 to index
    %c0_115 = arith.constant 0 : index
    %c0_116 = arith.constant 0 : index
    %181 = vector.load %arg9[%c0_114, %180, %c0_115, %c0_116] : memref<1x2x2x128xf32, #tpu.memory_space<vmem>>, vector<1x1x2x128xf32>
    %182 = vector.shape_cast %181 : vector<1x1x2x128xf32> to vector<1x2x128xf32>
    %183 = vector.shape_cast %179 : vector<1x2x128xf32> to vector<1x1x2x128xf32>
    tpu.vector_store %arg9[%c0_114, %180, %c0_115, %c0_116], %183 {strides = array<i32>} : memref<1x2x2x128xf32, #tpu.memory_space<vmem>>, vector<1x1x2x128xf32>,
    %c1_i32 = arith.constant 1 : i32
    %184 = arith.truncf %162 : vector<2x128xf32> to vector<2x128xbf16>
    %c0_117 = arith.constant 0 : index
    %c0_118 = arith.constant 0 : index
    %c0_119 = arith.constant 0 : index
    %185 = vector.load %arg5[%c0_117, %c0_118, %c0_119] : memref<12x128x128xbf16, #tpu.memory_space<vmem>>, vector<1x128x128xbf16>
    %186 = vector.shape_cast %185 : vector<1x128x128xbf16> to vector<128x128xbf16>
    %cst_120 = arith.constant dense<0.000000e+00> : vector<32x128xf32>
    %187 = tpu.matmul %125, %186, %cst_120 {dimension_numbers = #tpu.dot_dimension_numbers<[1], [0], [0], [1], [0, 0, 1, 1], [], []>} : vector<32x128xbf16>, vector<128x128xbf16>, vector<32x128xf32> -> vector<32x128xf32>
    %188 = arith.truncf %187 : vector<32x128xf32> to vector<32x128xbf16>
    %c1_121 = arith.constant 1 : index
    %c0_122 = arith.constant 0 : index
    %c0_123 = arith.constant 0 : index
    %189 = vector.load %arg5[%c1_121, %c0_122, %c0_123] : memref<12x128x128xbf16, #tpu.memory_space<vmem>>, vector<1x128x128xbf16>
    %190 = vector.shape_cast %189 : vector<1x128x128xbf16> to vector<128x128xbf16>
    %cst_124 = arith.constant dense<0.000000e+00> : vector<32x128xf32>
    %191 = tpu.matmul %125, %190, %cst_124 {dimension_numbers = #tpu.dot_dimension_numbers<[1], [0], [0], [1], [0, 0, 1, 1], [], []>} : vector<32x128xbf16>, vector<128x128xbf16>, vector<32x128xf32> -> vector<32x128xf32>
    %192 = arith.truncf %191 : vector<32x128xf32> to vector<32x128xbf16>
    %c3_125 = arith.constant 3 : index
    %c0_126 = arith.constant 0 : index
    %c0_127 = arith.constant 0 : index
    %193 = vector.load %arg5[%c3_125, %c0_126, %c0_127] : memref<12x128x128xbf16, #tpu.memory_space<vmem>>, vector<1x128x128xbf16>
    %194 = vector.shape_cast %193 : vector<1x128x128xbf16> to vector<128x128xbf16>
    %cst_128 = arith.constant dense<0.000000e+00> : vector<2x128xf32>
    %195 = tpu.matmul %184, %194, %cst_128 {dimension_numbers = #tpu.dot_dimension_numbers<[1], [0], [0], [1], [0, 0, 1, 1], [], []>} : vector<2x128xbf16>, vector<128x128xbf16>, vector<2x128xf32> -> vector<2x128xf32>
    %196 = arith.truncf %195 : vector<2x128xf32> to vector<2x128xbf16>
    %cst_129 = arith.constant dense<0.000000e+00> : vector<64x128xf32>
    %197 = tpu.matmul %9, %188, %cst_129 {dimension_numbers = #tpu.dot_dimension_numbers<[1], [0], [0], [1], [0, 0, 1, 1], [], []>} : vector<64x32xbf16>, vector<32x128xbf16>, vector<64x128xf32> -> vector<64x128xf32>
    %cst_130 = arith.constant dense<0.000000e+00> : vector<64x128xf32>
    %198 = tpu.matmul %14, %192, %cst_130 {dimension_numbers = #tpu.dot_dimension_numbers<[1], [0], [0], [1], [0, 0, 1, 1], [], []>} : vector<64x32xbf16>, vector<32x128xbf16>, vector<64x128xf32> -> vector<64x128xf32>
    %199 = arith.addf %197, %198 : vector<64x128xf32>
    %c2_131 = arith.constant 2 : index
    %c0_132 = arith.constant 0 : index
    %c0_133 = arith.constant 0 : index
    %200 = vector.load %arg5[%c2_131, %c0_132, %c0_133] : memref<12x128x128xbf16, #tpu.memory_space<vmem>>, vector<1x128x128xbf16>
    %201 = vector.shape_cast %200 : vector<1x128x128xbf16> to vector<128x128xbf16>
    %cst_134 = arith.constant dense<0.000000e+00> : vector<64x128xf32>
    %202 = tpu.matmul %81, %201, %cst_134 {dimension_numbers = #tpu.dot_dimension_numbers<[1], [0], [0], [1], [0, 0, 1, 1], [], []>} : vector<64x128xbf16>, vector<128x128xbf16>, vector<64x128xf32> -> vector<64x128xf32>
    %203 = arith.addf %199, %202 : vector<64x128xf32>
    %cst_135 = arith.constant dense<0.000000e+00> : vector<64x128xf32>
    %204 = tpu.matmul %27, %196, %cst_135 {dimension_numbers = #tpu.dot_dimension_numbers<[1], [0], [0], [1], [0, 0, 1, 1], [], []>} : vector<64x2xbf16>, vector<2x128xbf16>, vector<64x128xf32> -> vector<64x128xf32>
    %205 = arith.addf %203, %204 : vector<64x128xf32>
    %c0_136 = arith.constant 0 : index
    %c0_137 = arith.constant 0 : index
    %206 = vector.load %arg6[%c0_136, %c0_137] : memref<6x128xf32, #tpu.memory_space<vmem>>, vector<1x128xf32>
    %207 = vector.broadcast %206 : vector<1x128xf32> to vector<64x128xf32>
    %208 = arith.addf %205, %207 : vector<64x128xf32>
    %cst_138 = arith.constant 0.000000e+00 : f32
    %209 = vector.broadcast %cst_138 : f32 to vector<64x128xf32>
    %210 = arith.maximumf %208, %209 : vector<64x128xf32>
    %211 = arith.truncf %210 : vector<64x128xf32> to vector<64x128xbf16>
    %c0_139 = arith.constant 0 : index
    %c0_140 = arith.constant 0 : index
    %c0_141 = arith.constant 0 : index
    %212 = vector.load %arg7[%c0_139, %c0_140, %c0_141] : memref<6x128x128xbf16, #tpu.memory_space<vmem>>, vector<1x128x128xbf16>
    %213 = vector.shape_cast %212 : vector<1x128x128xbf16> to vector<128x128xbf16>
    %cst_142 = arith.constant dense<0.000000e+00> : vector<64x128xf32>
    %214 = tpu.matmul %211, %213, %cst_142 {dimension_numbers = #tpu.dot_dimension_numbers<[1], [0], [0], [1], [0, 0, 1, 1], [], []>} : vector<64x128xbf16>, vector<128x128xbf16>, vector<64x128xf32> -> vector<64x128xf32>
    %c0_143 = arith.constant 0 : index
    %c0_144 = arith.constant 0 : index
    %215 = vector.load %arg8[%c0_143, %c0_144] : memref<6x128xf32, #tpu.memory_space<vmem>>, vector<1x128xf32>
    %216 = vector.broadcast %215 : vector<1x128xf32> to vector<64x128xf32>
    %217 = arith.addf %214, %216 : vector<64x128xf32>
    %218 = arith.truncf %217 : vector<64x128xf32> to vector<64x128xbf16>
    %c4_145 = arith.constant 4 : index
    %c0_146 = arith.constant 0 : index
    %c0_147 = arith.constant 0 : index
    %219 = vector.load %arg5[%c4_145, %c0_146, %c0_147] : memref<12x128x128xbf16, #tpu.memory_space<vmem>>, vector<1x128x128xbf16>
    %220 = vector.shape_cast %219 : vector<1x128x128xbf16> to vector<128x128xbf16>
    %cst_148 = arith.constant dense<0.000000e+00> : vector<64x128xf32>
    %221 = tpu.matmul %218, %220, %cst_148 {dimension_numbers = #tpu.dot_dimension_numbers<[1], [0], [0], [1], [0, 0, 1, 1], [], []>} : vector<64x128xbf16>, vector<128x128xbf16>, vector<64x128xf32> -> vector<64x128xf32>
    %c1_149 = arith.constant 1 : index
    %c0_150 = arith.constant 0 : index
    %222 = vector.load %arg6[%c1_149, %c0_150] : memref<6x128xf32, #tpu.memory_space<vmem>>, vector<1x128xf32>
    %223 = vector.broadcast %222 : vector<1x128xf32> to vector<64x128xf32>
    %224 = arith.addf %221, %223 : vector<64x128xf32>
    %cst_151 = arith.constant 0.000000e+00 : f32
    %225 = vector.broadcast %cst_151 : f32 to vector<64x128xf32>
    %226 = arith.maximumf %224, %225 : vector<64x128xf32>
    %227 = arith.truncf %226 : vector<64x128xf32> to vector<64x128xbf16>
    %c1_152 = arith.constant 1 : index
    %c0_153 = arith.constant 0 : index
    %c0_154 = arith.constant 0 : index
    %228 = vector.load %arg7[%c1_152, %c0_153, %c0_154] : memref<6x128x128xbf16, #tpu.memory_space<vmem>>, vector<1x128x128xbf16>
    %229 = vector.shape_cast %228 : vector<1x128x128xbf16> to vector<128x128xbf16>
    %cst_155 = arith.constant dense<0.000000e+00> : vector<64x128xf32>
    %230 = tpu.matmul %227, %229, %cst_155 {dimension_numbers = #tpu.dot_dimension_numbers<[1], [0], [0], [1], [0, 0, 1, 1], [], []>} : vector<64x128xbf16>, vector<128x128xbf16>, vector<64x128xf32> -> vector<64x128xf32>
    %c1_156 = arith.constant 1 : index
    %c0_157 = arith.constant 0 : index
    %231 = vector.load %arg8[%c1_156, %c0_157] : memref<6x128xf32, #tpu.memory_space<vmem>>, vector<1x128xf32>
    %232 = vector.broadcast %231 : vector<1x128xf32> to vector<64x128xf32>
    %233 = arith.addf %230, %232 : vector<64x128xf32>
    %234 = arith.truncf %233 : vector<64x128xf32> to vector<64x128xbf16>
    %c6_158 = arith.constant 6 : index
    %c0_159 = arith.constant 0 : index
    %c0_160 = arith.constant 0 : index
    %235 = vector.load %arg5[%c6_158, %c0_159, %c0_160] : memref<12x128x128xbf16, #tpu.memory_space<vmem>>, vector<1x128x128xbf16>
    %236 = vector.shape_cast %235 : vector<1x128x128xbf16> to vector<128x128xbf16>
    %cst_161 = arith.constant dense<0.000000e+00> : vector<64x128xf32>
    %237 = tpu.matmul %234, %236, %cst_161 {dimension_numbers = #tpu.dot_dimension_numbers<[1], [0], [0], [1], [0, 0, 1, 1], [], []>} : vector<64x128xbf16>, vector<128x128xbf16>, vector<64x128xf32> -> vector<64x128xf32>
    %238 = arith.truncf %237 : vector<64x128xf32> to vector<64x128xbf16>
    %c7_162 = arith.constant 7 : index
    %c0_163 = arith.constant 0 : index
    %c0_164 = arith.constant 0 : index
    %239 = vector.load %arg5[%c7_162, %c0_163, %c0_164] : memref<12x128x128xbf16, #tpu.memory_space<vmem>>, vector<1x128x128xbf16>
    %240 = vector.shape_cast %239 : vector<1x128x128xbf16> to vector<128x128xbf16>
    %cst_165 = arith.constant dense<0.000000e+00> : vector<2x128xf32>
    %241 = tpu.matmul %184, %240, %cst_165 {dimension_numbers = #tpu.dot_dimension_numbers<[1], [0], [0], [1], [0, 0, 1, 1], [], []>} : vector<2x128xbf16>, vector<128x128xbf16>, vector<2x128xf32> -> vector<2x128xf32>
    %242 = arith.truncf %241 : vector<2x128xf32> to vector<2x128xbf16>
    %c5_166 = arith.constant 5 : index
    %c0_167 = arith.constant 0 : index
    %c0_168 = arith.constant 0 : index
    %243 = vector.load %arg5[%c5_166, %c0_167, %c0_168] : memref<12x128x128xbf16, #tpu.memory_space<vmem>>, vector<1x128x128xbf16>
    %244 = vector.shape_cast %243 : vector<1x128x128xbf16> to vector<128x128xbf16>
    %cst_169 = arith.constant dense<0.000000e+00> : vector<32x128xf32>
    %245 = tpu.matmul %125, %244, %cst_169 {dimension_numbers = #tpu.dot_dimension_numbers<[1], [0], [0], [1], [0, 0, 1, 1], [], []>} : vector<32x128xbf16>, vector<128x128xbf16>, vector<32x128xf32> -> vector<32x128xf32>
    %cst_170 = arith.constant dense<0.000000e+00> : vector<32x128xf32>
    %246 = tpu.matmul %14, %238, %cst_170 {dimension_numbers = #tpu.dot_dimension_numbers<[0], [0], [1], [1], [0, 1, 1, 1], [], []>} : vector<64x32xbf16>, vector<64x128xbf16>, vector<32x128xf32> -> vector<32x128xf32>
    %247 = arith.addf %245, %246 : vector<32x128xf32>
    %cst_171 = arith.constant dense<0.000000e+00> : vector<32x128xf32>
    %248 = tpu.matmul %40, %242, %cst_171 {dimension_numbers = #tpu.dot_dimension_numbers<[1], [0], [0], [1], [0, 0, 1, 1], [], []>} : vector<32x2xbf16>, vector<2x128xbf16>, vector<32x128xf32> -> vector<32x128xf32>
    %249 = arith.addf %247, %248 : vector<32x128xf32>
    %c2_172 = arith.constant 2 : index
    %c0_173 = arith.constant 0 : index
    %250 = vector.load %arg6[%c2_172, %c0_173] : memref<6x128xf32, #tpu.memory_space<vmem>>, vector<1x128xf32>
    %251 = vector.broadcast %250 : vector<1x128xf32> to vector<32x128xf32>
    %252 = arith.addf %249, %251 : vector<32x128xf32>
    %cst_174 = arith.constant 0.000000e+00 : f32
    %253 = vector.broadcast %cst_174 : f32 to vector<32x128xf32>
    %254 = arith.maximumf %252, %253 : vector<32x128xf32>
    %255 = arith.truncf %254 : vector<32x128xf32> to vector<32x128xbf16>
    %c2_175 = arith.constant 2 : index
    %c0_176 = arith.constant 0 : index
    %c0_177 = arith.constant 0 : index
    %256 = vector.load %arg7[%c2_175, %c0_176, %c0_177] : memref<6x128x128xbf16, #tpu.memory_space<vmem>>, vector<1x128x128xbf16>
    %257 = vector.shape_cast %256 : vector<1x128x128xbf16> to vector<128x128xbf16>
    %cst_178 = arith.constant dense<0.000000e+00> : vector<32x128xf32>
    %258 = tpu.matmul %255, %257, %cst_178 {dimension_numbers = #tpu.dot_dimension_numbers<[1], [0], [0], [1], [0, 0, 1, 1], [], []>} : vector<32x128xbf16>, vector<128x128xbf16>, vector<32x128xf32> -> vector<32x128xf32>
    %c2_179 = arith.constant 2 : index
    %c0_180 = arith.constant 0 : index
    %259 = vector.load %arg8[%c2_179, %c0_180] : memref<6x128xf32, #tpu.memory_space<vmem>>, vector<1x128xf32>
    %260 = vector.broadcast %259 : vector<1x128xf32> to vector<32x128xf32>
    %261 = arith.addf %258, %260 : vector<32x128xf32>
    %262 = arith.truncf %261 : vector<32x128xf32> to vector<32x128xbf16>
    %c8_181 = arith.constant 8 : index
    %c0_182 = arith.constant 0 : index
    %c0_183 = arith.constant 0 : index
    %263 = vector.load %arg5[%c8_181, %c0_182, %c0_183] : memref<12x128x128xbf16, #tpu.memory_space<vmem>>, vector<1x128x128xbf16>
    %264 = vector.shape_cast %263 : vector<1x128x128xbf16> to vector<128x128xbf16>
    %cst_184 = arith.constant dense<0.000000e+00> : vector<32x128xf32>
    %265 = tpu.matmul %262, %264, %cst_184 {dimension_numbers = #tpu.dot_dimension_numbers<[1], [0], [0], [1], [0, 0, 1, 1], [], []>} : vector<32x128xbf16>, vector<128x128xbf16>, vector<32x128xf32> -> vector<32x128xf32>
    %c3_185 = arith.constant 3 : index
    %c0_186 = arith.constant 0 : index
    %266 = vector.load %arg6[%c3_185, %c0_186] : memref<6x128xf32, #tpu.memory_space<vmem>>, vector<1x128xf32>
    %267 = vector.broadcast %266 : vector<1x128xf32> to vector<32x128xf32>
    %268 = arith.addf %265, %267 : vector<32x128xf32>
    %cst_187 = arith.constant 0.000000e+00 : f32
    %269 = vector.broadcast %cst_187 : f32 to vector<32x128xf32>
    %270 = arith.maximumf %268, %269 : vector<32x128xf32>
    %271 = arith.truncf %270 : vector<32x128xf32> to vector<32x128xbf16>
    %c3_188 = arith.constant 3 : index
    %c0_189 = arith.constant 0 : index
    %c0_190 = arith.constant 0 : index
    %272 = vector.load %arg7[%c3_188, %c0_189, %c0_190] : memref<6x128x128xbf16, #tpu.memory_space<vmem>>, vector<1x128x128xbf16>
    %273 = vector.shape_cast %272 : vector<1x128x128xbf16> to vector<128x128xbf16>
    %cst_191 = arith.constant dense<0.000000e+00> : vector<32x128xf32>
    %274 = tpu.matmul %271, %273, %cst_191 {dimension_numbers = #tpu.dot_dimension_numbers<[1], [0], [0], [1], [0, 0, 1, 1], [], []>} : vector<32x128xbf16>, vector<128x128xbf16>, vector<32x128xf32> -> vector<32x128xf32>
    %c3_192 = arith.constant 3 : index
    %c0_193 = arith.constant 0 : index
    %275 = vector.load %arg8[%c3_192, %c0_193] : memref<6x128xf32, #tpu.memory_space<vmem>>, vector<1x128xf32>
    %276 = vector.broadcast %275 : vector<1x128xf32> to vector<32x128xf32>
    %277 = arith.addf %274, %276 : vector<32x128xf32>
    %278 = arith.truncf %277 : vector<32x128xf32> to vector<32x128xbf16>
    %cst_194 = arith.constant dense<0.000000e+00> : vector<2x128xf32>
    %279 = tpu.matmul %40, %278, %cst_194 {dimension_numbers = #tpu.dot_dimension_numbers<[0], [0], [1], [1], [0, 1, 1, 1], [], []>} : vector<32x2xbf16>, vector<32x128xbf16>, vector<2x128xf32> -> vector<2x128xf32>
    %280 = arith.truncf %279 : vector<2x128xf32> to vector<2x128xbf16>
    %c9_195 = arith.constant 9 : index
    %c0_196 = arith.constant 0 : index
    %c0_197 = arith.constant 0 : index
    %281 = vector.load %arg5[%c9_195, %c0_196, %c0_197] : memref<12x128x128xbf16, #tpu.memory_space<vmem>>, vector<1x128x128xbf16>
    %282 = vector.shape_cast %281 : vector<1x128x128xbf16> to vector<128x128xbf16>
    %cst_198 = arith.constant dense<0.000000e+00> : vector<2x128xf32>
    %283 = tpu.matmul %280, %282, %cst_198 {dimension_numbers = #tpu.dot_dimension_numbers<[1], [0], [0], [1], [0, 0, 1, 1], [], []>} : vector<2x128xbf16>, vector<128x128xbf16>, vector<2x128xf32> -> vector<2x128xf32>
    %c10_199 = arith.constant 10 : index
    %c0_200 = arith.constant 0 : index
    %c0_201 = arith.constant 0 : index
    %284 = vector.load %arg5[%c10_199, %c0_200, %c0_201] : memref<12x128x128xbf16, #tpu.memory_space<vmem>>, vector<1x128x128xbf16>
    %285 = vector.shape_cast %284 : vector<1x128x128xbf16> to vector<128x128xbf16>
    %cst_202 = arith.constant dense<0.000000e+00> : vector<2x128xf32>
    %286 = tpu.matmul %184, %285, %cst_202 {dimension_numbers = #tpu.dot_dimension_numbers<[1], [0], [0], [1], [0, 0, 1, 1], [], []>} : vector<2x128xbf16>, vector<128x128xbf16>, vector<2x128xf32> -> vector<2x128xf32>
    %287 = arith.addf %283, %286 : vector<2x128xf32>
    %c4_203 = arith.constant 4 : index
    %c0_204 = arith.constant 0 : index
    %288 = vector.load %arg6[%c4_203, %c0_204] : memref<6x128xf32, #tpu.memory_space<vmem>>, vector<1x128xf32>
    %289 = vector.broadcast %288 : vector<1x128xf32> to vector<2x128xf32>
    %290 = arith.addf %287, %289 : vector<2x128xf32>
    %cst_205 = arith.constant 0.000000e+00 : f32
    %291 = vector.broadcast %cst_205 : f32 to vector<2x128xf32>
    %292 = arith.maximumf %290, %291 : vector<2x128xf32>
    %293 = arith.truncf %292 : vector<2x128xf32> to vector<2x128xbf16>
    %c4_206 = arith.constant 4 : index
    %c0_207 = arith.constant 0 : index
    %c0_208 = arith.constant 0 : index
    %294 = vector.load %arg7[%c4_206, %c0_207, %c0_208] : memref<6x128x128xbf16, #tpu.memory_space<vmem>>, vector<1x128x128xbf16>
    %295 = vector.shape_cast %294 : vector<1x128x128xbf16> to vector<128x128xbf16>
    %cst_209 = arith.constant dense<0.000000e+00> : vector<2x128xf32>
    %296 = tpu.matmul %293, %295, %cst_209 {dimension_numbers = #tpu.dot_dimension_numbers<[1], [0], [0], [1], [0, 0, 1, 1], [], []>} : vector<2x128xbf16>, vector<128x128xbf16>, vector<2x128xf32> -> vector<2x128xf32>
    %c4_210 = arith.constant 4 : index
    %c0_211 = arith.constant 0 : index
    %297 = vector.load %arg8[%c4_210, %c0_211] : memref<6x128xf32, #tpu.memory_space<vmem>>, vector<1x128xf32>
    %298 = vector.broadcast %297 : vector<1x128xf32> to vector<2x128xf32>
    %299 = arith.addf %296, %298 : vector<2x128xf32>
    %300 = arith.truncf %299 : vector<2x128xf32> to vector<2x128xbf16>
    %c11_212 = arith.constant 11 : index
    %c0_213 = arith.constant 0 : index
    %c0_214 = arith.constant 0 : index
    %301 = vector.load %arg5[%c11_212, %c0_213, %c0_214] : memref<12x128x128xbf16, #tpu.memory_space<vmem>>, vector<1x128x128xbf16>
    %302 = vector.shape_cast %301 : vector<1x128x128xbf16> to vector<128x128xbf16>
    %cst_215 = arith.constant dense<0.000000e+00> : vector<2x128xf32>
    %303 = tpu.matmul %300, %302, %cst_215 {dimension_numbers = #tpu.dot_dimension_numbers<[1], [0], [0], [1], [0, 0, 1, 1], [], []>} : vector<2x128xbf16>, vector<128x128xbf16>, vector<2x128xf32> -> vector<2x128xf32>
    %c5_216 = arith.constant 5 : index
    %c0_217 = arith.constant 0 : index
    %304 = vector.load %arg6[%c5_216, %c0_217] : memref<6x128xf32, #tpu.memory_space<vmem>>, vector<1x128xf32>
    %305 = vector.broadcast %304 : vector<1x128xf32> to vector<2x128xf32>
    %306 = arith.addf %303, %305 : vector<2x128xf32>
    %cst_218 = arith.constant 0.000000e+00 : f32
    %307 = vector.broadcast %cst_218 : f32 to vector<2x128xf32>
    %308 = arith.maximumf %306, %307 : vector<2x128xf32>
    %309 = arith.truncf %308 : vector<2x128xf32> to vector<2x128xbf16>
    %c5_219 = arith.constant 5 : index
    %c0_220 = arith.constant 0 : index
    %c0_221 = arith.constant 0 : index
    %310 = vector.load %arg7[%c5_219, %c0_220, %c0_221] : memref<6x128x128xbf16, #tpu.memory_space<vmem>>, vector<1x128x128xbf16>
    %311 = vector.shape_cast %310 : vector<1x128x128xbf16> to vector<128x128xbf16>
    %cst_222 = arith.constant dense<0.000000e+00> : vector<2x128xf32>
    %312 = tpu.matmul %309, %311, %cst_222 {dimension_numbers = #tpu.dot_dimension_numbers<[1], [0], [0], [1], [0, 0, 1, 1], [], []>} : vector<2x128xbf16>, vector<128x128xbf16>, vector<2x128xf32> -> vector<2x128xf32>
    %c5_223 = arith.constant 5 : index
    %c0_224 = arith.constant 0 : index
    %313 = vector.load %arg8[%c5_223, %c0_224] : memref<6x128xf32, #tpu.memory_space<vmem>>, vector<1x128xf32>
    %314 = vector.broadcast %313 : vector<1x128xf32> to vector<2x128xf32>
    %315 = arith.addf %312, %314 : vector<2x128xf32>
    %316 = vector.shape_cast %315 : vector<2x128xf32> to vector<1x2x128xf32>
    %c0_225 = arith.constant 0 : index
    %317 = arith.index_cast %c1_i32 : i32 to index
    %c0_226 = arith.constant 0 : index
    %c0_227 = arith.constant 0 : index
    %318 = vector.load %arg9[%c0_225, %317, %c0_226, %c0_227] : memref<1x2x2x128xf32, #tpu.memory_space<vmem>>, vector<1x1x2x128xf32>
    %319 = vector.shape_cast %318 : vector<1x1x2x128xf32> to vector<1x2x128xf32>
    %320 = vector.shape_cast %316 : vector<1x2x128xf32> to vector<1x1x2x128xf32>
    tpu.vector_store %arg9[%c0_225, %317, %c0_226, %c0_227], %320 {strides = array<i32>} : memref<1x2x2x128xf32, #tpu.memory_space<vmem>>, vector<1x1x2x128xf32>,
    %c2_i32 = arith.constant 2 : i32
    return
  }
  func.func @transform_0(%arg0: i32) -> (i32, i32, i32) {
    %c0_i32 = arith.constant 0 : i32
    %c0_i32_0 = arith.constant 0 : i32
    %c0_i32_1 = arith.constant 0 : i32
    return %arg0, %c0_i32, %c0_i32_0 : i32, i32, i32
  }
  func.func @transform_1(%arg0: i32) -> (i32, i32, i32) {
    %c0_i32 = arith.constant 0 : i32
    %c0_i32_0 = arith.constant 0 : i32
    %c0_i32_1 = arith.constant 0 : i32
    return %arg0, %c0_i32, %c0_i32_0 : i32, i32, i32
  }
  func.func @transform_2(%arg0: i32) -> (i32, i32, i32) {
    %c0_i32 = arith.constant 0 : i32
    %c0_i32_0 = arith.constant 0 : i32
    %c0_i32_1 = arith.constant 0 : i32
    return %arg0, %c0_i32, %c0_i32_0 : i32, i32, i32
  }
  func.func @transform_3(%arg0: i32) -> (i32, i32, i32) {
    %c0_i32 = arith.constant 0 : i32
    %c0_i32_0 = arith.constant 0 : i32
    %c0_i32_1 = arith.constant 0 : i32
    return %arg0, %c0_i32, %c0_i32_0 : i32, i32, i32
  }
  func.func @transform_4(%arg0: i32) -> (i32, i32, i32) {
    %c0_i32 = arith.constant 0 : i32
    %c0_i32_0 = arith.constant 0 : i32
    %c0_i32_1 = arith.constant 0 : i32
    %c0_i32_2 = arith.constant 0 : i32
    return %c0_i32, %c0_i32_0, %c0_i32_1 : i32, i32, i32
  }
  func.func @transform_5(%arg0: i32) -> (i32, i32) {
    %c0_i32 = arith.constant 0 : i32
    %c0_i32_0 = arith.constant 0 : i32
    %c0_i32_1 = arith.constant 0 : i32
    return %c0_i32, %c0_i32_0 : i32, i32
  }
  func.func @transform_6(%arg0: i32) -> (i32, i32, i32) {
    %c0_i32 = arith.constant 0 : i32
    %c0_i32_0 = arith.constant 0 : i32
    %c0_i32_1 = arith.constant 0 : i32
    %c0_i32_2 = arith.constant 0 : i32
    return %c0_i32, %c0_i32_0, %c0_i32_1 : i32, i32, i32
  }
  func.func @transform_7(%arg0: i32) -> (i32, i32) {
    %c0_i32 = arith.constant 0 : i32
    %c0_i32_0 = arith.constant 0 : i32
    %c0_i32_1 = arith.constant 0 : i32
    return %c0_i32, %c0_i32_0 : i32, i32
  }
  func.func @transform_8(%arg0: i32) -> (i32, i32, i32, i32) {
    %c0_i32 = arith.constant 0 : i32
    %c0_i32_0 = arith.constant 0 : i32
    %c0_i32_1 = arith.constant 0 : i32
    %c0_i32_2 = arith.constant 0 : i32
    return %arg0, %c0_i32, %c0_i32_0, %c0_i32_1 : i32, i32, i32, i32
  }
}

</mosaic_0001>

<llo_original>
// kernel: tpu_custom_call.1
$region0: #{tpu_custom_call.1}
  #allocation0 [shape = 'u32[]', space=smem, size = 0x4, offset = 0x4, fixed_abs, tag = 'smem constant byte address 0x4 - core index']
  #allocation1 [shape = 'u32[144,128]{1,0:T(1,128)}', space=vmem, size = 0x12000, scoped, tag = 'internal scratch']
  %s0 = inlined_call_operand.vmem [shape: bf16[2,32,128], index: 0, kind: input, shape index: {}]
  %s1 = inlined_call_operand.vmem [shape: bf16[2,64,128], index: 1, kind: input, shape index: {}]
  %s2 = inlined_call_operand.vmem [shape: f32[2,2,128], index: 2, kind: input, shape index: {}]
  %s3 = inlined_call_operand.vmem [shape: s32[2,64,2], index: 3, kind: input, shape index: {}]
  %s4 = inlined_call_operand.hbm [shape: bf16[12,128,128], index: 4, kind: input, shape index: {}]
  %s5 = inlined_call_operand.vmem [shape: f32[6,128], index: 5, kind: input, shape index: {}]
  %s6 = inlined_call_operand.hbm [shape: bf16[6,128,128], index: 6, kind: input, shape index: {}]
  %s7 = inlined_call_operand.vmem [shape: f32[6,128], index: 7, kind: input, shape index: {}]
  %s8 = inlined_call_operand.hbm [shape: f32[2,2,2,128], index: 8, kind: output, shape index: {}]
  %s9 = sld [smem:[#allocation0]]
  $region73: #{tpu_custom_call.1} parent=0
    _
  %s11 = ssub.s32 1, %s9
  %s12 = scalar_select 0, %s11, %s9
  $region1: #{tpu_custom_call.1} parent=0
    #allocation2 [shape = 'u8[393216]{0}', space=vmem, size = 0x60000, scoped, tag = 'input window, operand 4, single buffered']
    #allocation3 [shape = 's32[2]{0}', space=sflag, size = 0x8, scoped, tag = 'scoped memory for tpu_custom_call.1']
    #allocation4 [shape = 's32[2]{0}', space=sflag, size = 0x8, scoped, tag = 'scoped memory for tpu_custom_call.1']
    #allocation5 [shape = 'u8[196608]{0}', space=vmem, size = 0x30000, scoped, tag = 'input window, operand 6, single buffered']
    #allocation6 [shape = 's32[1]{0}', space=sflag, size = 0x4, scoped, tag = 'scoped memory for tpu_custom_call.1']
    #allocation7 [shape = 'u8[4096]{0}', space=vmem, size = 0x1000, scoped, tag = 'output window, operand 0']
    %13 = vsyncpa [#allocation3], 0
    %14 = vsyncpa [#allocation6], 0
    %15 = vsyncpa [#allocation4], 0
    %s16 = scalar_lea.sflag [#allocation4], 1
    %17 = vsyncpa %s16, 0
    loop: start=0, step=1, limit=4
    $region2: #{tpu_custom_call.1} parent=1 // loop_pre_header
      _
    $region3: #{tpu_custom_call.1} parent=1 // loop_header
      %s19 = sphi 0, %s23
      %p20 = scmp.ge.s32.totalorder %s19, 4
      %s29 = sphi 0, %s31
      %s32 = sphi 0, %s29
      %s33 = sphi 0, %s32
      %s49 = sphi 0, %s33
      %s55 = sphi 0, %s57
      %s58 = sphi 0, %s55
      %s59 = sphi 0, %s58
      %s75 = sphi 0, %s59
      %s81 = sphi 0, %s83
      %s84 = sphi 0, %s81
      %s85 = sphi 0, %s84
      %s101 = sphi 0, %s85
      %s107 = sphi 0, %s109
      %s110 = sphi 0, %s107
      %s111 = sphi 0, %s110
      %s127 = sphi 0, %s111
      %s131 = sphi 0, %s131
      %s133 = sphi 0, %s131
      %s134 = sphi 0, %s133
      %s148 = sphi 0, %s134
      %s152 = sphi 0, %s152
      %s154 = sphi 0, %s152
      %s155 = sphi 0, %s154
      %s169 = sphi 0, %s155
      %s173 = sphi 0, %s173
      %s175 = sphi 0, %s173
      %s176 = sphi 0, %s175
      %s190 = sphi 0, %s176
      %s194 = sphi 0, %s194
      %s196 = sphi 0, %s194
      %s197 = sphi 0, %s196
      %s211 = sphi 0, %s197
      %s217 = sphi 0, %s219
      %s220 = sphi 0, %s217
      %s221 = sphi 0, %s220
      %s237 = sphi 0, %s221
    $region4: #{tpu_custom_call.1} parent=1 // loop_header_branch
      %22 = sbr.rel (%p20) target = $region8
    $region5: #{tpu_custom_call.1} parent=1 // loop_body
      %s24 = ssub.s32 %s19, 1
      %s25 = ssub.s32 %s19, 2
      %s26 = sadd.s32 %s19, 1
      %s27 = ssub.s32 %s19, %s26
      %p28 = scmp.eq.s32.totalorder %s27, 0
      %s30 = sadd.s32 %s29, 1
      %s31 = scalar_select %p28, %s29, %s30
      %p34 = pneg %p28
      %p35 = scmp.eq.s32.totalorder %s19, 1
      %p36 = por %p34, %p35
      %p37 = scmp.ne.s32.totalorder %s29, %s32
      %p38 = scmp.eq.s32.totalorder %s19, 0
      %p39 = por %p37, %p38
      %p40 = scmp.ne.s32.totalorder %s29, %s32
      %p41 = scmp.eq.s32.totalorder %s24, 1
      %p42 = por %p40, %p41
      %p43 = scmp.ne.s32.totalorder %s32, %s33
      %p44 = scmp.eq.s32.totalorder %s24, 0
      %p45 = por %p43, %p44
      %p46 = scmp.ne.s32.totalorder %s32, %s33
      %p47 = scmp.eq.s32.totalorder %s25, 1
      %p48 = por %p46, %p47
      %p50 = scmp.ne.s32.totalorder %s33, %s49
      %p51 = scmp.eq.s32.totalorder %s25, 0
      %p52 = por %p50, %p51
      %s53 = ssub.s32 %s19, %s26
      %p54 = scmp.eq.s32.totalorder %s53, 0
      %s56 = sadd.s32 %s55, 1
      %s57 = scalar_select %p54, %s55, %s56
      %p60 = pneg %p54
      %p61 = scmp.eq.s32.totalorder %s19, 1
      %p62 = por %p60, %p61
      %p63 = scmp.ne.s32.totalorder %s55, %s58
      %p64 = scmp.eq.s32.totalorder %s19, 0
      %p65 = por %p63, %p64
      %p66 = scmp.ne.s32.totalorder %s55, %s58
      %p67 = scmp.eq.s32.totalorder %s24, 1
      %p68 = por %p66, %p67
      %p69 = scmp.ne.s32.totalorder %s58, %s59
      %p70 = scmp.eq.s32.totalorder %s24, 0
      %p71 = por %p69, %p70
      %p72 = scmp.ne.s32.totalorder %s58, %s59
      %p73 = scmp.eq.s32.totalorder %s25, 1
      %p74 = por %p72, %p73
      %p76 = scmp.ne.s32.totalorder %s59, %s75
      %p77 = scmp.eq.s32.totalorder %s25, 0
      %p78 = por %p76, %p77
      %s79 = ssub.s32 %s19, %s26
      %p80 = scmp.eq.s32.totalorder %s79, 0
      %s82 = sadd.s32 %s81, 1
      %s83 = scalar_select %p80, %s81, %s82
      %p86 = pneg %p80
      %p87 = scmp.eq.s32.totalorder %s19, 1
      %p88 = por %p86, %p87
      %p89 = scmp.ne.s32.totalorder %s81, %s84
      %p90 = scmp.eq.s32.totalorder %s19, 0
      %p91 = por %p89, %p90
      %p92 = scmp.ne.s32.totalorder %s81, %s84
      %p93 = scmp.eq.s32.totalorder %s24, 1
      %p94 = por %p92, %p93
      %p95 = scmp.ne.s32.totalorder %s84, %s85
      %p96 = scmp.eq.s32.totalorder %s24, 0
      %p97 = por %p95, %p96
      %p98 = scmp.ne.s32.totalorder %s84, %s85
      %p99 = scmp.eq.s32.totalorder %s25, 1
      %p100 = por %p98, %p99
      %p102 = scmp.ne.s32.totalorder %s85, %s101
      %p103 = scmp.eq.s32.totalorder %s25, 0
      %p104 = por %p102, %p103
      %s105 = ssub.s32 %s19, %s26
      %p106 = scmp.eq.s32.totalorder %s105, 0
      %s108 = sadd.s32 %s107, 1
      %s109 = scalar_select %p106, %s107, %s108
      %p112 = pneg %p106
      %p113 = scmp.eq.s32.totalorder %s19, 1
      %p114 = por %p112, %p113
      %p115 = scmp.ne.s32.totalorder %s107, %s110
      %p116 = scmp.eq.s32.totalorder %s19, 0
      %p117 = por %p115, %p116
      %p118 = scmp.ne.s32.totalorder %s107, %s110
      %p119 = scmp.eq.s32.totalorder %s24, 1
      %p120 = por %p118, %p119
      %p121 = scmp.ne.s32.totalorder %s110, %s111
      %p122 = scmp.eq.s32.totalorder %s24, 0
      %p123 = por %p121, %p122
      %p124 = scmp.ne.s32.totalorder %s110, %s111
      %p125 = scmp.eq.s32.totalorder %s25, 1
      %p126 = por %p124, %p125
      %p128 = scmp.ne.s32.totalorder %s111, %s127
      %p129 = scmp.eq.s32.totalorder %s25, 0
      %p130 = por %p128, %p129
      %s132 = sadd.s32 %s131, 1
      %p135 = scmp.eq.s32.totalorder %s19, 1
      %p136 = scmp.ne.s32.totalorder %s131, %s133
      %p137 = scmp.eq.s32.totalorder %s19, 0
      %p138 = por %p136, %p137
      %p139 = scmp.ne.s32.totalorder %s131, %s133
      %p140 = scmp.eq.s32.totalorder %s24, 1
      %p141 = por %p139, %p140
      %p142 = scmp.ne.s32.totalorder %s133, %s134
      %p143 = scmp.eq.s32.totalorder %s24, 0
      %p144 = por %p142, %p143
      %p145 = scmp.ne.s32.totalorder %s133, %s134
      %p146 = scmp.eq.s32.totalorder %s25, 1
      %p147 = por %p145, %p146
      %p149 = scmp.ne.s32.totalorder %s134, %s148
      %p150 = scmp.eq.s32.totalorder %s25, 0
      %p151 = por %p149, %p150
      %s153 = sadd.s32 %s152, 1
      %p156 = scmp.eq.s32.totalorder %s19, 1
      %p157 = scmp.ne.s32.totalorder %s152, %s154
      %p158 = scmp.eq.s32.totalorder %s19, 0
      %p159 = por %p157, %p158
      %p160 = scmp.ne.s32.totalorder %s152, %s154
      %p161 = scmp.eq.s32.totalorder %s24, 1
      %p162 = por %p160, %p161
      %p163 = scmp.ne.s32.totalorder %s154, %s155
      %p164 = scmp.eq.s32.totalorder %s24, 0
      %p165 = por %p163, %p164
      %p166 = scmp.ne.s32.totalorder %s154, %s155
      %p167 = scmp.eq.s32.totalorder %s25, 1
      %p168 = por %p166, %p167
      %p170 = scmp.ne.s32.totalorder %s155, %s169
      %p171 = scmp.eq.s32.totalorder %s25, 0
      %p172 = por %p170, %p171
      %s174 = sadd.s32 %s173, 1
      %p177 = scmp.eq.s32.totalorder %s19, 1
      %p178 = scmp.ne.s32.totalorder %s173, %s175
      %p179 = scmp.eq.s32.totalorder %s19, 0
      %p180 = por %p178, %p179
      %p181 = scmp.ne.s32.totalorder %s173, %s175
      %p182 = scmp.eq.s32.totalorder %s24, 1
      %p183 = por %p181, %p182
      %p184 = scmp.ne.s32.totalorder %s175, %s176
      %p185 = scmp.eq.s32.totalorder %s24, 0
      %p186 = por %p184, %p185
      %p187 = scmp.ne.s32.totalorder %s175, %s176
      %p188 = scmp.eq.s32.totalorder %s25, 1
      %p189 = por %p187, %p188
      %p191 = scmp.ne.s32.totalorder %s176, %s190
      %p192 = scmp.eq.s32.totalorder %s25, 0
      %p193 = por %p191, %p192
      %s195 = sadd.s32 %s194, 1
      %p198 = scmp.eq.s32.totalorder %s19, 1
      %p199 = scmp.ne.s32.totalorder %s194, %s196
      %p200 = scmp.eq.s32.totalorder %s19, 0
      %p201 = por %p199, %p200
      %p202 = scmp.ne.s32.totalorder %s194, %s196
      %p203 = scmp.eq.s32.totalorder %s24, 1
      %p204 = por %p202, %p203
      %p205 = scmp.ne.s32.totalorder %s196, %s197
      %p206 = scmp.eq.s32.totalorder %s24, 0
      %p207 = por %p205, %p206
      %p208 = scmp.ne.s32.totalorder %s196, %s197
      %p209 = scmp.eq.s32.totalorder %s25, 1
      %p210 = por %p208, %p209
      %p212 = scmp.ne.s32.totalorder %s197, %s211
      %p213 = scmp.eq.s32.totalorder %s25, 0
      %p214 = por %p212, %p213
      %s215 = ssub.s32 %s19, %s26
      %p216 = scmp.eq.s32.totalorder %s215, 0
      %s218 = sadd.s32 %s217, 1
      %s219 = scalar_select %p216, %s217, %s218
      %p222 = pneg %p216
      %p223 = scmp.eq.s32.totalorder %s19, 1
      %p224 = por %p222, %p223
      %p225 = scmp.ne.s32.totalorder %s217, %s220
      %p226 = scmp.eq.s32.totalorder %s19, 0
      %p227 = por %p225, %p226
      %p228 = scmp.ne.s32.totalorder %s217, %s220
      %p229 = scmp.eq.s32.totalorder %s24, 1
      %p230 = por %p228, %p229
      %p231 = scmp.ne.s32.totalorder %s220, %s221
      %p232 = scmp.eq.s32.totalorder %s24, 0
      %p233 = por %p231, %p232
      %p234 = scmp.ne.s32.totalorder %s220, %s221
      %p235 = scmp.eq.s32.totalorder %s25, 1
      %p236 = por %p234, %p235
      %p238 = scmp.ne.s32.totalorder %s221, %s237
      %p239 = scmp.eq.s32.totalorder %s25, 0
      %p240 = por %p238, %p239
      %p241 = scmp.le.s32.totalorder 1, %s19
      %p242 = scmp.lt.s32.totalorder %s19, 3
      %p243 = pnand %p241, %p242
      %p244 = pneg %p243
      // Predicated region
      $region9: #{tpu_custom_call.1} parent=5 // pred_check
        _
      $region10: #{tpu_custom_call.1} parent=5 // pred_check_branch
        %246 = sbr.rel (%p243) target = $region12
      $region11: #{tpu_custom_call.1} parent=5 // pred_region
        %s247 = ssub.s32 %s19, 1
        // Predicated region
        $region13: #{tpu_custom_call.1} parent=11 // pred_check
          %p248 = pneg %p144
        $region14: #{tpu_custom_call.1} parent=11 // pred_check_branch
          %250 = sbr.rel (%p248) target = $region16
        $region15: #{tpu_custom_call.1} parent=11 // pred_region
          %s252 = ssub.s32 12288, 12288
          %253 = vsyncadd [#allocation3], %s252
          %s254 = sshll.u32 [#allocation2], 4
          %s255 = int_to_ptr.vmem [resolvable:$true] %s254
          %260 = dma.hbm_to_vmem [thread:$0]  %s4, 12288, %s255, [#allocation3], 64, 64, 4
        $region16: #{tpu_custom_call.1} parent=11 // pred_fallthru
          _
        // Predicated region
        $region17: #{tpu_custom_call.1} parent=11 // pred_check
          %p261 = pneg %p165
        $region18: #{tpu_custom_call.1} parent=11 // pred_check_branch
          %263 = sbr.rel (%p261) target = $region20
        $region19: #{tpu_custom_call.1} parent=11 // pred_region
          _
        $region20: #{tpu_custom_call.1} parent=11 // pred_fallthru
          _
        // Predicated region
        $region21: #{tpu_custom_call.1} parent=11 // pred_check
          %p264 = pneg %p186
        $region22: #{tpu_custom_call.1} parent=11 // pred_check_branch
          %266 = sbr.rel (%p264) target = $region24
        $region23: #{tpu_custom_call.1} parent=11 // pred_region
          %s268 = ssub.s32 6144, 6144
          %269 = vsyncadd [#allocation6], %s268
          %s270 = sshll.u32 [#allocation5], 4
          %s271 = int_to_ptr.vmem [resolvable:$true] %s270
          %276 = dma.hbm_to_vmem [thread:$0]  %s6, 6144, %s271, [#allocation6], 64, 64, 4
        $region24: #{tpu_custom_call.1} parent=11 // pred_fallthru
          _
        // Predicated region
        $region25: #{tpu_custom_call.1} parent=11 // pred_check
          %p277 = pneg %p207
        $region26: #{tpu_custom_call.1} parent=11 // pred_check_branch
          %279 = sbr.rel (%p277) target = $region28
        $region27: #{tpu_custom_call.1} parent=11 // pred_region
          _
        $region28: #{tpu_custom_call.1} parent=11 // pred_fallthru
          _
      $region12: #{tpu_custom_call.1} parent=5 // pred_fallthru
        _
      %p280 = scmp.lt.s32.totalorder %s19, 2
      // Predicated region
      $region29: #{tpu_custom_call.1} parent=5 // pred_check
        %p281 = pneg %p280
      $region30: #{tpu_custom_call.1} parent=5 // pred_check_branch
        %283 = sbr.rel (%p281) target = $region32
      $region31: #{tpu_custom_call.1} parent=5 // pred_region
        // Predicated region
        $region33: #{tpu_custom_call.1} parent=31 // pred_check
          %p284 = pneg %p39
        $region34: #{tpu_custom_call.1} parent=31 // pred_check_branch
          %286 = sbr.rel (%p284) target = $region36
        $region35: #{tpu_custom_call.1} parent=31 // pred_region
          %p287 = scmp.lt.s32.totalorder %s19, 1
          %s288 = scalar_select %p287, %s19, 1
          %s289 = smul.addr %s288, 4
          %s290 = smul.addr %s289, 4
          %s291 = scalar_lea.vmem %s0, %s290
        $region36: #{tpu_custom_call.1} parent=31 // pred_fallthru
          _
        // Predicated region
        $region37: #{tpu_custom_call.1} parent=31 // pred_check
          %p292 = pneg %p65
        $region38: #{tpu_custom_call.1} parent=31 // pred_check_branch
          %294 = sbr.rel (%p292) target = $region40
        $region39: #{tpu_custom_call.1} parent=31 // pred_region
          %p295 = scmp.lt.s32.totalorder %s19, 1
          %s296 = scalar_select %p295, %s19, 1
          %s297 = smul.addr %s296, 8
          %s298 = smul.addr %s297, 4
          %s299 = scalar_lea.vmem %s1, %s298
        $region40: #{tpu_custom_call.1} parent=31 // pred_fallthru
          _
        // Predicated region
        $region41: #{tpu_custom_call.1} parent=31 // pred_check
          %p300 = pneg %p91
        $region42: #{tpu_custom_call.1} parent=31 // pred_check_branch
          %302 = sbr.rel (%p300) target = $region44
        $region43: #{tpu_custom_call.1} parent=31 // pred_region
          %p303 = scmp.lt.s32.totalorder %s19, 1
          %s304 = scalar_select %p303, %s19, 1
          %s305 = smul.addr %s304, 2
          %s306 = scalar_lea.vmem %s2, %s305
        $region44: #{tpu_custom_call.1} parent=31 // pred_fallthru
          _
        // Predicated region
        $region45: #{tpu_custom_call.1} parent=31 // pred_check
          %p307 = pneg %p117
        $region46: #{tpu_custom_call.1} parent=31 // pred_check_branch
          %309 = sbr.rel (%p307) target = $region48
        $region47: #{tpu_custom_call.1} parent=31 // pred_region
          %p310 = scmp.lt.s32.totalorder %s19, 1
          %s311 = scalar_select %p310, %s19, 1
          %s312 = smul.addr %s311, 8
          %s313 = smul.addr %s312, 8
          %s314 = scalar_lea.vmem %s3, %s313
        $region48: #{tpu_custom_call.1} parent=31 // pred_fallthru
          _
      $region32: #{tpu_custom_call.1} parent=5 // pred_fallthru
        _
      %p315 = scmp.le.s32.totalorder 1, %s19
      %p316 = scmp.lt.s32.totalorder %s19, 3
      %p317 = pnand %p315, %p316
      %p318 = pneg %p317
      // Predicated region
      $region49: #{tpu_custom_call.1} parent=5 // pred_check
        _
      $region50: #{tpu_custom_call.1} parent=5 // pred_check_branch
        %320 = sbr.rel (%p317) target = $region52
      $region51: #{tpu_custom_call.1} parent=5 // pred_region
        %s321 = ssub.s32 %s19, 1
        // Predicated region
        $region53: #{tpu_custom_call.1} parent=51 // pred_check
          %p322 = pneg %p144
        $region54: #{tpu_custom_call.1} parent=51 // pred_check_branch
          %324 = sbr.rel (%p322) target = $region56
        $region55: #{tpu_custom_call.1} parent=51 // pred_region
          %325 = dma.done [#allocation3], 12288
        $region56: #{tpu_custom_call.1} parent=51 // pred_fallthru
          _
        // Predicated region
        $region57: #{tpu_custom_call.1} parent=51 // pred_check
          %p326 = pneg %p186
        $region58: #{tpu_custom_call.1} parent=51 // pred_check_branch
          %328 = sbr.rel (%p326) target = $region60
        $region59: #{tpu_custom_call.1} parent=51 // pred_region
          %329 = dma.done [#allocation6], 6144
        $region60: #{tpu_custom_call.1} parent=51 // pred_fallthru
          _
        %p330 = scmp.lt.s32.totalorder %s24, 1
        %s331 = scalar_select %p330, %s24, 1
        %s332 = smul.addr %s331, 4
        %s333 = smul.addr %s332, 4
        %s334 = scalar_lea.vmem %s0, %s333
        %p335 = pneg %p45
        %p336 = pneg %p42
        %p337 = scmp.lt.s32.totalorder %s24, 1
        %s338 = scalar_select %p337, %s24, 1
        %s339 = smul.addr %s338, 8
        %s340 = smul.addr %s339, 4
        %s341 = scalar_lea.vmem %s1, %s340
        %p342 = pneg %p71
        %p343 = pneg %p68
        %p344 = scmp.lt.s32.totalorder %s24, 1
        %s345 = scalar_select %p344, %s24, 1
        %s346 = smul.addr %s345, 2
        %s347 = scalar_lea.vmem %s2, %s346
        %p348 = pneg %p97
        %p349 = pneg %p94
        %p350 = scmp.lt.s32.totalorder %s24, 1
        %s351 = scalar_select %p350, %s24, 1
        %s352 = smul.addr %s351, 8
        %s353 = smul.addr %s352, 8
        %s354 = scalar_lea.vmem %s3, %s353
        %p355 = pneg %p123
        %p356 = pneg %p120
        %p357 = pneg %p144
        %p358 = pneg %p141
        %p359 = pneg %p165
        %p360 = pneg %p162
        %p361 = pneg %p186
        %p362 = pneg %p183
        %p363 = pneg %p207
        %p364 = pneg %p204
        %p365 = pneg %p233
        %p366 = pneg %p230
        %s367 = sand.u32 %s220, 1
        %s368 = scalar_lea.sflag [#allocation4], %s367
        %s369 = sand.u32 %s220, 1
        %s370 = smul.addr %s369, 4
        %s371 = scalar_lea.vmem [#allocation7], %s370
        %p372 = scmp.lt.s32.totalorder %s24, 1
        %s373 = scalar_select %p372, %s24, 1
        %s374 = smul.addr %s373, 4
        %s375 = smul.addr %s374, 4
        %s376 = scalar_lea.vmem %s0, %s375
        %p377 = scmp.lt.s32.totalorder %s24, 1
        %s378 = scalar_select %p377, %s24, 1
        %s379 = smul.addr %s378, 8
        %s380 = smul.addr %s379, 4
        %s381 = scalar_lea.vmem %s1, %s380
        %p382 = scmp.lt.s32.totalorder %s24, 1
        %s383 = scalar_select %p382, %s24, 1
        %s384 = smul.addr %s383, 2
        %s385 = scalar_lea.vmem %s2, %s384
        %p386 = scmp.lt.s32.totalorder %s24, 1
        %s387 = scalar_select %p386, %s24, 1
        %s388 = smul.addr %s387, 8
        %s389 = smul.addr %s388, 8
        %s390 = scalar_lea.vmem %s3, %s389
        %v392 = vld [vmem:[%s390] sm:$0xff]
        %v393 = vld [vmem:[%s390 + $0x8] sm:$0xff]
        %v394 = vld [vmem:[%s390 + $0x10] sm:$0xff]
        %v395 = vld [vmem:[%s390 + $0x18] sm:$0xff]
        %v396 = vld [vmem:[%s390 + $0x20] sm:$0xff]
        %v397 = vld [vmem:[%s390 + $0x28] sm:$0xff]
        %v398 = vld [vmem:[%s390 + $0x30] sm:$0xff]
        %v399 = vld [vmem:[%s390 + $0x38] sm:$0xff]
        %v400 = vlaneseq
        %v401 = vand.u32 %v400, 127
        %402 = vset.pattern.permute.xlu0 0
        %403 = vperm.xlu0 %402, %v392
        %v404 = vpop.permute.xlu0 %403
        %405 = vset.pattern.permute.xlu0 0
        %406 = vperm.xlu0 %405, %v393
        %v407 = vpop.permute.xlu0 %406
        %408 = vset.pattern.permute.xlu0 0
        %409 = vperm.xlu0 %408, %v394
        %v410 = vpop.permute.xlu0 %409
        %411 = vset.pattern.permute.xlu0 0
        %412 = vperm.xlu0 %411, %v395
        %v413 = vpop.permute.xlu0 %412
        %414 = vset.pattern.permute.xlu0 0
        %415 = vperm.xlu0 %414, %v396
        %v416 = vpop.permute.xlu0 %415
        %417 = vset.pattern.permute.xlu0 0
        %418 = vperm.xlu0 %417, %v397
        %v419 = vpop.permute.xlu0 %418
        %420 = vset.pattern.permute.xlu0 0
        %421 = vperm.xlu0 %420, %v398
        %v422 = vpop.permute.xlu0 %421
        %423 = vset.pattern.permute.xlu0 0
        %424 = vperm.xlu0 %423, %v399
        %v425 = vpop.permute.xlu0 %424
        %vm426 = vcmp.eq.s32.totalorder %v401, %v404
        %vm427 = vcmp.eq.s32.totalorder %v401, %v407
        %vm428 = vcmp.eq.s32.totalorder %v401, %v410
        %vm429 = vcmp.eq.s32.totalorder %v401, %v413
        %vm430 = vcmp.eq.s32.totalorder %v401, %v416
        %vm431 = vcmp.eq.s32.totalorder %v401, %v419
        %vm432 = vcmp.eq.s32.totalorder %v401, %v422
        %vm433 = vcmp.eq.s32.totalorder %v401, %v425
        %v434 = vsel %vm426, 1, 0
        %v435 = vsel %vm427, 1, 0
        %v436 = vsel %vm428, 1, 0
        %v437 = vsel %vm429, 1, 0
        %v438 = vsel %vm430, 1, 0
        %v439 = vsel %vm431, 1, 0
        %v440 = vsel %vm432, 1, 0
        %v441 = vsel %vm433, 1, 0
        %v442 = vcvt.s32.f32 %v434
        %v443 = vcvt.s32.f32 %v435
        %v444 = vcvt.s32.f32 %v436
        %v445 = vcvt.s32.f32 %v437
        %v446 = vcvt.s32.f32 %v438
        %v447 = vcvt.s32.f32 %v439
        %v448 = vcvt.s32.f32 %v440
        %v449 = vcvt.s32.f32 %v441
        %v450 = vpack.c.bf16 %v443, %v442
        %v451 = vpack.c.bf16 %v445, %v444
        %v452 = vpack.c.bf16 %v447, %v446
        %v453 = vpack.c.bf16 %v449, %v448
        %454 = vset.pattern.permute.xlu0 1
        %455 = vperm.xlu0 %454, %v392
        %v456 = vpop.permute.xlu0 %455
        %457 = vset.pattern.permute.xlu0 1
        %458 = vperm.xlu0 %457, %v393
        %v459 = vpop.permute.xlu0 %458
        %460 = vset.pattern.permute.xlu0 1
        %461 = vperm.xlu0 %460, %v394
        %v462 = vpop.permute.xlu0 %461
        %463 = vset.pattern.permute.xlu0 1
        %464 = vperm.xlu0 %463, %v395
        %v465 = vpop.permute.xlu0 %464
        %466 = vset.pattern.permute.xlu0 1
        %467 = vperm.xlu0 %466, %v396
        %v468 = vpop.permute.xlu0 %467
        %469 = vset.pattern.permute.xlu0 1
        %470 = vperm.xlu0 %469, %v397
        %v471 = vpop.permute.xlu0 %470
        %472 = vset.pattern.permute.xlu0 1
        %473 = vperm.xlu0 %472, %v398
        %v474 = vpop.permute.xlu0 %473
        %475 = vset.pattern.permute.xlu0 1
        %476 = vperm.xlu0 %475, %v399
        %v477 = vpop.permute.xlu0 %476
        %vm478 = vcmp.eq.s32.totalorder %v401, %v456
        %vm479 = vcmp.eq.s32.totalorder %v401, %v459
        %vm480 = vcmp.eq.s32.totalorder %v401, %v462
        %vm481 = vcmp.eq.s32.totalorder %v401, %v465
        %vm482 = vcmp.eq.s32.totalorder %v401, %v468
        %vm483 = vcmp.eq.s32.totalorder %v401, %v471
        %vm484 = vcmp.eq.s32.totalorder %v401, %v474
        %vm485 = vcmp.eq.s32.totalorder %v401, %v477
        %v486 = vsel %vm478, 1, 0
        %v487 = vsel %vm479, 1, 0
        %v488 = vsel %vm480, 1, 0
        %v489 = vsel %vm481, 1, 0
        %v490 = vsel %vm482, 1, 0
        %v491 = vsel %vm483, 1, 0
        %v492 = vsel %vm484, 1, 0
        %v493 = vsel %vm485, 1, 0
        %v494 = vcvt.s32.f32 %v486
        %v495 = vcvt.s32.f32 %v487
        %v496 = vcvt.s32.f32 %v488
        %v497 = vcvt.s32.f32 %v489
        %v498 = vcvt.s32.f32 %v490
        %v499 = vcvt.s32.f32 %v491
        %v500 = vcvt.s32.f32 %v492
        %v501 = vcvt.s32.f32 %v493
        %v502 = vpack.c.bf16 %v495, %v494
        %v503 = vpack.c.bf16 %v497, %v496
        %v504 = vpack.c.bf16 %v499, %v498
        %v505 = vpack.c.bf16 %v501, %v500
        %v506 = vlaneseq
        %v507 = vshrl.u32 %v506, 7
        %v508 = vadd.s32 %v507, 8
        %v509 = vadd.s32 %v507, 16
        %v510 = vadd.s32 %v507, 24
        %v511 = vadd.s32 %v507, 32
        %v512 = vadd.s32 %v507, 40
        %v513 = vadd.s32 %v507, 48
        %v514 = vadd.s32 %v507, 56
        %v515 = vmul.u32 %v401, 32
        %v516 = vsub.s32 %v507, %v515
        %v517 = vsub.s32 %v508, %v515
        %v518 = vsub.s32 %v509, %v515
        %v519 = vsub.s32 %v510, %v515
        %v520 = vsub.s32 %v511, %v515
        %v521 = vsub.s32 %v512, %v515
        %v522 = vsub.s32 %v513, %v515
        %v523 = vsub.s32 %v514, %v515
        %vm524 = vcmp.ge.s32.totalorder %v516, 0
        %vm525 = vcmp.ge.s32.totalorder %v517, 0
        %vm526 = vcmp.ge.s32.totalorder %v518, 0
        %vm527 = vcmp.ge.s32.totalorder %v519, 0
        %vm528 = vcmp.ge.s32.totalorder %v520, 0
        %vm529 = vcmp.ge.s32.totalorder %v521, 0
        %vm530 = vcmp.ge.s32.totalorder %v522, 0
        %vm531 = vcmp.ge.s32.totalorder %v523, 0
        %vm532 = vcmp.lt.s32.totalorder %v516, 32
        %vm533 = vcmp.lt.s32.totalorder %v517, 32
        %vm534 = vcmp.lt.s32.totalorder %v518, 32
        %vm535 = vcmp.lt.s32.totalorder %v519, 32
        %vm536 = vcmp.lt.s32.totalorder %v520, 32
        %vm537 = vcmp.lt.s32.totalorder %v521, 32
        %vm538 = vcmp.lt.s32.totalorder %v522, 32
        %vm539 = vcmp.lt.s32.totalorder %v523, 32
        %vm540 = vmand %vm524, %vm532
        %vm541 = vmand %vm525, %vm533
        %vm542 = vmand %vm526, %vm534
        %vm543 = vmand %vm527, %vm535
        %vm544 = vmand %vm528, %vm536
        %vm545 = vmand %vm529, %vm537
        %vm546 = vmand %vm530, %vm538
        %vm547 = vmand %vm531, %vm539
        %v548 = vsel %vm540, 1, 0
        %v549 = vsel %vm541, 1, 0
        %v550 = vsel %vm542, 1, 0
        %v551 = vsel %vm543, 1, 0
        %v552 = vsel %vm544, 1, 0
        %v553 = vsel %vm545, 1, 0
        %v554 = vsel %vm546, 1, 0
        %v555 = vsel %vm547, 1, 0
        %v556 = vcvt.s32.f32 %v548
        %v557 = vcvt.s32.f32 %v549
        %v558 = vcvt.s32.f32 %v550
        %v559 = vcvt.s32.f32 %v551
        %v560 = vcvt.s32.f32 %v552
        %v561 = vcvt.s32.f32 %v553
        %v562 = vcvt.s32.f32 %v554
        %v563 = vcvt.s32.f32 %v555
        %v564 = vpack.c.bf16 %v557, %v556
        %v565 = vpack.c.bf16 %v559, %v558
        %v566 = vpack.c.bf16 %v561, %v560
        %v567 = vpack.c.bf16 %v563, %v562
        %v568 = vmul.u32 %v401, 16
        %v569 = vsub.s32 %v507, %v568
        %v570 = vsub.s32 %v508, %v568
        %v571 = vsub.s32 %v509, %v568
        %v572 = vsub.s32 %v510, %v568
        %vm573 = vcmp.ge.s32.totalorder %v569, 0
        %vm574 = vcmp.ge.s32.totalorder %v570, 0
        %vm575 = vcmp.ge.s32.totalorder %v571, 0
        %vm576 = vcmp.ge.s32.totalorder %v572, 0
        %vm577 = vcmp.lt.s32.totalorder %v569, 16
        %vm578 = vcmp.lt.s32.totalorder %v570, 16
        %vm579 = vcmp.lt.s32.totalorder %v571, 16
        %vm580 = vcmp.lt.s32.totalorder %v572, 16
        %vm581 = vmand %vm573, %vm577
        %vm582 = vmand %vm574, %vm578
        %vm583 = vmand %vm575, %vm579
        %vm584 = vmand %vm576, %vm580
        %v585 = vsel %vm581, 1, 0
        %v586 = vsel %vm582, 1, 0
        %v587 = vsel %vm583, 1, 0
        %v588 = vsel %vm584, 1, 0
        %v589 = vcvt.s32.f32 %v585
        %v590 = vcvt.s32.f32 %v586
        %v591 = vcvt.s32.f32 %v587
        %v592 = vcvt.s32.f32 %v588
        %v593 = vpack.c.bf16 %v590, %v589
        %v594 = vpack.c.bf16 %v592, %v591
        %v595 = vld [vmem:[%s376] sm:$0xf]
        %v596 = vld [vmem:[%s376 + $0x4] sm:$0xf]
        %v597 = vld [vmem:[%s376 + $0x8] sm:$0xf]
        %v598 = vld [vmem:[%s376 + $0xc] sm:$0xf]
        %v599 = vld [vmem:[%s381] sm:$0xf]
        %v600 = vld [vmem:[%s381 + $0x4] sm:$0xf]
        %v601 = vld [vmem:[%s381 + $0x8] sm:$0xf]
        %v602 = vld [vmem:[%s381 + $0xc] sm:$0xf]
        %v603 = vld [vmem:[%s381 + $0x10] sm:$0xf]
        %v604 = vld [vmem:[%s381 + $0x14] sm:$0xf]
        %v605 = vld [vmem:[%s381 + $0x18] sm:$0xf]
        %v606 = vld [vmem:[%s381 + $0x1c] sm:$0xf]
        %v607 = vld [vmem:[%s385] sm:$0x3]
        %v608 = vpack.c.bf16 %v607, %v607
        %v609 = vld [vmem:[#allocation2] sm:$0xf]
        %v610 = vld [vmem:[#allocation2 + $0x4] sm:$0xf]
        %v611 = vld [vmem:[#allocation2 + $0x8] sm:$0xf]
        %v612 = vld [vmem:[#allocation2 + $0xc] sm:$0xf]
        %v613 = vld [vmem:[#allocation2 + $0x10] sm:$0xf]
        %v614 = vld [vmem:[#allocation2 + $0x14] sm:$0xf]
        %v615 = vld [vmem:[#allocation2 + $0x18] sm:$0xf]
        %v616 = vld [vmem:[#allocation2 + $0x1c] sm:$0xf]
        %v617 = vld [vmem:[#allocation2 + $0x20] sm:$0xf]
        %v618 = vld [vmem:[#allocation2 + $0x24] sm:$0xf]
        %v619 = vld [vmem:[#allocation2 + $0x28] sm:$0xf]
        %v620 = vld [vmem:[#allocation2 + $0x2c] sm:$0xf]
        %v621 = vld [vmem:[#allocation2 + $0x30] sm:$0xf]
        %v622 = vld [vmem:[#allocation2 + $0x34] sm:$0xf]
        %v623 = vld [vmem:[#allocation2 + $0x38] sm:$0xf]
        %v624 = vld [vmem:[#allocation2 + $0x3c] sm:$0xf]
        %v629 = vunpack.c.l.b16 %v595
        %v630 = vunpack.c.l.b16 %v596
        %v631 = vunpack.c.l.b16 %v597
        %v632 = vunpack.c.l.b16 %v598
        %v633 = vpack.c.b16 %v630, %v629
        %v634 = vpack.c.b16 %v632, %v631
        %v653 = vunpack.c.l.b16 %v609
        %v654 = vunpack.c.l.b16 %v610
        %v655 = vunpack.c.l.b16 %v611
        %v656 = vunpack.c.l.b16 %v612
        %v657 = vunpack.c.l.b16 %v613
        %v658 = vunpack.c.l.b16 %v614
        %v659 = vunpack.c.l.b16 %v615
        %v660 = vunpack.c.l.b16 %v616
        %v661 = vunpack.c.l.b16 %v617
        %v662 = vunpack.c.l.b16 %v618
        %v663 = vunpack.c.l.b16 %v619
        %v664 = vunpack.c.l.b16 %v620
        %v665 = vunpack.c.l.b16 %v621
        %v666 = vunpack.c.l.b16 %v622
        %v667 = vunpack.c.l.b16 %v623
        %v668 = vunpack.c.l.b16 %v624
        %v669 = vpack.c.b16 %v654, %v653
        %v670 = vpack.c.b16 %v656, %v655
        %v671 = vpack.c.b16 %v658, %v657
        %v672 = vpack.c.b16 %v660, %v659
        %v673 = vpack.c.b16 %v662, %v661
        %v674 = vpack.c.b16 %v664, %v663
        %v675 = vpack.c.b16 %v666, %v665
        %v676 = vpack.c.b16 %v668, %v667
        %685 = vmatprep.subr.bf16.mxu0 0
        %686 = vmatpush1.bf16.msra.mxu0 %v669
        %687 = vmatprep.subr.bf16.mxu0 0
        %688 = vmatpush1.bf16.msra.mxu0 %v670
        %689 = vmatprep.subr.bf16.mxu0 0
        %690 = vmatpush1.bf16.msra.mxu0 %v671
        %691 = vmatprep.subr.bf16.mxu0 0
        %692 = vmatpush1.bf16.msra.mxu0 %v672
        %693 = vmatprep.subr.bf16.mxu0 0
        %694 = vmatpush1.bf16.msra.mxu0 %v673
        %695 = vmatprep.subr.bf16.mxu0 0
        %696 = vmatpush1.bf16.msra.mxu0 %v674
        %697 = vmatprep.subr.bf16.mxu0 0
        %698 = vmatpush1.bf16.msra.mxu0 %v675
        %699 = vmatprep.subr.bf16.mxu0 0
        %700 = vmatpush1.bf16.msra.mxu0 %v676
        %701 = vmatprep.subr.bf16.mxu0 0
        %702 = vmatpush1.bf16.msra.mxu0 0
        %703 = vmatprep.subr.bf16.mxu0 0
        %704 = vmatpush1.bf16.msra.mxu0 0
        %705 = vmatprep.subr.bf16.mxu0 0
        %706 = vmatpush1.bf16.msra.mxu0 0
        %707 = vmatprep.subr.bf16.mxu0 0
        %708 = vmatpush1.bf16.msra.mxu0 0
        %709 = vmatprep.subr.bf16.mxu0 0
        %710 = vmatpush1.bf16.msra.mxu0 0
        %711 = vmatprep.subr.bf16.mxu0 0
        %712 = vmatpush1.bf16.msra.mxu0 0
        %713 = vmatprep.subr.bf16.mxu0 0
        %714 = vmatpush1.bf16.msra.mxu0 0
        %715 = vmatprep.subr.bf16.mxu0 0
        %716 = vmatpush1.bf16.msra.mxu0 0
        %717 = vmatprep.mubr.bf16.mxu0 0
        %718 = vmatmul.mubr.bf16.gmra.mrb[0].mxu0 %v633
        %v719 = vpop.f32.mrb[0].mxu0
        %v720 = vadd.f32 0.0, %v719
        %v721 = vpop.f32.mrb[0].mxu0
        %v722 = vpop.f32.mrb[0].mxu0
        %v723 = vadd.f32 0.0, %v722
        %v724 = vpop.f32.mrb[0].mxu0
        %725 = vmatprep.mubr.bf16.mxu0 0
        %726 = vmatmul.mubr.bf16.gmra.mrb[0].mxu0 %v634
        %v727 = vpop.f32.mrb[0].mxu0
        %v728 = vadd.f32 0.0, %v727
        %v729 = vpop.f32.mrb[0].mxu0
        %v730 = vpop.f32.mrb[0].mxu0
        %v731 = vadd.f32 0.0, %v730
        %v732 = vpop.f32.mrb[0].mxu0
        %733 = vdwg.mxu0
        %v734 = vpack.c.bf16 %v723, %v720
        %v735 = vpack.c.bf16 %v731, %v728
        %s736 = scalar_lea.vmem [#allocation2], 64
        %v737 = vld [vmem:[%s736] sm:$0xf]
        %v738 = vld [vmem:[%s736 + $0x4] sm:$0xf]
        %v739 = vld [vmem:[%s736 + $0x8] sm:$0xf]
        %v740 = vld [vmem:[%s736 + $0xc] sm:$0xf]
        %v741 = vld [vmem:[%s736 + $0x10] sm:$0xf]
        %v742 = vld [vmem:[%s736 + $0x14] sm:$0xf]
        %v743 = vld [vmem:[%s736 + $0x18] sm:$0xf]
        %v744 = vld [vmem:[%s736 + $0x1c] sm:$0xf]
        %v745 = vld [vmem:[%s736 + $0x20] sm:$0xf]
        %v746 = vld [vmem:[%s736 + $0x24] sm:$0xf]
        %v747 = vld [vmem:[%s736 + $0x28] sm:$0xf]
        %v748 = vld [vmem:[%s736 + $0x2c] sm:$0xf]
        %v749 = vld [vmem:[%s736 + $0x30] sm:$0xf]
        %v750 = vld [vmem:[%s736 + $0x34] sm:$0xf]
        %v751 = vld [vmem:[%s736 + $0x38] sm:$0xf]
        %v752 = vld [vmem:[%s736 + $0x3c] sm:$0xf]
        %v769 = vunpack.c.l.b16 %v737
        %v770 = vunpack.c.l.b16 %v738
        %v771 = vunpack.c.l.b16 %v739
        %v772 = vunpack.c.l.b16 %v740
        %v773 = vunpack.c.l.b16 %v741
        %v774 = vunpack.c.l.b16 %v742
        %v775 = vunpack.c.l.b16 %v743
        %v776 = vunpack.c.l.b16 %v744
        %v777 = vunpack.c.l.b16 %v745
        %v778 = vunpack.c.l.b16 %v746
        %v779 = vunpack.c.l.b16 %v747
        %v780 = vunpack.c.l.b16 %v748
        %v781 = vunpack.c.l.b16 %v749
        %v782 = vunpack.c.l.b16 %v750
        %v783 = vunpack.c.l.b16 %v751
        %v784 = vunpack.c.l.b16 %v752
        %v785 = vpack.c.b16 %v770, %v769
        %v786 = vpack.c.b16 %v772, %v771
        %v787 = vpack.c.b16 %v774, %v773
        %v788 = vpack.c.b16 %v776, %v775
        %v789 = vpack.c.b16 %v778, %v777
        %v790 = vpack.c.b16 %v780, %v779
        %v791 = vpack.c.b16 %v782, %v781
        %v792 = vpack.c.b16 %v784, %v783
        %801 = vmatprep.subr.bf16.mxu0 0
        %802 = vmatpush1.bf16.msra.mxu0 %v785
        %803 = vmatprep.subr.bf16.mxu0 0
        %804 = vmatpush1.bf16.msra.mxu0 %v786
        %805 = vmatprep.subr.bf16.mxu0 0
        %806 = vmatpush1.bf16.msra.mxu0 %v787
        %807 = vmatprep.subr.bf16.mxu0 0
        %808 = vmatpush1.bf16.msra.mxu0 %v788
        %809 = vmatprep.subr.bf16.mxu0 0
        %810 = vmatpush1.bf16.msra.mxu0 %v789
        %811 = vmatprep.subr.bf16.mxu0 0
        %812 = vmatpush1.bf16.msra.mxu0 %v790
        %813 = vmatprep.subr.bf16.mxu0 0
        %814 = vmatpush1.bf16.msra.mxu0 %v791
        %815 = vmatprep.subr.bf16.mxu0 0
        %816 = vmatpush1.bf16.msra.mxu0 %v792
        %817 = vmatprep.subr.bf16.mxu0 0
        %818 = vmatpush1.bf16.msra.mxu0 0
        %819 = vmatprep.subr.bf16.mxu0 0
        %820 = vmatpush1.bf16.msra.mxu0 0
        %821 = vmatprep.subr.bf16.mxu0 0
        %822 = vmatpush1.bf16.msra.mxu0 0
        %823 = vmatprep.subr.bf16.mxu0 0
        %824 = vmatpush1.bf16.msra.mxu0 0
        %825 = vmatprep.subr.bf16.mxu0 0
        %826 = vmatpush1.bf16.msra.mxu0 0
        %827 = vmatprep.subr.bf16.mxu0 0
        %828 = vmatpush1.bf16.msra.mxu0 0
        %829 = vmatprep.subr.bf16.mxu0 0
        %830 = vmatpush1.bf16.msra.mxu0 0
        %831 = vmatprep.subr.bf16.mxu0 0
        %832 = vmatpush1.bf16.msra.mxu0 0
        %833 = vmatprep.mubr.bf16.mxu0 0
        %834 = vmatmul.mubr.bf16.gmra.mrb[0].mxu0 %v633
        %v835 = vpop.f32.mrb[0].mxu0
        %v836 = vadd.f32 0.0, %v835
        %v837 = vpop.f32.mrb[0].mxu0
        %v838 = vpop.f32.mrb[0].mxu0
        %v839 = vadd.f32 0.0, %v838
        %v840 = vpop.f32.mrb[0].mxu0
        %841 = vmatprep.mubr.bf16.mxu0 0
        %842 = vmatmul.mubr.bf16.gmra.mrb[0].mxu0 %v634
        %v843 = vpop.f32.mrb[0].mxu0
        %v844 = vadd.f32 0.0, %v843
        %v845 = vpop.f32.mrb[0].mxu0
        %v846 = vpop.f32.mrb[0].mxu0
        %v847 = vadd.f32 0.0, %v846
        %v848 = vpop.f32.mrb[0].mxu0
        %849 = vdwg.mxu0
        %v850 = vpack.c.bf16 %v839, %v836
        %v851 = vpack.c.bf16 %v847, %v844
        %s852 = scalar_lea.vmem [#allocation2], 192
        %v853 = vld [vmem:[%s852] sm:$0xf]
        %v854 = vld [vmem:[%s852 + $0x4] sm:$0xf]
        %v855 = vld [vmem:[%s852 + $0x8] sm:$0xf]
        %v856 = vld [vmem:[%s852 + $0xc] sm:$0xf]
        %v857 = vld [vmem:[%s852 + $0x10] sm:$0xf]
        %v858 = vld [vmem:[%s852 + $0x14] sm:$0xf]
        %v859 = vld [vmem:[%s852 + $0x18] sm:$0xf]
        %v860 = vld [vmem:[%s852 + $0x1c] sm:$0xf]
        %v861 = vld [vmem:[%s852 + $0x20] sm:$0xf]
        %v862 = vld [vmem:[%s852 + $0x24] sm:$0xf]
        %v863 = vld [vmem:[%s852 + $0x28] sm:$0xf]
        %v864 = vld [vmem:[%s852 + $0x2c] sm:$0xf]
        %v865 = vld [vmem:[%s852 + $0x30] sm:$0xf]
        %v866 = vld [vmem:[%s852 + $0x34] sm:$0xf]
        %v867 = vld [vmem:[%s852 + $0x38] sm:$0xf]
        %v868 = vld [vmem:[%s852 + $0x3c] sm:$0xf]
        %v885 = vunpack.c.l.b16 %v853
        %v886 = vunpack.c.l.b16 %v854
        %v887 = vunpack.c.l.b16 %v855
        %v888 = vunpack.c.l.b16 %v856
        %v889 = vunpack.c.l.b16 %v857
        %v890 = vunpack.c.l.b16 %v858
        %v891 = vunpack.c.l.b16 %v859
        %v892 = vunpack.c.l.b16 %v860
        %v893 = vunpack.c.l.b16 %v861
        %v894 = vunpack.c.l.b16 %v862
        %v895 = vunpack.c.l.b16 %v863
        %v896 = vunpack.c.l.b16 %v864
        %v897 = vunpack.c.l.b16 %v865
        %v898 = vunpack.c.l.b16 %v866
        %v899 = vunpack.c.l.b16 %v867
        %v900 = vunpack.c.l.b16 %v868
        %v901 = vpack.c.b16 %v886, %v885
        %v902 = vpack.c.b16 %v888, %v887
        %v903 = vpack.c.b16 %v890, %v889
        %v904 = vpack.c.b16 %v892, %v891
        %v905 = vpack.c.b16 %v894, %v893
        %v906 = vpack.c.b16 %v896, %v895
        %v907 = vpack.c.b16 %v898, %v897
        %v908 = vpack.c.b16 %v900, %v899
        %917 = vmatprep.subr.bf16.mxu0 0
        %918 = vmatpush1.bf16.msra.mxu0 %v901
        %919 = vmatprep.subr.bf16.mxu0 0
        %920 = vmatpush1.bf16.msra.mxu0 %v902
        %921 = vmatprep.subr.bf16.mxu0 0
        %922 = vmatpush1.bf16.msra.mxu0 %v903
        %923 = vmatprep.subr.bf16.mxu0 0
        %924 = vmatpush1.bf16.msra.mxu0 %v904
        %925 = vmatprep.subr.bf16.mxu0 0
        %926 = vmatpush1.bf16.msra.mxu0 %v905
        %927 = vmatprep.subr.bf16.mxu0 0
        %928 = vmatpush1.bf16.msra.mxu0 %v906
        %929 = vmatprep.subr.bf16.mxu0 0
        %930 = vmatpush1.bf16.msra.mxu0 %v907
        %931 = vmatprep.subr.bf16.mxu0 0
        %932 = vmatpush1.bf16.msra.mxu0 %v908
        %933 = vmatprep.subr.bf16.mxu0 0
        %934 = vmatpush1.bf16.msra.mxu0 0
        %935 = vmatprep.subr.bf16.mxu0 0
        %936 = vmatpush1.bf16.msra.mxu0 0
        %937 = vmatprep.subr.bf16.mxu0 0
        %938 = vmatpush1.bf16.msra.mxu0 0
        %939 = vmatprep.subr.bf16.mxu0 0
        %940 = vmatpush1.bf16.msra.mxu0 0
        %941 = vmatprep.subr.bf16.mxu0 0
        %942 = vmatpush1.bf16.msra.mxu0 0
        %943 = vmatprep.subr.bf16.mxu0 0
        %944 = vmatpush1.bf16.msra.mxu0 0
        %945 = vmatprep.subr.bf16.mxu0 0
        %946 = vmatpush1.bf16.msra.mxu0 0
        %947 = vmatprep.subr.bf16.mxu0 0
        %948 = vmatpush1.bf16.msra.mxu0 0
        %949 = vmatprep.mubr.bf16.mxu0 0
        %950 = vmatmul.mubr.bf16.gmra.mrb[0].mxu0 %v608
        %v951 = vpop.f32.mrb[0].mxu0
        %v952 = vadd.f32 0.0, %v951
        %v953 = vpop.f32.mrb[0].mxu0
        %v954 = vpop.f32.mrb[0].mxu0
        %v955 = vpop.f32.mrb[0].mxu0
        %956 = vdwg.mxu0
        %v957 = vpack.c.bf16 %v952, %v952
        %vm958 = vcmask 261120
        %v960 = vsel %vm958, %v502, 0
        %v963 = vsel %vm958, %v503, 0
        %v966 = vsel %vm958, %v504, 0
        %v969 = vsel %vm958, %v505, 0
        %971 = vmatprep.subr.bf16.mxu0 0
        %972 = vmatpush1.bf16.msra.mxu0 %v850
        %973 = vmatprep.subr.bf16.mxu0 0
        %974 = vmatpush1.bf16.msra.mxu0 %v851
        %975 = vmatprep.subr.bf16.mxu0 0
        %976 = vmatpush1.bf16.msra.mxu0 0
        %977 = vmatprep.subr.bf16.mxu0 0
        %978 = vmatpush1.bf16.msra.mxu0 0
        %979 = vmatprep.subr.bf16.mxu0 0
        %980 = vmatpush1.bf16.msra.mxu0 0
        %981 = vmatprep.subr.bf16.mxu0 0
        %982 = vmatpush1.bf16.msra.mxu0 0
        %983 = vmatprep.subr.bf16.mxu0 0
        %984 = vmatpush1.bf16.msra.mxu0 0
        %985 = vmatprep.subr.bf16.mxu0 0
        %986 = vmatpush1.bf16.msra.mxu0 0
        %987 = vmatprep.subr.bf16.mxu0 0
        %988 = vmatpush1.bf16.msra.mxu0 0
        %989 = vmatprep.subr.bf16.mxu0 0
        %990 = vmatpush1.bf16.msra.mxu0 0
        %991 = vmatprep.subr.bf16.mxu0 0
        %992 = vmatpush1.bf16.msra.mxu0 0
        %993 = vmatprep.subr.bf16.mxu0 0
        %994 = vmatpush1.bf16.msra.mxu0 0
        %995 = vmatprep.subr.bf16.mxu0 0
        %996 = vmatpush1.bf16.msra.mxu0 0
        %997 = vmatprep.subr.bf16.mxu0 0
        %998 = vmatpush1.bf16.msra.mxu0 0
        %999 = vmatprep.subr.bf16.mxu0 0
        %1000 = vmatpush1.bf16.msra.mxu0 0
        %1001 = vmatprep.subr.bf16.mxu0 0
        %1002 = vmatpush1.bf16.msra.mxu0 0
        %1003 = vmatprep.mubr.bf16.mxu0 0
        %1004 = vmatmul.mubr.bf16.gmra.mrb[0].mxu0 %v960
        %v1005 = vpop.f32.mrb[0].mxu0
        %v1006 = vadd.f32 0.0, %v1005
        %v1007 = vpop.f32.mrb[0].mxu0
        %v1008 = vpop.f32.mrb[0].mxu0
        %v1009 = vadd.f32 0.0, %v1008
        %v1010 = vpop.f32.mrb[0].mxu0
        %1011 = vmatprep.mubr.bf16.mxu0 0
        %1012 = vmatmul.mubr.bf16.gmra.mrb[0].mxu0 %v963
        %v1013 = vpop.f32.mrb[0].mxu0
        %v1014 = vadd.f32 0.0, %v1013
        %v1015 = vpop.f32.mrb[0].mxu0
        %v1016 = vpop.f32.mrb[0].mxu0
        %v1017 = vadd.f32 0.0, %v1016
        %v1018 = vpop.f32.mrb[0].mxu0
        %1019 = vmatprep.mubr.bf16.mxu0 0
        %1020 = vmatmul.mubr.bf16.gmra.mrb[0].mxu0 %v966
        %v1021 = vpop.f32.mrb[0].mxu0
        %v1022 = vadd.f32 0.0, %v1021
        %v1023 = vpop.f32.mrb[0].mxu0
        %v1024 = vpop.f32.mrb[0].mxu0
        %v1025 = vadd.f32 0.0, %v1024
        %v1026 = vpop.f32.mrb[0].mxu0
        %1027 = vmatprep.mubr.bf16.mxu0 0
        %1028 = vmatmul.mubr.bf16.gmra.mrb[0].mxu0 %v969
        %v1029 = vpop.f32.mrb[0].mxu0
        %v1030 = vadd.f32 0.0, %v1029
        %v1031 = vpop.f32.mrb[0].mxu0
        %v1032 = vpop.f32.mrb[0].mxu0
        %v1033 = vadd.f32 0.0, %v1032
        %v1034 = vpop.f32.mrb[0].mxu0
        %1035 = vdwg.mxu0
        %v1037 = vsel %vm958, %v450, 0
        %v1040 = vsel %vm958, %v451, 0
        %v1043 = vsel %vm958, %v452, 0
        %v1046 = vsel %vm958, %v453, 0
        %1048 = vmatprep.subr.bf16.mxu0 0
        %1049 = vmatpush1.bf16.msra.mxu0 %v734
        %1050 = vmatprep.subr.bf16.mxu0 0
        %1051 = vmatpush1.bf16.msra.mxu0 %v735
        %1052 = vmatprep.subr.bf16.mxu0 0
        %1053 = vmatpush1.bf16.msra.mxu0 0
        %1054 = vmatprep.subr.bf16.mxu0 0
        %1055 = vmatpush1.bf16.msra.mxu0 0
        %1056 = vmatprep.subr.bf16.mxu0 0
        %1057 = vmatpush1.bf16.msra.mxu0 0
        %1058 = vmatprep.subr.bf16.mxu0 0
        %1059 = vmatpush1.bf16.msra.mxu0 0
        %1060 = vmatprep.subr.bf16.mxu0 0
        %1061 = vmatpush1.bf16.msra.mxu0 0
        %1062 = vmatprep.subr.bf16.mxu0 0
        %1063 = vmatpush1.bf16.msra.mxu0 0
        %1064 = vmatprep.subr.bf16.mxu0 0
        %1065 = vmatpush1.bf16.msra.mxu0 0
        %1066 = vmatprep.subr.bf16.mxu0 0
        %1067 = vmatpush1.bf16.msra.mxu0 0
        %1068 = vmatprep.subr.bf16.mxu0 0
        %1069 = vmatpush1.bf16.msra.mxu0 0
        %1070 = vmatprep.subr.bf16.mxu0 0
        %1071 = vmatpush1.bf16.msra.mxu0 0
        %1072 = vmatprep.subr.bf16.mxu0 0
        %1073 = vmatpush1.bf16.msra.mxu0 0
        %1074 = vmatprep.subr.bf16.mxu0 0
        %1075 = vmatpush1.bf16.msra.mxu0 0
        %1076 = vmatprep.subr.bf16.mxu0 0
        %1077 = vmatpush1.bf16.msra.mxu0 0
        %1078 = vmatprep.subr.bf16.mxu0 0
        %1079 = vmatpush1.bf16.msra.mxu0 0
        %1080 = vmatprep.mubr.bf16.mxu0 0
        %1081 = vmatmul.mubr.bf16.gmra.mrb[0].mxu0 %v1037
        %v1082 = vpop.f32.mrb[0].mxu0
        %v1083 = vadd.f32 %v1006, %v1082
        %v1084 = vpop.f32.mrb[0].mxu0
        %v1085 = vpop.f32.mrb[0].mxu0
        %v1086 = vadd.f32 %v1009, %v1085
        %v1087 = vpop.f32.mrb[0].mxu0
        %1088 = vmatprep.mubr.bf16.mxu0 0
        %1089 = vmatmul.mubr.bf16.gmra.mrb[0].mxu0 %v1040
        %v1090 = vpop.f32.mrb[0].mxu0
        %v1091 = vadd.f32 %v1014, %v1090
        %v1092 = vpop.f32.mrb[0].mxu0
        %v1093 = vpop.f32.mrb[0].mxu0
        %v1094 = vadd.f32 %v1017, %v1093
        %v1095 = vpop.f32.mrb[0].mxu0
        %1096 = vmatprep.mubr.bf16.mxu0 0
        %1097 = vmatmul.mubr.bf16.gmra.mrb[0].mxu0 %v1043
        %v1098 = vpop.f32.mrb[0].mxu0
        %v1099 = vadd.f32 %v1022, %v1098
        %v1100 = vpop.f32.mrb[0].mxu0
        %v1101 = vpop.f32.mrb[0].mxu0
        %v1102 = vadd.f32 %v1025, %v1101
        %v1103 = vpop.f32.mrb[0].mxu0
        %1104 = vmatprep.mubr.bf16.mxu0 0
        %1105 = vmatmul.mubr.bf16.gmra.mrb[0].mxu0 %v1046
        %v1106 = vpop.f32.mrb[0].mxu0
        %v1107 = vadd.f32 %v1030, %v1106
        %v1108 = vpop.f32.mrb[0].mxu0
        %v1109 = vpop.f32.mrb[0].mxu0
        %v1110 = vadd.f32 %v1033, %v1109
        %v1111 = vpop.f32.mrb[0].mxu0
        %1112 = vdwg.mxu0
        %s1113 = scalar_lea.vmem [#allocation2], 128
        %v1114 = vld [vmem:[%s1113] sm:$0xf]
        %v1115 = vld [vmem:[%s1113 + $0x4] sm:$0xf]
        %v1116 = vld [vmem:[%s1113 + $0x8] sm:$0xf]
        %v1117 = vld [vmem:[%s1113 + $0xc] sm:$0xf]
        %v1118 = vld [vmem:[%s1113 + $0x10] sm:$0xf]
        %v1119 = vld [vmem:[%s1113 + $0x14] sm:$0xf]
        %v1120 = vld [vmem:[%s1113 + $0x18] sm:$0xf]
        %v1121 = vld [vmem:[%s1113 + $0x1c] sm:$0xf]
        %v1122 = vld [vmem:[%s1113 + $0x20] sm:$0xf]
        %v1123 = vld [vmem:[%s1113 + $0x24] sm:$0xf]
        %v1124 = vld [vmem:[%s1113 + $0x28] sm:$0xf]
        %v1125 = vld [vmem:[%s1113 + $0x2c] sm:$0xf]
        %v1126 = vld [vmem:[%s1113 + $0x30] sm:$0xf]
        %v1127 = vld [vmem:[%s1113 + $0x34] sm:$0xf]
        %v1128 = vld [vmem:[%s1113 + $0x38] sm:$0xf]
        %v1129 = vld [vmem:[%s1113 + $0x3c] sm:$0xf]
        %v1138 = vunpack.c.l.b16 %v599
        %v1139 = vunpack.c.l.b16 %v600
        %v1140 = vunpack.c.l.b16 %v601
        %v1141 = vunpack.c.l.b16 %v602
        %v1142 = vunpack.c.l.b16 %v603
        %v1143 = vunpack.c.l.b16 %v604
        %v1144 = vunpack.c.l.b16 %v605
        %v1145 = vunpack.c.l.b16 %v606
        %v1146 = vpack.c.b16 %v1139, %v1138
        %v1147 = vpack.c.b16 %v1141, %v1140
        %v1148 = vpack.c.b16 %v1143, %v1142
        %v1149 = vpack.c.b16 %v1145, %v1144
        %v1170 = vunpack.c.l.b16 %v1114
        %v1171 = vunpack.c.l.b16 %v1115
        %v1172 = vunpack.c.l.b16 %v1116
        %v1173 = vunpack.c.l.b16 %v1117
        %v1174 = vunpack.c.l.b16 %v1118
        %v1175 = vunpack.c.l.b16 %v1119
        %v1176 = vunpack.c.l.b16 %v1120
        %v1177 = vunpack.c.l.b16 %v1121
        %v1178 = vunpack.c.l.b16 %v1122
        %v1179 = vunpack.c.l.b16 %v1123
        %v1180 = vunpack.c.l.b16 %v1124
        %v1181 = vunpack.c.l.b16 %v1125
        %v1182 = vunpack.c.l.b16 %v1126
        %v1183 = vunpack.c.l.b16 %v1127
        %v1184 = vunpack.c.l.b16 %v1128
        %v1185 = vunpack.c.l.b16 %v1129
        %v1186 = vpack.c.b16 %v1171, %v1170
        %v1187 = vpack.c.b16 %v1173, %v1172
        %v1188 = vpack.c.b16 %v1175, %v1174
        %v1189 = vpack.c.b16 %v1177, %v1176
        %v1190 = vpack.c.b16 %v1179, %v1178
        %v1191 = vpack.c.b16 %v1181, %v1180
        %v1192 = vpack.c.b16 %v1183, %v1182
        %v1193 = vpack.c.b16 %v1185, %v1184
        %1202 = vmatprep.subr.bf16.mxu0 0
        %1203 = vmatpush1.bf16.msra.mxu0 %v1186
        %1204 = vmatprep.subr.bf16.mxu0 0
        %1205 = vmatpush1.bf16.msra.mxu0 %v1187
        %1206 = vmatprep.subr.bf16.mxu0 0
        %1207 = vmatpush1.bf16.msra.mxu0 %v1188
        %1208 = vmatprep.subr.bf16.mxu0 0
        %1209 = vmatpush1.bf16.msra.mxu0 %v1189
        %1210 = vmatprep.subr.bf16.mxu0 0
        %1211 = vmatpush1.bf16.msra.mxu0 %v1190
        %1212 = vmatprep.subr.bf16.mxu0 0
        %1213 = vmatpush1.bf16.msra.mxu0 %v1191
        %1214 = vmatprep.subr.bf16.mxu0 0
        %1215 = vmatpush1.bf16.msra.mxu0 %v1192
        %1216 = vmatprep.subr.bf16.mxu0 0
        %1217 = vmatpush1.bf16.msra.mxu0 %v1193
        %1218 = vmatprep.subr.bf16.mxu0 0
        %1219 = vmatpush1.bf16.msra.mxu0 0
        %1220 = vmatprep.subr.bf16.mxu0 0
        %1221 = vmatpush1.bf16.msra.mxu0 0
        %1222 = vmatprep.subr.bf16.mxu0 0
        %1223 = vmatpush1.bf16.msra.mxu0 0
        %1224 = vmatprep.subr.bf16.mxu0 0
        %1225 = vmatpush1.bf16.msra.mxu0 0
        %1226 = vmatprep.subr.bf16.mxu0 0
        %1227 = vmatpush1.bf16.msra.mxu0 0
        %1228 = vmatprep.subr.bf16.mxu0 0
        %1229 = vmatpush1.bf16.msra.mxu0 0
        %1230 = vmatprep.subr.bf16.mxu0 0
        %1231 = vmatpush1.bf16.msra.mxu0 0
        %1232 = vmatprep.subr.bf16.mxu0 0
        %1233 = vmatpush1.bf16.msra.mxu0 0
        %1234 = vmatprep.mubr.bf16.mxu0 0
        %1235 = vmatmul.mubr.bf16.gmra.mrb[0].mxu0 %v1146
        %v1236 = vpop.f32.mrb[0].mxu0
        %v1237 = vadd.f32 0.0, %v1236
        %v1238 = vpop.f32.mrb[0].mxu0
        %v1239 = vpop.f32.mrb[0].mxu0
        %v1240 = vadd.f32 0.0, %v1239
        %v1241 = vpop.f32.mrb[0].mxu0
        %1242 = vmatprep.mubr.bf16.mxu0 0
        %1243 = vmatmul.mubr.bf16.gmra.mrb[0].mxu0 %v1147
        %v1244 = vpop.f32.mrb[0].mxu0
        %v1245 = vadd.f32 0.0, %v1244
        %v1246 = vpop.f32.mrb[0].mxu0
        %v1247 = vpop.f32.mrb[0].mxu0
        %v1248 = vadd.f32 0.0, %v1247
        %v1249 = vpop.f32.mrb[0].mxu0
        %1250 = vmatprep.mubr.bf16.mxu0 0
        %1251 = vmatmul.mubr.bf16.gmra.mrb[0].mxu0 %v1148
        %v1252 = vpop.f32.mrb[0].mxu0
        %v1253 = vadd.f32 0.0, %v1252
        %v1254 = vpop.f32.mrb[0].mxu0
        %v1255 = vpop.f32.mrb[0].mxu0
        %v1256 = vadd.f32 0.0, %v1255
        %v1257 = vpop.f32.mrb[0].mxu0
        %1258 = vmatprep.mubr.bf16.mxu0 0
        %1259 = vmatmul.mubr.bf16.gmra.mrb[0].mxu0 %v1149
        %v1260 = vpop.f32.mrb[0].mxu0
        %v1261 = vadd.f32 0.0, %v1260
        %v1262 = vpop.f32.mrb[0].mxu0
        %v1263 = vpop.f32.mrb[0].mxu0
        %v1264 = vadd.f32 0.0, %v1263
        %v1265 = vpop.f32.mrb[0].mxu0
        %1266 = vdwg.mxu0
        %v1267 = vadd.f32 %v1083, %v1237
        %v1268 = vadd.f32 %v1086, %v1240
        %v1269 = vadd.f32 %v1091, %v1245
        %v1270 = vadd.f32 %v1094, %v1248
        %v1271 = vadd.f32 %v1099, %v1253
        %v1272 = vadd.f32 %v1102, %v1256
        %v1273 = vadd.f32 %v1107, %v1261
        %v1274 = vadd.f32 %v1110, %v1264
        %vm1275 = vcmask 15360
        %v1277 = vsel %vm1275, %v564, 0
        %v1280 = vsel %vm1275, %v565, 0
        %v1283 = vsel %vm1275, %v566, 0
        %v1286 = vsel %vm1275, %v567, 0
        %vm1288 = vcmask 1040384
        %v1290 = vsel %vm1288, %v957, 0
        %1292 = vmatprep.subr.bf16.mxu0 0
        %1293 = vmatpush1.bf16.msra.mxu0 %v1290
        %1294 = vmatprep.subr.bf16.mxu0 0
        %1295 = vmatpush1.bf16.msra.mxu0 0
        %1296 = vmatprep.subr.bf16.mxu0 0
        %1297 = vmatpush1.bf16.msra.mxu0 0
        %1298 = vmatprep.subr.bf16.mxu0 0
        %1299 = vmatpush1.bf16.msra.mxu0 0
        %1300 = vmatprep.subr.bf16.mxu0 0
        %1301 = vmatpush1.bf16.msra.mxu0 0
        %1302 = vmatprep.subr.bf16.mxu0 0
        %1303 = vmatpush1.bf16.msra.mxu0 0
        %1304 = vmatprep.subr.bf16.mxu0 0
        %1305 = vmatpush1.bf16.msra.mxu0 0
        %1306 = vmatprep.subr.bf16.mxu0 0
        %1307 = vmatpush1.bf16.msra.mxu0 0
        %1308 = vmatprep.subr.bf16.mxu0 0
        %1309 = vmatpush1.bf16.msra.mxu0 0
        %1310 = vmatprep.subr.bf16.mxu0 0
        %1311 = vmatpush1.bf16.msra.mxu0 0
        %1312 = vmatprep.subr.bf16.mxu0 0
        %1313 = vmatpush1.bf16.msra.mxu0 0
        %1314 = vmatprep.subr.bf16.mxu0 0
        %1315 = vmatpush1.bf16.msra.mxu0 0
        %1316 = vmatprep.subr.bf16.mxu0 0
        %1317 = vmatpush1.bf16.msra.mxu0 0
        %1318 = vmatprep.subr.bf16.mxu0 0
        %1319 = vmatpush1.bf16.msra.mxu0 0
        %1320 = vmatprep.subr.bf16.mxu0 0
        %1321 = vmatpush1.bf16.msra.mxu0 0
        %1322 = vmatprep.subr.bf16.mxu0 0
        %1323 = vmatpush1.bf16.msra.mxu0 0
        %1324 = vmatprep.mubr.bf16.mxu0 0
        %1325 = vmatmul.mubr.bf16.gmra.mrb[0].mxu0 %v1277
        %v1326 = vpop.f32.mrb[0].mxu0
        %v1327 = vadd.f32 0.0, %v1326
        %v1328 = vpop.f32.mrb[0].mxu0
        %v1329 = vpop.f32.mrb[0].mxu0
        %v1330 = vadd.f32 0.0, %v1329
        %v1331 = vpop.f32.mrb[0].mxu0
        %1332 = vmatprep.mubr.bf16.mxu0 0
        %1333 = vmatmul.mubr.bf16.gmra.mrb[0].mxu0 %v1280
        %v1334 = vpop.f32.mrb[0].mxu0
        %v1335 = vadd.f32 0.0, %v1334
        %v1336 = vpop.f32.mrb[0].mxu0
        %v1337 = vpop.f32.mrb[0].mxu0
        %v1338 = vadd.f32 0.0, %v1337
        %v1339 = vpop.f32.mrb[0].mxu0
        %1340 = vmatprep.mubr.bf16.mxu0 0
        %1341 = vmatmul.mubr.bf16.gmra.mrb[0].mxu0 %v1283
        %v1342 = vpop.f32.mrb[0].mxu0
        %v1343 = vadd.f32 0.0, %v1342
        %v1344 = vpop.f32.mrb[0].mxu0
        %v1345 = vpop.f32.mrb[0].mxu0
        %v1346 = vadd.f32 0.0, %v1345
        %v1347 = vpop.f32.mrb[0].mxu0
        %1348 = vmatprep.mubr.bf16.mxu0 0
        %1349 = vmatmul.mubr.bf16.gmra.mrb[0].mxu0 %v1286
        %v1350 = vpop.f32.mrb[0].mxu0
        %v1351 = vadd.f32 0.0, %v1350
        %v1352 = vpop.f32.mrb[0].mxu0
        %v1353 = vpop.f32.mrb[0].mxu0
        %v1354 = vadd.f32 0.0, %v1353
        %v1355 = vpop.f32.mrb[0].mxu0
        %1356 = vdwg.mxu0
        %v1357 = vadd.f32 %v1267, %v1327
        %v1358 = vadd.f32 %v1268, %v1330
        %v1359 = vadd.f32 %v1269, %v1335
        %v1360 = vadd.f32 %v1270, %v1338
        %v1361 = vadd.f32 %v1271, %v1343
        %v1362 = vadd.f32 %v1272, %v1346
        %v1363 = vadd.f32 %v1273, %v1351
        %v1364 = vadd.f32 %v1274, %v1354
        %v1365 = vld [vmem:[%s5] sm:$0x1]
        %v1366 = vlaneseq
        %v1367 = vshrl.u32 %v1366, 7
        %v1368 = vsub.s32 0, %v1367
        %v1369 = vrot.slane %v1365, %v1368
        %v1370 = vadd.f32 %v1357, %v1369
        %v1371 = vadd.f32 %v1358, %v1369
        %v1372 = vadd.f32 %v1359, %v1369
        %v1373 = vadd.f32 %v1360, %v1369
        %v1374 = vadd.f32 %v1361, %v1369
        %v1375 = vadd.f32 %v1362, %v1369
        %v1376 = vadd.f32 %v1363, %v1369
        %v1377 = vadd.f32 %v1364, %v1369
        %v1378 = vmax.f32 %v1370, 0.0
        %v1379 = vmax.f32 %v1371, 0.0
        %v1380 = vmax.f32 %v1372, 0.0
        %v1381 = vmax.f32 %v1373, 0.0
        %v1382 = vmax.f32 %v1374, 0.0
        %v1383 = vmax.f32 %v1375, 0.0
        %v1384 = vmax.f32 %v1376, 0.0
        %v1385 = vmax.f32 %v1377, 0.0
        %v1386 = vpack.c.bf16 %v1379, %v1378
        %v1387 = vpack.c.bf16 %v1381, %v1380
        %v1388 = vpack.c.bf16 %v1383, %v1382
        %v1389 = vpack.c.bf16 %v1385, %v1384
        %v1390 = vld [vmem:[#allocation5] sm:$0xf]
        %v1391 = vld [vmem:[#allocation5 + $0x4] sm:$0xf]
        %v1392 = vld [vmem:[#allocation5 + $0x8] sm:$0xf]
        %v1393 = vld [vmem:[#allocation5 + $0xc] sm:$0xf]
        %v1394 = vld [vmem:[#allocation5 + $0x10] sm:$0xf]
        %v1395 = vld [vmem:[#allocation5 + $0x14] sm:$0xf]
        %v1396 = vld [vmem:[#allocation5 + $0x18] sm:$0xf]
        %v1397 = vld [vmem:[#allocation5 + $0x1c] sm:$0xf]
        %v1398 = vld [vmem:[#allocation5 + $0x20] sm:$0xf]
        %v1399 = vld [vmem:[#allocation5 + $0x24] sm:$0xf]
        %v1400 = vld [vmem:[#allocation5 + $0x28] sm:$0xf]
        %v1401 = vld [vmem:[#allocation5 + $0x2c] sm:$0xf]
        %v1402 = vld [vmem:[#allocation5 + $0x30] sm:$0xf]
        %v1403 = vld [vmem:[#allocation5 + $0x34] sm:$0xf]
        %v1404 = vld [vmem:[#allocation5 + $0x38] sm:$0xf]
        %v1405 = vld [vmem:[#allocation5 + $0x3c] sm:$0xf]
        %v1406 = vld [vmem:[%s7] sm:$0x1]
        %v1407 = vlaneseq
        %v1408 = vshrl.u32 %v1407, 7
        %v1409 = vsub.s32 0, %v1408
        %v1410 = vrot.slane %v1406, %v1409
        %v1427 = vunpack.c.l.b16 %v1390
        %v1428 = vunpack.c.l.b16 %v1391
        %v1429 = vunpack.c.l.b16 %v1392
        %v1430 = vunpack.c.l.b16 %v1393
        %v1431 = vunpack.c.l.b16 %v1394
        %v1432 = vunpack.c.l.b16 %v1395
        %v1433 = vunpack.c.l.b16 %v1396
        %v1434 = vunpack.c.l.b16 %v1397
        %v1435 = vunpack.c.l.b16 %v1398
        %v1436 = vunpack.c.l.b16 %v1399
        %v1437 = vunpack.c.l.b16 %v1400
        %v1438 = vunpack.c.l.b16 %v1401
        %v1439 = vunpack.c.l.b16 %v1402
        %v1440 = vunpack.c.l.b16 %v1403
        %v1441 = vunpack.c.l.b16 %v1404
        %v1442 = vunpack.c.l.b16 %v1405
        %v1443 = vpack.c.b16 %v1428, %v1427
        %v1444 = vpack.c.b16 %v1430, %v1429
        %v1445 = vpack.c.b16 %v1432, %v1431
        %v1446 = vpack.c.b16 %v1434, %v1433
        %v1447 = vpack.c.b16 %v1436, %v1435
        %v1448 = vpack.c.b16 %v1438, %v1437
        %v1449 = vpack.c.b16 %v1440, %v1439
        %v1450 = vpack.c.b16 %v1442, %v1441
        %1459 = vmatprep.subr.bf16.mxu0 0
        %1460 = vmatpush1.bf16.msra.mxu0 %v1443
        %1461 = vmatprep.subr.bf16.mxu0 0
        %1462 = vmatpush1.bf16.msra.mxu0 %v1444
        %1463 = vmatprep.subr.bf16.mxu0 0
        %1464 = vmatpush1.bf16.msra.mxu0 %v1445
        %1465 = vmatprep.subr.bf16.mxu0 0
        %1466 = vmatpush1.bf16.msra.mxu0 %v1446
        %1467 = vmatprep.subr.bf16.mxu0 0
        %1468 = vmatpush1.bf16.msra.mxu0 %v1447
        %1469 = vmatprep.subr.bf16.mxu0 0
        %1470 = vmatpush1.bf16.msra.mxu0 %v1448
        %1471 = vmatprep.subr.bf16.mxu0 0
        %1472 = vmatpush1.bf16.msra.mxu0 %v1449
        %1473 = vmatprep.subr.bf16.mxu0 0
        %1474 = vmatpush1.bf16.msra.mxu0 %v1450
        %1475 = vmatprep.subr.bf16.mxu0 0
        %1476 = vmatpush1.bf16.msra.mxu0 0
        %1477 = vmatprep.subr.bf16.mxu0 0
        %1478 = vmatpush1.bf16.msra.mxu0 0
        %1479 = vmatprep.subr.bf16.mxu0 0
        %1480 = vmatpush1.bf16.msra.mxu0 0
        %1481 = vmatprep.subr.bf16.mxu0 0
        %1482 = vmatpush1.bf16.msra.mxu0 0
        %1483 = vmatprep.subr.bf16.mxu0 0
        %1484 = vmatpush1.bf16.msra.mxu0 0
        %1485 = vmatprep.subr.bf16.mxu0 0
        %1486 = vmatpush1.bf16.msra.mxu0 0
        %1487 = vmatprep.subr.bf16.mxu0 0
        %1488 = vmatpush1.bf16.msra.mxu0 0
        %1489 = vmatprep.subr.bf16.mxu0 0
        %1490 = vmatpush1.bf16.msra.mxu0 0
        %1491 = vmatprep.mubr.bf16.mxu0 0
        %1492 = vmatmul.mubr.bf16.gmra.mrb[0].mxu0 %v1386
        %v1493 = vpop.f32.mrb[0].mxu0
        %v1494 = vadd.f32 %v1410, %v1493
        %v1495 = vpop.f32.mrb[0].mxu0
        %v1496 = vpop.f32.mrb[0].mxu0
        %v1497 = vadd.f32 %v1410, %v1496
        %v1498 = vpop.f32.mrb[0].mxu0
        %1499 = vmatprep.mubr.bf16.mxu0 0
        %1500 = vmatmul.mubr.bf16.gmra.mrb[0].mxu0 %v1387
        %v1501 = vpop.f32.mrb[0].mxu0
        %v1502 = vadd.f32 %v1410, %v1501
        %v1503 = vpop.f32.mrb[0].mxu0
        %v1504 = vpop.f32.mrb[0].mxu0
        %v1505 = vadd.f32 %v1410, %v1504
        %v1506 = vpop.f32.mrb[0].mxu0
        %1507 = vmatprep.mubr.bf16.mxu0 0
        %1508 = vmatmul.mubr.bf16.gmra.mrb[0].mxu0 %v1388
        %v1509 = vpop.f32.mrb[0].mxu0
        %v1510 = vadd.f32 %v1410, %v1509
        %v1511 = vpop.f32.mrb[0].mxu0
        %v1512 = vpop.f32.mrb[0].mxu0
        %v1513 = vadd.f32 %v1410, %v1512
        %v1514 = vpop.f32.mrb[0].mxu0
        %1515 = vmatprep.mubr.bf16.mxu0 0
        %1516 = vmatmul.mubr.bf16.gmra.mrb[0].mxu0 %v1389
        %v1517 = vpop.f32.mrb[0].mxu0
        %v1518 = vadd.f32 %v1410, %v1517
        %v1519 = vpop.f32.mrb[0].mxu0
        %v1520 = vpop.f32.mrb[0].mxu0
        %v1521 = vadd.f32 %v1410, %v1520
        %v1522 = vpop.f32.mrb[0].mxu0
        %1523 = vdwg.mxu0
        %v1524 = vpack.c.bf16 %v1497, %v1494
        %v1525 = vpack.c.bf16 %v1505, %v1502
        %v1526 = vpack.c.bf16 %v1513, %v1510
        %v1527 = vpack.c.bf16 %v1521, %v1518
        %s1528 = scalar_lea.vmem [#allocation2], 256
        %v1529 = vld [vmem:[%s1528] sm:$0xf]
        %v1530 = vld [vmem:[%s1528 + $0x4] sm:$0xf]
        %v1531 = vld [vmem:[%s1528 + $0x8] sm:$0xf]
        %v1532 = vld [vmem:[%s1528 + $0xc] sm:$0xf]
        %v1533 = vld [vmem:[%s1528 + $0x10] sm:$0xf]
        %v1534 = vld [vmem:[%s1528 + $0x14] sm:$0xf]
        %v1535 = vld [vmem:[%s1528 + $0x18] sm:$0xf]
        %v1536 = vld [vmem:[%s1528 + $0x1c] sm:$0xf]
        %v1537 = vld [vmem:[%s1528 + $0x20] sm:$0xf]
        %v1538 = vld [vmem:[%s1528 + $0x24] sm:$0xf]
        %v1539 = vld [vmem:[%s1528 + $0x28] sm:$0xf]
        %v1540 = vld [vmem:[%s1528 + $0x2c] sm:$0xf]
        %v1541 = vld [vmem:[%s1528 + $0x30] sm:$0xf]
        %v1542 = vld [vmem:[%s1528 + $0x34] sm:$0xf]
        %v1543 = vld [vmem:[%s1528 + $0x38] sm:$0xf]
        %v1544 = vld [vmem:[%s1528 + $0x3c] sm:$0xf]
        %v1545 = vld [vmem:[%s5 + $0x1] sm:$0x1]
        %v1546 = vlaneseq
        %v1547 = vshrl.u32 %v1546, 7
        %v1548 = vsub.s32 0, %v1547
        %v1549 = vrot.slane %v1545, %v1548
        %v1566 = vunpack.c.l.b16 %v1529
        %v1567 = vunpack.c.l.b16 %v1530
        %v1568 = vunpack.c.l.b16 %v1531
        %v1569 = vunpack.c.l.b16 %v1532
        %v1570 = vunpack.c.l.b16 %v1533
        %v1571 = vunpack.c.l.b16 %v1534
        %v1572 = vunpack.c.l.b16 %v1535
        %v1573 = vunpack.c.l.b16 %v1536
        %v1574 = vunpack.c.l.b16 %v1537
        %v1575 = vunpack.c.l.b16 %v1538
        %v1576 = vunpack.c.l.b16 %v1539
        %v1577 = vunpack.c.l.b16 %v1540
        %v1578 = vunpack.c.l.b16 %v1541
        %v1579 = vunpack.c.l.b16 %v1542
        %v1580 = vunpack.c.l.b16 %v1543
        %v1581 = vunpack.c.l.b16 %v1544
        %v1582 = vpack.c.b16 %v1567, %v1566
        %v1583 = vpack.c.b16 %v1569, %v1568
        %v1584 = vpack.c.b16 %v1571, %v1570
        %v1585 = vpack.c.b16 %v1573, %v1572
        %v1586 = vpack.c.b16 %v1575, %v1574
        %v1587 = vpack.c.b16 %v1577, %v1576
        %v1588 = vpack.c.b16 %v1579, %v1578
        %v1589 = vpack.c.b16 %v1581, %v1580
        %1598 = vmatprep.subr.bf16.mxu0 0
        %1599 = vmatpush1.bf16.msra.mxu0 %v1582
        %1600 = vmatprep.subr.bf16.mxu0 0
        %1601 = vmatpush1.bf16.msra.mxu0 %v1583
        %1602 = vmatprep.subr.bf16.mxu0 0
        %1603 = vmatpush1.bf16.msra.mxu0 %v1584
        %1604 = vmatprep.subr.bf16.mxu0 0
        %1605 = vmatpush1.bf16.msra.mxu0 %v1585
        %1606 = vmatprep.subr.bf16.mxu0 0
        %1607 = vmatpush1.bf16.msra.mxu0 %v1586
        %1608 = vmatprep.subr.bf16.mxu0 0
        %1609 = vmatpush1.bf16.msra.mxu0 %v1587
        %1610 = vmatprep.subr.bf16.mxu0 0
        %1611 = vmatpush1.bf16.msra.mxu0 %v1588
        %1612 = vmatprep.subr.bf16.mxu0 0
        %1613 = vmatpush1.bf16.msra.mxu0 %v1589
        %1614 = vmatprep.subr.bf16.mxu0 0
        %1615 = vmatpush1.bf16.msra.mxu0 0
        %1616 = vmatprep.subr.bf16.mxu0 0
        %1617 = vmatpush1.bf16.msra.mxu0 0
        %1618 = vmatprep.subr.bf16.mxu0 0
        %1619 = vmatpush1.bf16.msra.mxu0 0
        %1620 = vmatprep.subr.bf16.mxu0 0
        %1621 = vmatpush1.bf16.msra.mxu0 0
        %1622 = vmatprep.subr.bf16.mxu0 0
        %1623 = vmatpush1.bf16.msra.mxu0 0
        %1624 = vmatprep.subr.bf16.mxu0 0
        %1625 = vmatpush1.bf16.msra.mxu0 0
        %1626 = vmatprep.subr.bf16.mxu0 0
        %1627 = vmatpush1.bf16.msra.mxu0 0
        %1628 = vmatprep.subr.bf16.mxu0 0
        %1629 = vmatpush1.bf16.msra.mxu0 0
        %1630 = vmatprep.mubr.bf16.mxu0 0
        %1631 = vmatmul.mubr.bf16.gmra.mrb[0].mxu0 %v1524
        %v1632 = vpop.f32.mrb[0].mxu0
        %v1633 = vadd.f32 %v1549, %v1632
        %v1634 = vpop.f32.mrb[0].mxu0
        %v1635 = vpop.f32.mrb[0].mxu0
        %v1636 = vadd.f32 %v1549, %v1635
        %v1637 = vpop.f32.mrb[0].mxu0
        %1638 = vmatprep.mubr.bf16.mxu0 0
        %1639 = vmatmul.mubr.bf16.gmra.mrb[0].mxu0 %v1525
        %v1640 = vpop.f32.mrb[0].mxu0
        %v1641 = vadd.f32 %v1549, %v1640
        %v1642 = vpop.f32.mrb[0].mxu0
        %v1643 = vpop.f32.mrb[0].mxu0
        %v1644 = vadd.f32 %v1549, %v1643
        %v1645 = vpop.f32.mrb[0].mxu0
        %1646 = vmatprep.mubr.bf16.mxu0 0
        %1647 = vmatmul.mubr.bf16.gmra.mrb[0].mxu0 %v1526
        %v1648 = vpop.f32.mrb[0].mxu0
        %v1649 = vadd.f32 %v1549, %v1648
        %v1650 = vpop.f32.mrb[0].mxu0
        %v1651 = vpop.f32.mrb[0].mxu0
        %v1652 = vadd.f32 %v1549, %v1651
        %v1653 = vpop.f32.mrb[0].mxu0
        %1654 = vmatprep.mubr.bf16.mxu0 0
        %1655 = vmatmul.mubr.bf16.gmra.mrb[0].mxu0 %v1527
        %v1656 = vpop.f32.mrb[0].mxu0
        %v1657 = vadd.f32 %v1549, %v1656
        %v1658 = vpop.f32.mrb[0].mxu0
        %v1659 = vpop.f32.mrb[0].mxu0
        %v1660 = vadd.f32 %v1549, %v1659
        %v1661 = vpop.f32.mrb[0].mxu0
        %1662 = vdwg.mxu0
        %v1663 = vmax.f32 %v1633, 0.0
        %v1664 = vmax.f32 %v1636, 0.0
        %v1665 = vmax.f32 %v1641, 0.0
        %v1666 = vmax.f32 %v1644, 0.0
        %v1667 = vmax.f32 %v1649, 0.0
        %v1668 = vmax.f32 %v1652, 0.0
        %v1669 = vmax.f32 %v1657, 0.0
        %v1670 = vmax.f32 %v1660, 0.0
        %v1671 = vpack.c.bf16 %v1664, %v1663
        %v1672 = vpack.c.bf16 %v1666, %v1665
        %v1673 = vpack.c.bf16 %v1668, %v1667
        %v1674 = vpack.c.bf16 %v1670, %v1669
        %s1675 = scalar_lea.vmem [#allocation5], 64
        %v1676 = vld [vmem:[%s1675] sm:$0xf]
        %v1677 = vld [vmem:[%s1675 + $0x4] sm:$0xf]
        %v1678 = vld [vmem:[%s1675 + $0x8] sm:$0xf]
        %v1679 = vld [vmem:[%s1675 + $0xc] sm:$0xf]
        %v1680 = vld [vmem:[%s1675 + $0x10] sm:$0xf]
        %v1681 = vld [vmem:[%s1675 + $0x14] sm:$0xf]
        %v1682 = vld [vmem:[%s1675 + $0x18] sm:$0xf]
        %v1683 = vld [vmem:[%s1675 + $0x1c] sm:$0xf]
        %v1684 = vld [vmem:[%s1675 + $0x20] sm:$0xf]
        %v1685 = vld [vmem:[%s1675 + $0x24] sm:$0xf]
        %v1686 = vld [vmem:[%s1675 + $0x28] sm:$0xf]
        %v1687 = vld [vmem:[%s1675 + $0x2c] sm:$0xf]
        %v1688 = vld [vmem:[%s1675 + $0x30] sm:$0xf]
        %v1689 = vld [vmem:[%s1675 + $0x34] sm:$0xf]
        %v1690 = vld [vmem:[%s1675 + $0x38] sm:$0xf]
        %v1691 = vld [vmem:[%s1675 + $0x3c] sm:$0xf]
        %v1692 = vld [vmem:[%s7 + $0x1] sm:$0x1]
        %v1693 = vlaneseq
        %v1694 = vshrl.u32 %v1693, 7
        %v1695 = vsub.s32 0, %v1694
        %v1696 = vrot.slane %v1692, %v1695
        %v1713 = vunpack.c.l.b16 %v1676
        %v1714 = vunpack.c.l.b16 %v1677
        %v1715 = vunpack.c.l.b16 %v1678
        %v1716 = vunpack.c.l.b16 %v1679
        %v1717 = vunpack.c.l.b16 %v1680
        %v1718 = vunpack.c.l.b16 %v1681
        %v1719 = vunpack.c.l.b16 %v1682
        %v1720 = vunpack.c.l.b16 %v1683
        %v1721 = vunpack.c.l.b16 %v1684
        %v1722 = vunpack.c.l.b16 %v1685
        %v1723 = vunpack.c.l.b16 %v1686
        %v1724 = vunpack.c.l.b16 %v1687
        %v1725 = vunpack.c.l.b16 %v1688
        %v1726 = vunpack.c.l.b16 %v1689
        %v1727 = vunpack.c.l.b16 %v1690
        %v1728 = vunpack.c.l.b16 %v1691
        %v1729 = vpack.c.b16 %v1714, %v1713
        %v1730 = vpack.c.b16 %v1716, %v1715
        %v1731 = vpack.c.b16 %v1718, %v1717
        %v1732 = vpack.c.b16 %v1720, %v1719
        %v1733 = vpack.c.b16 %v1722, %v1721
        %v1734 = vpack.c.b16 %v1724, %v1723
        %v1735 = vpack.c.b16 %v1726, %v1725
        %v1736 = vpack.c.b16 %v1728, %v1727
        %1745 = vmatprep.subr.bf16.mxu0 0
        %1746 = vmatpush1.bf16.msra.mxu0 %v1729
        %1747 = vmatprep.subr.bf16.mxu0 0
        %1748 = vmatpush1.bf16.msra.mxu0 %v1730
        %1749 = vmatprep.subr.bf16.mxu0 0
        %1750 = vmatpush1.bf16.msra.mxu0 %v1731
        %1751 = vmatprep.subr.bf16.mxu0 0
        %1752 = vmatpush1.bf16.msra.mxu0 %v1732
        %1753 = vmatprep.subr.bf16.mxu0 0
        %1754 = vmatpush1.bf16.msra.mxu0 %v1733
        %1755 = vmatprep.subr.bf16.mxu0 0
        %1756 = vmatpush1.bf16.msra.mxu0 %v1734
        %1757 = vmatprep.subr.bf16.mxu0 0
        %1758 = vmatpush1.bf16.msra.mxu0 %v1735
        %1759 = vmatprep.subr.bf16.mxu0 0
        %1760 = vmatpush1.bf16.msra.mxu0 %v1736
        %1761 = vmatprep.subr.bf16.mxu0 0
        %1762 = vmatpush1.bf16.msra.mxu0 0
        %1763 = vmatprep.subr.bf16.mxu0 0
        %1764 = vmatpush1.bf16.msra.mxu0 0
        %1765 = vmatprep.subr.bf16.mxu0 0
        %1766 = vmatpush1.bf16.msra.mxu0 0
        %1767 = vmatprep.subr.bf16.mxu0 0
        %1768 = vmatpush1.bf16.msra.mxu0 0
        %1769 = vmatprep.subr.bf16.mxu0 0
        %1770 = vmatpush1.bf16.msra.mxu0 0
        %1771 = vmatprep.subr.bf16.mxu0 0
        %1772 = vmatpush1.bf16.msra.mxu0 0
        %1773 = vmatprep.subr.bf16.mxu0 0
        %1774 = vmatpush1.bf16.msra.mxu0 0
        %1775 = vmatprep.subr.bf16.mxu0 0
        %1776 = vmatpush1.bf16.msra.mxu0 0
        %1777 = vmatprep.mubr.bf16.mxu0 0
        %1778 = vmatmul.mubr.bf16.gmra.mrb[0].mxu0 %v1671
        %v1779 = vpop.f32.mrb[0].mxu0
        %v1780 = vadd.f32 %v1696, %v1779
        %v1781 = vpop.f32.mrb[0].mxu0
        %v1782 = vpop.f32.mrb[0].mxu0
        %v1783 = vadd.f32 %v1696, %v1782
        %v1784 = vpop.f32.mrb[0].mxu0
        %1785 = vmatprep.mubr.bf16.mxu0 0
        %1786 = vmatmul.mubr.bf16.gmra.mrb[0].mxu0 %v1672
        %v1787 = vpop.f32.mrb[0].mxu0
        %v1788 = vadd.f32 %v1696, %v1787
        %v1789 = vpop.f32.mrb[0].mxu0
        %v1790 = vpop.f32.mrb[0].mxu0
        %v1791 = vadd.f32 %v1696, %v1790
        %v1792 = vpop.f32.mrb[0].mxu0
        %1793 = vmatprep.mubr.bf16.mxu0 0
        %1794 = vmatmul.mubr.bf16.gmra.mrb[0].mxu0 %v1673
        %v1795 = vpop.f32.mrb[0].mxu0
        %v1796 = vadd.f32 %v1696, %v1795
        %v1797 = vpop.f32.mrb[0].mxu0
        %v1798 = vpop.f32.mrb[0].mxu0
        %v1799 = vadd.f32 %v1696, %v1798
        %v1800 = vpop.f32.mrb[0].mxu0
        %1801 = vmatprep.mubr.bf16.mxu0 0
        %1802 = vmatmul.mubr.bf16.gmra.mrb[0].mxu0 %v1674
        %v1803 = vpop.f32.mrb[0].mxu0
        %v1804 = vadd.f32 %v1696, %v1803
        %v1805 = vpop.f32.mrb[0].mxu0
        %v1806 = vpop.f32.mrb[0].mxu0
        %v1807 = vadd.f32 %v1696, %v1806
        %v1808 = vpop.f32.mrb[0].mxu0
        %1809 = vdwg.mxu0
        %v1810 = vpack.c.bf16 %v1783, %v1780
        %v1811 = vpack.c.bf16 %v1791, %v1788
        %v1812 = vpack.c.bf16 %v1799, %v1796
        %v1813 = vpack.c.bf16 %v1807, %v1804
        %s1814 = scalar_lea.vmem [#allocation2], 384
        %v1815 = vld [vmem:[%s1814] sm:$0xf]
        %v1816 = vld [vmem:[%s1814 + $0x4] sm:$0xf]
        %v1817 = vld [vmem:[%s1814 + $0x8] sm:$0xf]
        %v1818 = vld [vmem:[%s1814 + $0xc] sm:$0xf]
        %v1819 = vld [vmem:[%s1814 + $0x10] sm:$0xf]
        %v1820 = vld [vmem:[%s1814 + $0x14] sm:$0xf]
        %v1821 = vld [vmem:[%s1814 + $0x18] sm:$0xf]
        %v1822 = vld [vmem:[%s1814 + $0x1c] sm:$0xf]
        %v1823 = vld [vmem:[%s1814 + $0x20] sm:$0xf]
        %v1824 = vld [vmem:[%s1814 + $0x24] sm:$0xf]
        %v1825 = vld [vmem:[%s1814 + $0x28] sm:$0xf]
        %v1826 = vld [vmem:[%s1814 + $0x2c] sm:$0xf]
        %v1827 = vld [vmem:[%s1814 + $0x30] sm:$0xf]
        %v1828 = vld [vmem:[%s1814 + $0x34] sm:$0xf]
        %v1829 = vld [vmem:[%s1814 + $0x38] sm:$0xf]
        %v1830 = vld [vmem:[%s1814 + $0x3c] sm:$0xf]
        %v1847 = vunpack.c.l.b16 %v1815
        %v1848 = vunpack.c.l.b16 %v1816
        %v1849 = vunpack.c.l.b16 %v1817
        %v1850 = vunpack.c.l.b16 %v1818
        %v1851 = vunpack.c.l.b16 %v1819
        %v1852 = vunpack.c.l.b16 %v1820
        %v1853 = vunpack.c.l.b16 %v1821
        %v1854 = vunpack.c.l.b16 %v1822
        %v1855 = vunpack.c.l.b16 %v1823
        %v1856 = vunpack.c.l.b16 %v1824
        %v1857 = vunpack.c.l.b16 %v1825
        %v1858 = vunpack.c.l.b16 %v1826
        %v1859 = vunpack.c.l.b16 %v1827
        %v1860 = vunpack.c.l.b16 %v1828
        %v1861 = vunpack.c.l.b16 %v1829
        %v1862 = vunpack.c.l.b16 %v1830
        %v1863 = vpack.c.b16 %v1848, %v1847
        %v1864 = vpack.c.b16 %v1850, %v1849
        %v1865 = vpack.c.b16 %v1852, %v1851
        %v1866 = vpack.c.b16 %v1854, %v1853
        %v1867 = vpack.c.b16 %v1856, %v1855
        %v1868 = vpack.c.b16 %v1858, %v1857
        %v1869 = vpack.c.b16 %v1860, %v1859
        %v1870 = vpack.c.b16 %v1862, %v1861
        %1879 = vmatprep.subr.bf16.mxu0 0
        %1880 = vmatpush1.bf16.msra.mxu0 %v1863
        %1881 = vmatprep.subr.bf16.mxu0 0
        %1882 = vmatpush1.bf16.msra.mxu0 %v1864
        %1883 = vmatprep.subr.bf16.mxu0 0
        %1884 = vmatpush1.bf16.msra.mxu0 %v1865
        %1885 = vmatprep.subr.bf16.mxu0 0
        %1886 = vmatpush1.bf16.msra.mxu0 %v1866
        %1887 = vmatprep.subr.bf16.mxu0 0
        %1888 = vmatpush1.bf16.msra.mxu0 %v1867
        %1889 = vmatprep.subr.bf16.mxu0 0
        %1890 = vmatpush1.bf16.msra.mxu0 %v1868
        %1891 = vmatprep.subr.bf16.mxu0 0
        %1892 = vmatpush1.bf16.msra.mxu0 %v1869
        %1893 = vmatprep.subr.bf16.mxu0 0
        %1894 = vmatpush1.bf16.msra.mxu0 %v1870
        %1895 = vmatprep.subr.bf16.mxu0 0
        %1896 = vmatpush1.bf16.msra.mxu0 0
        %1897 = vmatprep.subr.bf16.mxu0 0
        %1898 = vmatpush1.bf16.msra.mxu0 0
        %1899 = vmatprep.subr.bf16.mxu0 0
        %1900 = vmatpush1.bf16.msra.mxu0 0
        %1901 = vmatprep.subr.bf16.mxu0 0
        %1902 = vmatpush1.bf16.msra.mxu0 0
        %1903 = vmatprep.subr.bf16.mxu0 0
        %1904 = vmatpush1.bf16.msra.mxu0 0
        %1905 = vmatprep.subr.bf16.mxu0 0
        %1906 = vmatpush1.bf16.msra.mxu0 0
        %1907 = vmatprep.subr.bf16.mxu0 0
        %1908 = vmatpush1.bf16.msra.mxu0 0
        %1909 = vmatprep.subr.bf16.mxu0 0
        %1910 = vmatpush1.bf16.msra.mxu0 0
        %1911 = vmatprep.mubr.bf16.mxu0 0
        %1912 = vmatmul.mubr.bf16.gmra.mrb[0].mxu0 %v1810
        %v1913 = vpop.f32.mrb[0].mxu0
        %v1914 = vadd.f32 0.0, %v1913
        %v1915 = vpop.f32.mrb[0].mxu0
        %v1916 = vpop.f32.mrb[0].mxu0
        %v1917 = vadd.f32 0.0, %v1916
        %v1918 = vpop.f32.mrb[0].mxu0
        %1919 = vmatprep.mubr.bf16.mxu0 0
        %1920 = vmatmul.mubr.bf16.gmra.mrb[0].mxu0 %v1811
        %v1921 = vpop.f32.mrb[0].mxu0
        %v1922 = vadd.f32 0.0, %v1921
        %v1923 = vpop.f32.mrb[0].mxu0
        %v1924 = vpop.f32.mrb[0].mxu0
        %v1925 = vadd.f32 0.0, %v1924
        %v1926 = vpop.f32.mrb[0].mxu0
        %1927 = vmatprep.mubr.bf16.mxu0 0
        %1928 = vmatmul.mubr.bf16.gmra.mrb[0].mxu0 %v1812
        %v1929 = vpop.f32.mrb[0].mxu0
        %v1930 = vadd.f32 0.0, %v1929
        %v1931 = vpop.f32.mrb[0].mxu0
        %v1932 = vpop.f32.mrb[0].mxu0
        %v1933 = vadd.f32 0.0, %v1932
        %v1934 = vpop.f32.mrb[0].mxu0
        %1935 = vmatprep.mubr.bf16.mxu0 0
        %1936 = vmatmul.mubr.bf16.gmra.mrb[0].mxu0 %v1813
        %v1937 = vpop.f32.mrb[0].mxu0
        %v1938 = vadd.f32 0.0, %v1937
        %v1939 = vpop.f32.mrb[0].mxu0
        %v1940 = vpop.f32.mrb[0].mxu0
        %v1941 = vadd.f32 0.0, %v1940
        %v1942 = vpop.f32.mrb[0].mxu0
        %1943 = vdwg.mxu0
        %v1944 = vpack.c.bf16 %v1917, %v1914
        %v1945 = vpack.c.bf16 %v1925, %v1922
        %v1946 = vpack.c.bf16 %v1933, %v1930
        %v1947 = vpack.c.bf16 %v1941, %v1938
        %s1948 = scalar_lea.vmem [#allocation2], 448
        %v1949 = vld [vmem:[%s1948] sm:$0xf]
        %v1950 = vld [vmem:[%s1948 + $0x4] sm:$0xf]
        %v1951 = vld [vmem:[%s1948 + $0x8] sm:$0xf]
        %v1952 = vld [vmem:[%s1948 + $0xc] sm:$0xf]
        %v1953 = vld [vmem:[%s1948 + $0x10] sm:$0xf]
        %v1954 = vld [vmem:[%s1948 + $0x14] sm:$0xf]
        %v1955 = vld [vmem:[%s1948 + $0x18] sm:$0xf]
        %v1956 = vld [vmem:[%s1948 + $0x1c] sm:$0xf]
        %v1957 = vld [vmem:[%s1948 + $0x20] sm:$0xf]
        %v1958 = vld [vmem:[%s1948 + $0x24] sm:$0xf]
        %v1959 = vld [vmem:[%s1948 + $0x28] sm:$0xf]
        %v1960 = vld [vmem:[%s1948 + $0x2c] sm:$0xf]
        %v1961 = vld [vmem:[%s1948 + $0x30] sm:$0xf]
        %v1962 = vld [vmem:[%s1948 + $0x34] sm:$0xf]
        %v1963 = vld [vmem:[%s1948 + $0x38] sm:$0xf]
        %v1964 = vld [vmem:[%s1948 + $0x3c] sm:$0xf]
        %v1981 = vunpack.c.l.b16 %v1949
        %v1982 = vunpack.c.l.b16 %v1950
        %v1983 = vunpack.c.l.b16 %v1951
        %v1984 = vunpack.c.l.b16 %v1952
        %v1985 = vunpack.c.l.b16 %v1953
        %v1986 = vunpack.c.l.b16 %v1954
        %v1987 = vunpack.c.l.b16 %v1955
        %v1988 = vunpack.c.l.b16 %v1956
        %v1989 = vunpack.c.l.b16 %v1957
        %v1990 = vunpack.c.l.b16 %v1958
        %v1991 = vunpack.c.l.b16 %v1959
        %v1992 = vunpack.c.l.b16 %v1960
        %v1993 = vunpack.c.l.b16 %v1961
        %v1994 = vunpack.c.l.b16 %v1962
        %v1995 = vunpack.c.l.b16 %v1963
        %v1996 = vunpack.c.l.b16 %v1964
        %v1997 = vpack.c.b16 %v1982, %v1981
        %v1998 = vpack.c.b16 %v1984, %v1983
        %v1999 = vpack.c.b16 %v1986, %v1985
        %v2000 = vpack.c.b16 %v1988, %v1987
        %v2001 = vpack.c.b16 %v1990, %v1989
        %v2002 = vpack.c.b16 %v1992, %v1991
        %v2003 = vpack.c.b16 %v1994, %v1993
        %v2004 = vpack.c.b16 %v1996, %v1995
        %2013 = vmatprep.subr.bf16.mxu0 0
        %2014 = vmatpush1.bf16.msra.mxu0 %v1997
        %2015 = vmatprep.subr.bf16.mxu0 0
        %2016 = vmatpush1.bf16.msra.mxu0 %v1998
        %2017 = vmatprep.subr.bf16.mxu0 0
        %2018 = vmatpush1.bf16.msra.mxu0 %v1999
        %2019 = vmatprep.subr.bf16.mxu0 0
        %2020 = vmatpush1.bf16.msra.mxu0 %v2000
        %2021 = vmatprep.subr.bf16.mxu0 0
        %2022 = vmatpush1.bf16.msra.mxu0 %v2001
        %2023 = vmatprep.subr.bf16.mxu0 0
        %2024 = vmatpush1.bf16.msra.mxu0 %v2002
        %2025 = vmatprep.subr.bf16.mxu0 0
        %2026 = vmatpush1.bf16.msra.mxu0 %v2003
        %2027 = vmatprep.subr.bf16.mxu0 0
        %2028 = vmatpush1.bf16.msra.mxu0 %v2004
        %2029 = vmatprep.subr.bf16.mxu0 0
        %2030 = vmatpush1.bf16.msra.mxu0 0
        %2031 = vmatprep.subr.bf16.mxu0 0
        %2032 = vmatpush1.bf16.msra.mxu0 0
        %2033 = vmatprep.subr.bf16.mxu0 0
        %2034 = vmatpush1.bf16.msra.mxu0 0
        %2035 = vmatprep.subr.bf16.mxu0 0
        %2036 = vmatpush1.bf16.msra.mxu0 0
        %2037 = vmatprep.subr.bf16.mxu0 0
        %2038 = vmatpush1.bf16.msra.mxu0 0
        %2039 = vmatprep.subr.bf16.mxu0 0
        %2040 = vmatpush1.bf16.msra.mxu0 0
        %2041 = vmatprep.subr.bf16.mxu0 0
        %2042 = vmatpush1.bf16.msra.mxu0 0
        %2043 = vmatprep.subr.bf16.mxu0 0
        %2044 = vmatpush1.bf16.msra.mxu0 0
        %2045 = vmatprep.mubr.bf16.mxu0 0
        %2046 = vmatmul.mubr.bf16.gmra.mrb[0].mxu0 %v608
        %v2047 = vpop.f32.mrb[0].mxu0
        %v2048 = vadd.f32 0.0, %v2047
        %v2049 = vpop.f32.mrb[0].mxu0
        %v2050 = vpop.f32.mrb[0].mxu0
        %v2051 = vpop.f32.mrb[0].mxu0
        %2052 = vdwg.mxu0
        %v2053 = vpack.c.bf16 %v2048, %v2048
        %s2054 = scalar_lea.vmem [#allocation2], 320
        %v2055 = vld [vmem:[%s2054] sm:$0xf]
        %v2056 = vld [vmem:[%s2054 + $0x4] sm:$0xf]
        %v2057 = vld [vmem:[%s2054 + $0x8] sm:$0xf]
        %v2058 = vld [vmem:[%s2054 + $0xc] sm:$0xf]
        %v2059 = vld [vmem:[%s2054 + $0x10] sm:$0xf]
        %v2060 = vld [vmem:[%s2054 + $0x14] sm:$0xf]
        %v2061 = vld [vmem:[%s2054 + $0x18] sm:$0xf]
        %v2062 = vld [vmem:[%s2054 + $0x1c] sm:$0xf]
        %v2063 = vld [vmem:[%s2054 + $0x20] sm:$0xf]
        %v2064 = vld [vmem:[%s2054 + $0x24] sm:$0xf]
        %v2065 = vld [vmem:[%s2054 + $0x28] sm:$0xf]
        %v2066 = vld [vmem:[%s2054 + $0x2c] sm:$0xf]
        %v2067 = vld [vmem:[%s2054 + $0x30] sm:$0xf]
        %v2068 = vld [vmem:[%s2054 + $0x34] sm:$0xf]
        %v2069 = vld [vmem:[%s2054 + $0x38] sm:$0xf]
        %v2070 = vld [vmem:[%s2054 + $0x3c] sm:$0xf]
        %2071 = vxpose.xlu0.c.b16.start [1/8] %v502, 128
        %2072 = vxpose.xlu0.c.b16.cont [2/8] %v503, 128
        %2073 = vxpose.xlu0.c.b16.cont [3/8] %v504, 128
        %2074 = vxpose.xlu0.c.b16.cont [4/8] %v505, 128
        %2075 = vxpose.xlu0.c.b16.cont [5/8] 0, 128
        %2076 = vxpose.xlu0.c.b16.cont [6/8] 0, 128
        %2077 = vxpose.xlu0.c.b16.cont [7/8] 0, 128
        %2078 = vxpose.xlu0.c.b16.end [8/8] 0, 128
        %v2079 = vpop.trf.xlu0
        %v2080 = vpop.trf.xlu0
        %v2081 = vpop.trf.xlu0
        %v2082 = vpop.trf.xlu0
        %v2083 = vpop.trf.xlu0
        %v2084 = vpop.trf.xlu0
        %v2085 = vpop.trf.xlu0
        %v2086 = vpop.trf.xlu0
        %vm2087 = vcmask 523264
        %v2089 = vsel %vm2087, %v2079, 0
        %v2092 = vsel %vm2087, %v2080, 0
        %2094 = vmatprep.subr.bf16.mxu0 0
        %2095 = vmatpush1.bf16.msra.mxu0 %v1944
        %2096 = vmatprep.subr.bf16.mxu0 0
        %2097 = vmatpush1.bf16.msra.mxu0 %v1945
        %2098 = vmatprep.subr.bf16.mxu0 0
        %2099 = vmatpush1.bf16.msra.mxu0 %v1946
        %2100 = vmatprep.subr.bf16.mxu0 0
        %2101 = vmatpush1.bf16.msra.mxu0 %v1947
        %2102 = vmatprep.subr.bf16.mxu0 0
        %2103 = vmatpush1.bf16.msra.mxu0 0
        %2104 = vmatprep.subr.bf16.mxu0 0
        %2105 = vmatpush1.bf16.msra.mxu0 0
        %2106 = vmatprep.subr.bf16.mxu0 0
        %2107 = vmatpush1.bf16.msra.mxu0 0
        %2108 = vmatprep.subr.bf16.mxu0 0
        %2109 = vmatpush1.bf16.msra.mxu0 0
        %2110 = vmatprep.subr.bf16.mxu0 0
        %2111 = vmatpush1.bf16.msra.mxu0 0
        %2112 = vmatprep.subr.bf16.mxu0 0
        %2113 = vmatpush1.bf16.msra.mxu0 0
        %2114 = vmatprep.subr.bf16.mxu0 0
        %2115 = vmatpush1.bf16.msra.mxu0 0
        %2116 = vmatprep.subr.bf16.mxu0 0
        %2117 = vmatpush1.bf16.msra.mxu0 0
        %2118 = vmatprep.subr.bf16.mxu0 0
        %2119 = vmatpush1.bf16.msra.mxu0 0
        %2120 = vmatprep.subr.bf16.mxu0 0
        %2121 = vmatpush1.bf16.msra.mxu0 0
        %2122 = vmatprep.subr.bf16.mxu0 0
        %2123 = vmatpush1.bf16.msra.mxu0 0
        %2124 = vmatprep.subr.bf16.mxu0 0
        %2125 = vmatpush1.bf16.msra.mxu0 0
        %2126 = vmatprep.mubr.bf16.mxu0 0
        %2127 = vmatmul.mubr.bf16.gmra.mrb[0].mxu0 %v2089
        %v2128 = vpop.f32.mrb[0].mxu0
        %v2129 = vadd.f32 0.0, %v2128
        %v2130 = vpop.f32.mrb[0].mxu0
        %v2131 = vpop.f32.mrb[0].mxu0
        %v2132 = vadd.f32 0.0, %v2131
        %v2133 = vpop.f32.mrb[0].mxu0
        %2134 = vmatprep.mubr.bf16.mxu0 0
        %2135 = vmatmul.mubr.bf16.gmra.mrb[0].mxu0 %v2092
        %v2136 = vpop.f32.mrb[0].mxu0
        %v2137 = vadd.f32 0.0, %v2136
        %v2138 = vpop.f32.mrb[0].mxu0
        %v2139 = vpop.f32.mrb[0].mxu0
        %v2140 = vadd.f32 0.0, %v2139
        %v2141 = vpop.f32.mrb[0].mxu0
        %2142 = vdwg.mxu0
        %v2159 = vunpack.c.l.b16 %v2055
        %v2160 = vunpack.c.l.b16 %v2056
        %v2161 = vunpack.c.l.b16 %v2057
        %v2162 = vunpack.c.l.b16 %v2058
        %v2163 = vunpack.c.l.b16 %v2059
        %v2164 = vunpack.c.l.b16 %v2060
        %v2165 = vunpack.c.l.b16 %v2061
        %v2166 = vunpack.c.l.b16 %v2062
        %v2167 = vunpack.c.l.b16 %v2063
        %v2168 = vunpack.c.l.b16 %v2064
        %v2169 = vunpack.c.l.b16 %v2065
        %v2170 = vunpack.c.l.b16 %v2066
        %v2171 = vunpack.c.l.b16 %v2067
        %v2172 = vunpack.c.l.b16 %v2068
        %v2173 = vunpack.c.l.b16 %v2069
        %v2174 = vunpack.c.l.b16 %v2070
        %v2175 = vpack.c.b16 %v2160, %v2159
        %v2176 = vpack.c.b16 %v2162, %v2161
        %v2177 = vpack.c.b16 %v2164, %v2163
        %v2178 = vpack.c.b16 %v2166, %v2165
        %v2179 = vpack.c.b16 %v2168, %v2167
        %v2180 = vpack.c.b16 %v2170, %v2169
        %v2181 = vpack.c.b16 %v2172, %v2171
        %v2182 = vpack.c.b16 %v2174, %v2173
        %2191 = vmatprep.subr.bf16.mxu0 0
        %2192 = vmatpush1.bf16.msra.mxu0 %v2175
        %2193 = vmatprep.subr.bf16.mxu0 0
        %2194 = vmatpush1.bf16.msra.mxu0 %v2176
        %2195 = vmatprep.subr.bf16.mxu0 0
        %2196 = vmatpush1.bf16.msra.mxu0 %v2177
        %2197 = vmatprep.subr.bf16.mxu0 0
        %2198 = vmatpush1.bf16.msra.mxu0 %v2178
        %2199 = vmatprep.subr.bf16.mxu0 0
        %2200 = vmatpush1.bf16.msra.mxu0 %v2179
        %2201 = vmatprep.subr.bf16.mxu0 0
        %2202 = vmatpush1.bf16.msra.mxu0 %v2180
        %2203 = vmatprep.subr.bf16.mxu0 0
        %2204 = vmatpush1.bf16.msra.mxu0 %v2181
        %2205 = vmatprep.subr.bf16.mxu0 0
        %2206 = vmatpush1.bf16.msra.mxu0 %v2182
        %2207 = vmatprep.subr.bf16.mxu0 0
        %2208 = vmatpush1.bf16.msra.mxu0 0
        %2209 = vmatprep.subr.bf16.mxu0 0
        %2210 = vmatpush1.bf16.msra.mxu0 0
        %2211 = vmatprep.subr.bf16.mxu0 0
        %2212 = vmatpush1.bf16.msra.mxu0 0
        %2213 = vmatprep.subr.bf16.mxu0 0
        %2214 = vmatpush1.bf16.msra.mxu0 0
        %2215 = vmatprep.subr.bf16.mxu0 0
        %2216 = vmatpush1.bf16.msra.mxu0 0
        %2217 = vmatprep.subr.bf16.mxu0 0
        %2218 = vmatpush1.bf16.msra.mxu0 0
        %2219 = vmatprep.subr.bf16.mxu0 0
        %2220 = vmatpush1.bf16.msra.mxu0 0
        %2221 = vmatprep.subr.bf16.mxu0 0
        %2222 = vmatpush1.bf16.msra.mxu0 0
        %2223 = vmatprep.mubr.bf16.mxu0 0
        %2224 = vmatmul.mubr.bf16.gmra.mrb[0].mxu0 %v633
        %v2225 = vpop.f32.mrb[0].mxu0
        %v2226 = vadd.f32 %v2129, %v2225
        %v2227 = vpop.f32.mrb[0].mxu0
        %v2228 = vpop.f32.mrb[0].mxu0
        %v2229 = vadd.f32 %v2132, %v2228
        %v2230 = vpop.f32.mrb[0].mxu0
        %2231 = vmatprep.mubr.bf16.mxu0 0
        %2232 = vmatmul.mubr.bf16.gmra.mrb[0].mxu0 %v634
        %v2233 = vpop.f32.mrb[0].mxu0
        %v2234 = vadd.f32 %v2137, %v2233
        %v2235 = vpop.f32.mrb[0].mxu0
        %v2236 = vpop.f32.mrb[0].mxu0
        %v2237 = vadd.f32 %v2140, %v2236
        %v2238 = vpop.f32.mrb[0].mxu0
        %2239 = vdwg.mxu0
        %v2241 = vsel %vm1275, %v593, 0
        %v2244 = vsel %vm1275, %v594, 0
        %v2247 = vsel %vm1288, %v2053, 0
        %2249 = vmatprep.subr.bf16.mxu0 0
        %2250 = vmatpush1.bf16.msra.mxu0 %v2247
        %2251 = vmatprep.subr.bf16.mxu0 0
        %2252 = vmatpush1.bf16.msra.mxu0 0
        %2253 = vmatprep.subr.bf16.mxu0 0
        %2254 = vmatpush1.bf16.msra.mxu0 0
        %2255 = vmatprep.subr.bf16.mxu0 0
        %2256 = vmatpush1.bf16.msra.mxu0 0
        %2257 = vmatprep.subr.bf16.mxu0 0
        %2258 = vmatpush1.bf16.msra.mxu0 0
        %2259 = vmatprep.subr.bf16.mxu0 0
        %2260 = vmatpush1.bf16.msra.mxu0 0
        %2261 = vmatprep.subr.bf16.mxu0 0
        %2262 = vmatpush1.bf16.msra.mxu0 0
        %2263 = vmatprep.subr.bf16.mxu0 0
        %2264 = vmatpush1.bf16.msra.mxu0 0
        %2265 = vmatprep.subr.bf16.mxu0 0
        %2266 = vmatpush1.bf16.msra.mxu0 0
        %2267 = vmatprep.subr.bf16.mxu0 0
        %2268 = vmatpush1.bf16.msra.mxu0 0
        %2269 = vmatprep.subr.bf16.mxu0 0
        %2270 = vmatpush1.bf16.msra.mxu0 0
        %2271 = vmatprep.subr.bf16.mxu0 0
        %2272 = vmatpush1.bf16.msra.mxu0 0
        %2273 = vmatprep.subr.bf16.mxu0 0
        %2274 = vmatpush1.bf16.msra.mxu0 0
        %2275 = vmatprep.subr.bf16.mxu0 0
        %2276 = vmatpush1.bf16.msra.mxu0 0
        %2277 = vmatprep.subr.bf16.mxu0 0
        %2278 = vmatpush1.bf16.msra.mxu0 0
        %2279 = vmatprep.subr.bf16.mxu0 0
        %2280 = vmatpush1.bf16.msra.mxu0 0
        %2281 = vmatprep.mubr.bf16.mxu0 0
        %2282 = vmatmul.mubr.bf16.gmra.mrb[0].mxu0 %v2241
        %v2283 = vpop.f32.mrb[0].mxu0
        %v2284 = vadd.f32 0.0, %v2283
        %v2285 = vpop.f32.mrb[0].mxu0
        %v2286 = vpop.f32.mrb[0].mxu0
        %v2287 = vadd.f32 0.0, %v2286
        %v2288 = vpop.f32.mrb[0].mxu0
        %2289 = vmatprep.mubr.bf16.mxu0 0
        %2290 = vmatmul.mubr.bf16.gmra.mrb[0].mxu0 %v2244
        %v2291 = vpop.f32.mrb[0].mxu0
        %v2292 = vadd.f32 0.0, %v2291
        %v2293 = vpop.f32.mrb[0].mxu0
        %v2294 = vpop.f32.mrb[0].mxu0
        %v2295 = vadd.f32 0.0, %v2294
        %v2296 = vpop.f32.mrb[0].mxu0
        %2297 = vdwg.mxu0
        %v2298 = vadd.f32 %v2226, %v2284
        %v2299 = vadd.f32 %v2229, %v2287
        %v2300 = vadd.f32 %v2234, %v2292
        %v2301 = vadd.f32 %v2237, %v2295
        %v2302 = vld [vmem:[%s5 + $0x2] sm:$0x1]
        %v2303 = vlaneseq
        %v2304 = vshrl.u32 %v2303, 7
        %v2305 = vsub.s32 0, %v2304
        %v2306 = vrot.slane %v2302, %v2305
        %v2307 = vadd.f32 %v2298, %v2306
        %v2308 = vadd.f32 %v2299, %v2306
        %v2309 = vadd.f32 %v2300, %v2306
        %v2310 = vadd.f32 %v2301, %v2306
        %v2311 = vmax.f32 %v2307, 0.0
        %v2312 = vmax.f32 %v2308, 0.0
        %v2313 = vmax.f32 %v2309, 0.0
        %v2314 = vmax.f32 %v2310, 0.0
        %v2315 = vpack.c.bf16 %v2312, %v2311
        %v2316 = vpack.c.bf16 %v2314, %v2313
        %s2317 = scalar_lea.vmem [#allocation5], 128
        %v2318 = vld [vmem:[%s2317] sm:$0xf]
        %v2319 = vld [vmem:[%s2317 + $0x4] sm:$0xf]
        %v2320 = vld [vmem:[%s2317 + $0x8] sm:$0xf]
        %v2321 = vld [vmem:[%s2317 + $0xc] sm:$0xf]
        %v2322 = vld [vmem:[%s2317 + $0x10] sm:$0xf]
        %v2323 = vld [vmem:[%s2317 + $0x14] sm:$0xf]
        %v2324 = vld [vmem:[%s2317 + $0x18] sm:$0xf]
        %v2325 = vld [vmem:[%s2317 + $0x1c] sm:$0xf]
        %v2326 = vld [vmem:[%s2317 + $0x20] sm:$0xf]
        %v2327 = vld [vmem:[%s2317 + $0x24] sm:$0xf]
        %v2328 = vld [vmem:[%s2317 + $0x28] sm:$0xf]
        %v2329 = vld [vmem:[%s2317 + $0x2c] sm:$0xf]
        %v2330 = vld [vmem:[%s2317 + $0x30] sm:$0xf]
        %v2331 = vld [vmem:[%s2317 + $0x34] sm:$0xf]
        %v2332 = vld [vmem:[%s2317 + $0x38] sm:$0xf]
        %v2333 = vld [vmem:[%s2317 + $0x3c] sm:$0xf]
        %v2334 = vld [vmem:[%s7 + $0x2] sm:$0x1]
        %v2335 = vlaneseq
        %v2336 = vshrl.u32 %v2335, 7
        %v2337 = vsub.s32 0, %v2336
        %v2338 = vrot.slane %v2334, %v2337
        %v2355 = vunpack.c.l.b16 %v2318
        %v2356 = vunpack.c.l.b16 %v2319
        %v2357 = vunpack.c.l.b16 %v2320
        %v2358 = vunpack.c.l.b16 %v2321
        %v2359 = vunpack.c.l.b16 %v2322
        %v2360 = vunpack.c.l.b16 %v2323
        %v2361 = vunpack.c.l.b16 %v2324
        %v2362 = vunpack.c.l.b16 %v2325
        %v2363 = vunpack.c.l.b16 %v2326
        %v2364 = vunpack.c.l.b16 %v2327
        %v2365 = vunpack.c.l.b16 %v2328
        %v2366 = vunpack.c.l.b16 %v2329
        %v2367 = vunpack.c.l.b16 %v2330
        %v2368 = vunpack.c.l.b16 %v2331
        %v2369 = vunpack.c.l.b16 %v2332
        %v2370 = vunpack.c.l.b16 %v2333
        %v2371 = vpack.c.b16 %v2356, %v2355
        %v2372 = vpack.c.b16 %v2358, %v2357
        %v2373 = vpack.c.b16 %v2360, %v2359
        %v2374 = vpack.c.b16 %v2362, %v2361
        %v2375 = vpack.c.b16 %v2364, %v2363
        %v2376 = vpack.c.b16 %v2366, %v2365
        %v2377 = vpack.c.b16 %v2368, %v2367
        %v2378 = vpack.c.b16 %v2370, %v2369
        %2387 = vmatprep.subr.bf16.mxu0 0
        %2388 = vmatpush1.bf16.msra.mxu0 %v2371
        %2389 = vmatprep.subr.bf16.mxu0 0
        %2390 = vmatpush1.bf16.msra.mxu0 %v2372
        %2391 = vmatprep.subr.bf16.mxu0 0
        %2392 = vmatpush1.bf16.msra.mxu0 %v2373
        %2393 = vmatprep.subr.bf16.mxu0 0
        %2394 = vmatpush1.bf16.msra.mxu0 %v2374
        %2395 = vmatprep.subr.bf16.mxu0 0
        %2396 = vmatpush1.bf16.msra.mxu0 %v2375
        %2397 = vmatprep.subr.bf16.mxu0 0
        %2398 = vmatpush1.bf16.msra.mxu0 %v2376
        %2399 = vmatprep.subr.bf16.mxu0 0
        %2400 = vmatpush1.bf16.msra.mxu0 %v2377
        %2401 = vmatprep.subr.bf16.mxu0 0
        %2402 = vmatpush1.bf16.msra.mxu0 %v2378
        %2403 = vmatprep.subr.bf16.mxu0 0
        %2404 = vmatpush1.bf16.msra.mxu0 0
        %2405 = vmatprep.subr.bf16.mxu0 0
        %2406 = vmatpush1.bf16.msra.mxu0 0
        %2407 = vmatprep.subr.bf16.mxu0 0
        %2408 = vmatpush1.bf16.msra.mxu0 0
        %2409 = vmatprep.subr.bf16.mxu0 0
        %2410 = vmatpush1.bf16.msra.mxu0 0
        %2411 = vmatprep.subr.bf16.mxu0 0
        %2412 = vmatpush1.bf16.msra.mxu0 0
        %2413 = vmatprep.subr.bf16.mxu0 0
        %2414 = vmatpush1.bf16.msra.mxu0 0
        %2415 = vmatprep.subr.bf16.mxu0 0
        %2416 = vmatpush1.bf16.msra.mxu0 0
        %2417 = vmatprep.subr.bf16.mxu0 0
        %2418 = vmatpush1.bf16.msra.mxu0 0
        %2419 = vmatprep.mubr.bf16.mxu0 0
        %2420 = vmatmul.mubr.bf16.gmra.mrb[0].mxu0 %v2315
        %v2421 = vpop.f32.mrb[0].mxu0
        %v2422 = vadd.f32 %v2338, %v2421
        %v2423 = vpop.f32.mrb[0].mxu0
        %v2424 = vpop.f32.mrb[0].mxu0
        %v2425 = vadd.f32 %v2338, %v2424
        %v2426 = vpop.f32.mrb[0].mxu0
        %2427 = vmatprep.mubr.bf16.mxu0 0
        %2428 = vmatmul.mubr.bf16.gmra.mrb[0].mxu0 %v2316
        %v2429 = vpop.f32.mrb[0].mxu0
        %v2430 = vadd.f32 %v2338, %v2429
        %v2431 = vpop.f32.mrb[0].mxu0
        %v2432 = vpop.f32.mrb[0].mxu0
        %v2433 = vadd.f32 %v2338, %v2432
        %v2434 = vpop.f32.mrb[0].mxu0
        %2435 = vdwg.mxu0
        %v2436 = vpack.c.bf16 %v2425, %v2422
        %v2437 = vpack.c.bf16 %v2433, %v2430
        %s2438 = scalar_lea.vmem [#allocation2], 512
        %v2439 = vld [vmem:[%s2438] sm:$0xf]
        %v2440 = vld [vmem:[%s2438 + $0x4] sm:$0xf]
        %v2441 = vld [vmem:[%s2438 + $0x8] sm:$0xf]
        %v2442 = vld [vmem:[%s2438 + $0xc] sm:$0xf]
        %v2443 = vld [vmem:[%s2438 + $0x10] sm:$0xf]
        %v2444 = vld [vmem:[%s2438 + $0x14] sm:$0xf]
        %v2445 = vld [vmem:[%s2438 + $0x18] sm:$0xf]
        %v2446 = vld [vmem:[%s2438 + $0x1c] sm:$0xf]
        %v2447 = vld [vmem:[%s2438 + $0x20] sm:$0xf]
        %v2448 = vld [vmem:[%s2438 + $0x24] sm:$0xf]
        %v2449 = vld [vmem:[%s2438 + $0x28] sm:$0xf]
        %v2450 = vld [vmem:[%s2438 + $0x2c] sm:$0xf]
        %v2451 = vld [vmem:[%s2438 + $0x30] sm:$0xf]
        %v2452 = vld [vmem:[%s2438 + $0x34] sm:$0xf]
        %v2453 = vld [vmem:[%s2438 + $0x38] sm:$0xf]
        %v2454 = vld [vmem:[%s2438 + $0x3c] sm:$0xf]
        %v2455 = vld [vmem:[%s5 + $0x3] sm:$0x1]
        %v2456 = vlaneseq
        %v2457 = vshrl.u32 %v2456, 7
        %v2458 = vsub.s32 0, %v2457
        %v2459 = vrot.slane %v2455, %v2458
        %v2476 = vunpack.c.l.b16 %v2439
        %v2477 = vunpack.c.l.b16 %v2440
        %v2478 = vunpack.c.l.b16 %v2441
        %v2479 = vunpack.c.l.b16 %v2442
        %v2480 = vunpack.c.l.b16 %v2443
        %v2481 = vunpack.c.l.b16 %v2444
        %v2482 = vunpack.c.l.b16 %v2445
        %v2483 = vunpack.c.l.b16 %v2446
        %v2484 = vunpack.c.l.b16 %v2447
        %v2485 = vunpack.c.l.b16 %v2448
        %v2486 = vunpack.c.l.b16 %v2449
        %v2487 = vunpack.c.l.b16 %v2450
        %v2488 = vunpack.c.l.b16 %v2451
        %v2489 = vunpack.c.l.b16 %v2452
        %v2490 = vunpack.c.l.b16 %v2453
        %v2491 = vunpack.c.l.b16 %v2454
        %v2492 = vpack.c.b16 %v2477, %v2476
        %v2493 = vpack.c.b16 %v2479, %v2478
        %v2494 = vpack.c.b16 %v2481, %v2480
        %v2495 = vpack.c.b16 %v2483, %v2482
        %v2496 = vpack.c.b16 %v2485, %v2484
        %v2497 = vpack.c.b16 %v2487, %v2486
        %v2498 = vpack.c.b16 %v2489, %v2488
        %v2499 = vpack.c.b16 %v2491, %v2490
        %2508 = vmatprep.subr.bf16.mxu0 0
        %2509 = vmatpush1.bf16.msra.mxu0 %v2492
        %2510 = vmatprep.subr.bf16.mxu0 0
        %2511 = vmatpush1.bf16.msra.mxu0 %v2493
        %2512 = vmatprep.subr.bf16.mxu0 0
        %2513 = vmatpush1.bf16.msra.mxu0 %v2494
        %2514 = vmatprep.subr.bf16.mxu0 0
        %2515 = vmatpush1.bf16.msra.mxu0 %v2495
        %2516 = vmatprep.subr.bf16.mxu0 0
        %2517 = vmatpush1.bf16.msra.mxu0 %v2496
        %2518 = vmatprep.subr.bf16.mxu0 0
        %2519 = vmatpush1.bf16.msra.mxu0 %v2497
        %2520 = vmatprep.subr.bf16.mxu0 0
        %2521 = vmatpush1.bf16.msra.mxu0 %v2498
        %2522 = vmatprep.subr.bf16.mxu0 0
        %2523 = vmatpush1.bf16.msra.mxu0 %v2499
        %2524 = vmatprep.subr.bf16.mxu0 0
        %2525 = vmatpush1.bf16.msra.mxu0 0
        %2526 = vmatprep.subr.bf16.mxu0 0
        %2527 = vmatpush1.bf16.msra.mxu0 0
        %2528 = vmatprep.subr.bf16.mxu0 0
        %2529 = vmatpush1.bf16.msra.mxu0 0
        %2530 = vmatprep.subr.bf16.mxu0 0
        %2531 = vmatpush1.bf16.msra.mxu0 0
        %2532 = vmatprep.subr.bf16.mxu0 0
        %2533 = vmatpush1.bf16.msra.mxu0 0
        %2534 = vmatprep.subr.bf16.mxu0 0
        %2535 = vmatpush1.bf16.msra.mxu0 0
        %2536 = vmatprep.subr.bf16.mxu0 0
        %2537 = vmatpush1.bf16.msra.mxu0 0
        %2538 = vmatprep.subr.bf16.mxu0 0
        %2539 = vmatpush1.bf16.msra.mxu0 0
        %2540 = vmatprep.mubr.bf16.mxu0 0
        %2541 = vmatmul.mubr.bf16.gmra.mrb[0].mxu0 %v2436
        %v2542 = vpop.f32.mrb[0].mxu0
        %v2543 = vadd.f32 %v2459, %v2542
        %v2544 = vpop.f32.mrb[0].mxu0
        %v2545 = vpop.f32.mrb[0].mxu0
        %v2546 = vadd.f32 %v2459, %v2545
        %v2547 = vpop.f32.mrb[0].mxu0
        %2548 = vmatprep.mubr.bf16.mxu0 0
        %2549 = vmatmul.mubr.bf16.gmra.mrb[0].mxu0 %v2437
        %v2550 = vpop.f32.mrb[0].mxu0
        %v2551 = vadd.f32 %v2459, %v2550
        %v2552 = vpop.f32.mrb[0].mxu0
        %v2553 = vpop.f32.mrb[0].mxu0
        %v2554 = vadd.f32 %v2459, %v2553
        %v2555 = vpop.f32.mrb[0].mxu0
        %2556 = vdwg.mxu0
        %v2557 = vmax.f32 %v2543, 0.0
        %v2558 = vmax.f32 %v2546, 0.0
        %v2559 = vmax.f32 %v2551, 0.0
        %v2560 = vmax.f32 %v2554, 0.0
        %v2561 = vpack.c.bf16 %v2558, %v2557
        %v2562 = vpack.c.bf16 %v2560, %v2559
        %s2563 = scalar_lea.vmem [#allocation5], 192
        %v2564 = vld [vmem:[%s2563] sm:$0xf]
        %v2565 = vld [vmem:[%s2563 + $0x4] sm:$0xf]
        %v2566 = vld [vmem:[%s2563 + $0x8] sm:$0xf]
        %v2567 = vld [vmem:[%s2563 + $0xc] sm:$0xf]
        %v2568 = vld [vmem:[%s2563 + $0x10] sm:$0xf]
        %v2569 = vld [vmem:[%s2563 + $0x14] sm:$0xf]
        %v2570 = vld [vmem:[%s2563 + $0x18] sm:$0xf]
        %v2571 = vld [vmem:[%s2563 + $0x1c] sm:$0xf]
        %v2572 = vld [vmem:[%s2563 + $0x20] sm:$0xf]
        %v2573 = vld [vmem:[%s2563 + $0x24] sm:$0xf]
        %v2574 = vld [vmem:[%s2563 + $0x28] sm:$0xf]
        %v2575 = vld [vmem:[%s2563 + $0x2c] sm:$0xf]
        %v2576 = vld [vmem:[%s2563 + $0x30] sm:$0xf]
        %v2577 = vld [vmem:[%s2563 + $0x34] sm:$0xf]
        %v2578 = vld [vmem:[%s2563 + $0x38] sm:$0xf]
        %v2579 = vld [vmem:[%s2563 + $0x3c] sm:$0xf]
        %v2580 = vld [vmem:[%s7 + $0x3] sm:$0x1]
        %v2581 = vlaneseq
        %v2582 = vshrl.u32 %v2581, 7
        %v2583 = vsub.s32 0, %v2582
        %v2584 = vrot.slane %v2580, %v2583
        %v2601 = vunpack.c.l.b16 %v2564
        %v2602 = vunpack.c.l.b16 %v2565
        %v2603 = vunpack.c.l.b16 %v2566
        %v2604 = vunpack.c.l.b16 %v2567
        %v2605 = vunpack.c.l.b16 %v2568
        %v2606 = vunpack.c.l.b16 %v2569
        %v2607 = vunpack.c.l.b16 %v2570
        %v2608 = vunpack.c.l.b16 %v2571
        %v2609 = vunpack.c.l.b16 %v2572
        %v2610 = vunpack.c.l.b16 %v2573
        %v2611 = vunpack.c.l.b16 %v2574
        %v2612 = vunpack.c.l.b16 %v2575
        %v2613 = vunpack.c.l.b16 %v2576
        %v2614 = vunpack.c.l.b16 %v2577
        %v2615 = vunpack.c.l.b16 %v2578
        %v2616 = vunpack.c.l.b16 %v2579
        %v2617 = vpack.c.b16 %v2602, %v2601
        %v2618 = vpack.c.b16 %v2604, %v2603
        %v2619 = vpack.c.b16 %v2606, %v2605
        %v2620 = vpack.c.b16 %v2608, %v2607
        %v2621 = vpack.c.b16 %v2610, %v2609
        %v2622 = vpack.c.b16 %v2612, %v2611
        %v2623 = vpack.c.b16 %v2614, %v2613
        %v2624 = vpack.c.b16 %v2616, %v2615
        %2633 = vmatprep.subr.bf16.mxu0 0
        %2634 = vmatpush1.bf16.msra.mxu0 %v2617
        %2635 = vmatprep.subr.bf16.mxu0 0
        %2636 = vmatpush1.bf16.msra.mxu0 %v2618
        %2637 = vmatprep.subr.bf16.mxu0 0
        %2638 = vmatpush1.bf16.msra.mxu0 %v2619
        %2639 = vmatprep.subr.bf16.mxu0 0
        %2640 = vmatpush1.bf16.msra.mxu0 %v2620
        %2641 = vmatprep.subr.bf16.mxu0 0
        %2642 = vmatpush1.bf16.msra.mxu0 %v2621
        %2643 = vmatprep.subr.bf16.mxu0 0
        %2644 = vmatpush1.bf16.msra.mxu0 %v2622
        %2645 = vmatprep.subr.bf16.mxu0 0
        %2646 = vmatpush1.bf16.msra.mxu0 %v2623
        %2647 = vmatprep.subr.bf16.mxu0 0
        %2648 = vmatpush1.bf16.msra.mxu0 %v2624
        %2649 = vmatprep.subr.bf16.mxu0 0
        %2650 = vmatpush1.bf16.msra.mxu0 0
        %2651 = vmatprep.subr.bf16.mxu0 0
        %2652 = vmatpush1.bf16.msra.mxu0 0
        %2653 = vmatprep.subr.bf16.mxu0 0
        %2654 = vmatpush1.bf16.msra.mxu0 0
        %2655 = vmatprep.subr.bf16.mxu0 0
        %2656 = vmatpush1.bf16.msra.mxu0 0
        %2657 = vmatprep.subr.bf16.mxu0 0
        %2658 = vmatpush1.bf16.msra.mxu0 0
        %2659 = vmatprep.subr.bf16.mxu0 0
        %2660 = vmatpush1.bf16.msra.mxu0 0
        %2661 = vmatprep.subr.bf16.mxu0 0
        %2662 = vmatpush1.bf16.msra.mxu0 0
        %2663 = vmatprep.subr.bf16.mxu0 0
        %2664 = vmatpush1.bf16.msra.mxu0 0
        %2665 = vmatprep.mubr.bf16.mxu0 0
        %2666 = vmatmul.mubr.bf16.gmra.mrb[0].mxu0 %v2561
        %v2667 = vpop.f32.mrb[0].mxu0
        %v2668 = vadd.f32 %v2584, %v2667
        %v2669 = vpop.f32.mrb[0].mxu0
        %v2670 = vpop.f32.mrb[0].mxu0
        %v2671 = vadd.f32 %v2584, %v2670
        %v2672 = vpop.f32.mrb[0].mxu0
        %2673 = vmatprep.mubr.bf16.mxu0 0
        %2674 = vmatmul.mubr.bf16.gmra.mrb[0].mxu0 %v2562
        %v2675 = vpop.f32.mrb[0].mxu0
        %v2676 = vadd.f32 %v2584, %v2675
        %v2677 = vpop.f32.mrb[0].mxu0
        %v2678 = vpop.f32.mrb[0].mxu0
        %v2679 = vadd.f32 %v2584, %v2678
        %v2680 = vpop.f32.mrb[0].mxu0
        %2681 = vdwg.mxu0
        %v2682 = vpack.c.bf16 %v2671, %v2668
        %v2683 = vpack.c.bf16 %v2679, %v2676
        %2684 = vxpose.xlu0.c.b16.start [1/8] %v593, 128
        %2685 = vxpose.xlu0.c.b16.cont [2/8] %v594, 128
        %2686 = vxpose.xlu0.c.b16.cont [3/8] 0, 128
        %2687 = vxpose.xlu0.c.b16.cont [4/8] 0, 128
        %2688 = vxpose.xlu0.c.b16.cont [5/8] 0, 128
        %2689 = vxpose.xlu0.c.b16.cont [6/8] 0, 128
        %2690 = vxpose.xlu0.c.b16.cont [7/8] 0, 128
        %2691 = vxpose.xlu0.c.b16.end [8/8] 0, 128
        %v2692 = vpop.trf.xlu0
        %v2693 = vpop.trf.xlu0
        %v2694 = vpop.trf.xlu0
        %v2695 = vpop.trf.xlu0
        %v2696 = vpop.trf.xlu0
        %v2697 = vpop.trf.xlu0
        %v2698 = vpop.trf.xlu0
        %v2699 = vpop.trf.xlu0
        %v2701 = vsel %vm958, %v2692, 0
        %2703 = vmatprep.subr.bf16.mxu0 0
        %2704 = vmatpush1.bf16.msra.mxu0 %v2682
        %2705 = vmatprep.subr.bf16.mxu0 0
        %2706 = vmatpush1.bf16.msra.mxu0 %v2683
        %2707 = vmatprep.subr.bf16.mxu0 0
        %2708 = vmatpush1.bf16.msra.mxu0 0
        %2709 = vmatprep.subr.bf16.mxu0 0
        %2710 = vmatpush1.bf16.msra.mxu0 0
        %2711 = vmatprep.subr.bf16.mxu0 0
        %2712 = vmatpush1.bf16.msra.mxu0 0
        %2713 = vmatprep.subr.bf16.mxu0 0
        %2714 = vmatpush1.bf16.msra.mxu0 0
        %2715 = vmatprep.subr.bf16.mxu0 0
        %2716 = vmatpush1.bf16.msra.mxu0 0
        %2717 = vmatprep.subr.bf16.mxu0 0
        %2718 = vmatpush1.bf16.msra.mxu0 0
        %2719 = vmatprep.subr.bf16.mxu0 0
        %2720 = vmatpush1.bf16.msra.mxu0 0
        %2721 = vmatprep.subr.bf16.mxu0 0
        %2722 = vmatpush1.bf16.msra.mxu0 0
        %2723 = vmatprep.subr.bf16.mxu0 0
        %2724 = vmatpush1.bf16.msra.mxu0 0
        %2725 = vmatprep.subr.bf16.mxu0 0
        %2726 = vmatpush1.bf16.msra.mxu0 0
        %2727 = vmatprep.subr.bf16.mxu0 0
        %2728 = vmatpush1.bf16.msra.mxu0 0
        %2729 = vmatprep.subr.bf16.mxu0 0
        %2730 = vmatpush1.bf16.msra.mxu0 0
        %2731 = vmatprep.subr.bf16.mxu0 0
        %2732 = vmatpush1.bf16.msra.mxu0 0
        %2733 = vmatprep.subr.bf16.mxu0 0
        %2734 = vmatpush1.bf16.msra.mxu0 0
        %2735 = vmatprep.mubr.bf16.mxu0 0
        %2736 = vmatmul.mubr.bf16.gmra.mrb[0].mxu0 %v2701
        %v2737 = vpop.f32.mrb[0].mxu0
        %v2738 = vadd.f32 0.0, %v2737
        %v2739 = vpop.f32.mrb[0].mxu0
        %v2740 = vpop.f32.mrb[0].mxu0
        %v2741 = vpop.f32.mrb[0].mxu0
        %2742 = vdwg.mxu0
        %v2743 = vpack.c.bf16 %v2738, %v2738
        %s2744 = scalar_lea.vmem [#allocation2], 576
        %v2745 = vld [vmem:[%s2744] sm:$0xf]
        %v2746 = vld [vmem:[%s2744 + $0x4] sm:$0xf]
        %v2747 = vld [vmem:[%s2744 + $0x8] sm:$0xf]
        %v2748 = vld [vmem:[%s2744 + $0xc] sm:$0xf]
        %v2749 = vld [vmem:[%s2744 + $0x10] sm:$0xf]
        %v2750 = vld [vmem:[%s2744 + $0x14] sm:$0xf]
        %v2751 = vld [vmem:[%s2744 + $0x18] sm:$0xf]
        %v2752 = vld [vmem:[%s2744 + $0x1c] sm:$0xf]
        %v2753 = vld [vmem:[%s2744 + $0x20] sm:$0xf]
        %v2754 = vld [vmem:[%s2744 + $0x24] sm:$0xf]
        %v2755 = vld [vmem:[%s2744 + $0x28] sm:$0xf]
        %v2756 = vld [vmem:[%s2744 + $0x2c] sm:$0xf]
        %v2757 = vld [vmem:[%s2744 + $0x30] sm:$0xf]
        %v2758 = vld [vmem:[%s2744 + $0x34] sm:$0xf]
        %v2759 = vld [vmem:[%s2744 + $0x38] sm:$0xf]
        %v2760 = vld [vmem:[%s2744 + $0x3c] sm:$0xf]
        %s2761 = scalar_lea.vmem [#allocation2], 640
        %v2762 = vld [vmem:[%s2761] sm:$0xf]
        %v2763 = vld [vmem:[%s2761 + $0x4] sm:$0xf]
        %v2764 = vld [vmem:[%s2761 + $0x8] sm:$0xf]
        %v2765 = vld [vmem:[%s2761 + $0xc] sm:$0xf]
        %v2766 = vld [vmem:[%s2761 + $0x10] sm:$0xf]
        %v2767 = vld [vmem:[%s2761 + $0x14] sm:$0xf]
        %v2768 = vld [vmem:[%s2761 + $0x18] sm:$0xf]
        %v2769 = vld [vmem:[%s2761 + $0x1c] sm:$0xf]
        %v2770 = vld [vmem:[%s2761 + $0x20] sm:$0xf]
        %v2771 = vld [vmem:[%s2761 + $0x24] sm:$0xf]
        %v2772 = vld [vmem:[%s2761 + $0x28] sm:$0xf]
        %v2773 = vld [vmem:[%s2761 + $0x2c] sm:$0xf]
        %v2774 = vld [vmem:[%s2761 + $0x30] sm:$0xf]
        %v2775 = vld [vmem:[%s2761 + $0x34] sm:$0xf]
        %v2776 = vld [vmem:[%s2761 + $0x38] sm:$0xf]
        %v2777 = vld [vmem:[%s2761 + $0x3c] sm:$0xf]
        %v2794 = vunpack.c.l.b16 %v2762
        %v2795 = vunpack.c.l.b16 %v2763
        %v2796 = vunpack.c.l.b16 %v2764
        %v2797 = vunpack.c.l.b16 %v2765
        %v2798 = vunpack.c.l.b16 %v2766
        %v2799 = vunpack.c.l.b16 %v2767
        %v2800 = vunpack.c.l.b16 %v2768
        %v2801 = vunpack.c.l.b16 %v2769
        %v2802 = vunpack.c.l.b16 %v2770
        %v2803 = vunpack.c.l.b16 %v2771
        %v2804 = vunpack.c.l.b16 %v2772
        %v2805 = vunpack.c.l.b16 %v2773
        %v2806 = vunpack.c.l.b16 %v2774
        %v2807 = vunpack.c.l.b16 %v2775
        %v2808 = vunpack.c.l.b16 %v2776
        %v2809 = vunpack.c.l.b16 %v2777
        %v2810 = vpack.c.b16 %v2795, %v2794
        %v2811 = vpack.c.b16 %v2797, %v2796
        %v2812 = vpack.c.b16 %v2799, %v2798
        %v2813 = vpack.c.b16 %v2801, %v2800
        %v2814 = vpack.c.b16 %v2803, %v2802
        %v2815 = vpack.c.b16 %v2805, %v2804
        %v2816 = vpack.c.b16 %v2807, %v2806
        %v2817 = vpack.c.b16 %v2809, %v2808
        %2826 = vmatprep.subr.bf16.mxu0 0
        %2827 = vmatpush1.bf16.msra.mxu0 %v2810
        %2828 = vmatprep.subr.bf16.mxu0 0
        %2829 = vmatpush1.bf16.msra.mxu0 %v2811
        %2830 = vmatprep.subr.bf16.mxu0 0
        %2831 = vmatpush1.bf16.msra.mxu0 %v2812
        %2832 = vmatprep.subr.bf16.mxu0 0
        %2833 = vmatpush1.bf16.msra.mxu0 %v2813
        %2834 = vmatprep.subr.bf16.mxu0 0
        %2835 = vmatpush1.bf16.msra.mxu0 %v2814
        %2836 = vmatprep.subr.bf16.mxu0 0
        %2837 = vmatpush1.bf16.msra.mxu0 %v2815
        %2838 = vmatprep.subr.bf16.mxu0 0
        %2839 = vmatpush1.bf16.msra.mxu0 %v2816
        %2840 = vmatprep.subr.bf16.mxu0 0
        %2841 = vmatpush1.bf16.msra.mxu0 %v2817
        %2842 = vmatprep.subr.bf16.mxu0 0
        %2843 = vmatpush1.bf16.msra.mxu0 0
        %2844 = vmatprep.subr.bf16.mxu0 0
        %2845 = vmatpush1.bf16.msra.mxu0 0
        %2846 = vmatprep.subr.bf16.mxu0 0
        %2847 = vmatpush1.bf16.msra.mxu0 0
        %2848 = vmatprep.subr.bf16.mxu0 0
        %2849 = vmatpush1.bf16.msra.mxu0 0
        %2850 = vmatprep.subr.bf16.mxu0 0
        %2851 = vmatpush1.bf16.msra.mxu0 0
        %2852 = vmatprep.subr.bf16.mxu0 0
        %2853 = vmatpush1.bf16.msra.mxu0 0
        %2854 = vmatprep.subr.bf16.mxu0 0
        %2855 = vmatpush1.bf16.msra.mxu0 0
        %2856 = vmatprep.subr.bf16.mxu0 0
        %2857 = vmatpush1.bf16.msra.mxu0 0
        %2858 = vmatprep.mubr.bf16.mxu0 0
        %2859 = vmatmul.mubr.bf16.gmra.mrb[0].mxu0 %v608
        %v2860 = vpop.f32.mrb[0].mxu0
        %v2861 = vadd.f32 0.0, %v2860
        %v2862 = vpop.f32.mrb[0].mxu0
        %v2863 = vpop.f32.mrb[0].mxu0
        %v2864 = vpop.f32.mrb[0].mxu0
        %2865 = vdwg.mxu0
        %v2882 = vunpack.c.l.b16 %v2745
        %v2883 = vunpack.c.l.b16 %v2746
        %v2884 = vunpack.c.l.b16 %v2747
        %v2885 = vunpack.c.l.b16 %v2748
        %v2886 = vunpack.c.l.b16 %v2749
        %v2887 = vunpack.c.l.b16 %v2750
        %v2888 = vunpack.c.l.b16 %v2751
        %v2889 = vunpack.c.l.b16 %v2752
        %v2890 = vunpack.c.l.b16 %v2753
        %v2891 = vunpack.c.l.b16 %v2754
        %v2892 = vunpack.c.l.b16 %v2755
        %v2893 = vunpack.c.l.b16 %v2756
        %v2894 = vunpack.c.l.b16 %v2757
        %v2895 = vunpack.c.l.b16 %v2758
        %v2896 = vunpack.c.l.b16 %v2759
        %v2897 = vunpack.c.l.b16 %v2760
        %v2898 = vpack.c.b16 %v2883, %v2882
        %v2899 = vpack.c.b16 %v2885, %v2884
        %v2900 = vpack.c.b16 %v2887, %v2886
        %v2901 = vpack.c.b16 %v2889, %v2888
        %v2902 = vpack.c.b16 %v2891, %v2890
        %v2903 = vpack.c.b16 %v2893, %v2892
        %v2904 = vpack.c.b16 %v2895, %v2894
        %v2905 = vpack.c.b16 %v2897, %v2896
        %2914 = vmatprep.subr.bf16.mxu0 0
        %2915 = vmatpush1.bf16.msra.mxu0 %v2898
        %2916 = vmatprep.subr.bf16.mxu0 0
        %2917 = vmatpush1.bf16.msra.mxu0 %v2899
        %2918 = vmatprep.subr.bf16.mxu0 0
        %2919 = vmatpush1.bf16.msra.mxu0 %v2900
        %2920 = vmatprep.subr.bf16.mxu0 0
        %2921 = vmatpush1.bf16.msra.mxu0 %v2901
        %2922 = vmatprep.subr.bf16.mxu0 0
        %2923 = vmatpush1.bf16.msra.mxu0 %v2902
        %2924 = vmatprep.subr.bf16.mxu0 0
        %2925 = vmatpush1.bf16.msra.mxu0 %v2903
        %2926 = vmatprep.subr.bf16.mxu0 0
        %2927 = vmatpush1.bf16.msra.mxu0 %v2904
        %2928 = vmatprep.subr.bf16.mxu0 0
        %2929 = vmatpush1.bf16.msra.mxu0 %v2905
        %2930 = vmatprep.subr.bf16.mxu0 0
        %2931 = vmatpush1.bf16.msra.mxu0 0
        %2932 = vmatprep.subr.bf16.mxu0 0
        %2933 = vmatpush1.bf16.msra.mxu0 0
        %2934 = vmatprep.subr.bf16.mxu0 0
        %2935 = vmatpush1.bf16.msra.mxu0 0
        %2936 = vmatprep.subr.bf16.mxu0 0
        %2937 = vmatpush1.bf16.msra.mxu0 0
        %2938 = vmatprep.subr.bf16.mxu0 0
        %2939 = vmatpush1.bf16.msra.mxu0 0
        %2940 = vmatprep.subr.bf16.mxu0 0
        %2941 = vmatpush1.bf16.msra.mxu0 0
        %2942 = vmatprep.subr.bf16.mxu0 0
        %2943 = vmatpush1.bf16.msra.mxu0 0
        %2944 = vmatprep.subr.bf16.mxu0 0
        %2945 = vmatpush1.bf16.msra.mxu0 0
        %2946 = vmatprep.mubr.bf16.mxu0 0
        %2947 = vmatmul.mubr.bf16.gmra.mrb[0].mxu0 %v2743
        %v2948 = vpop.f32.mrb[0].mxu0
        %v2949 = vadd.f32 %v2861, %v2948
        %v2950 = vpop.f32.mrb[0].mxu0
        %v2951 = vpop.f32.mrb[0].mxu0
        %v2952 = vpop.f32.mrb[0].mxu0
        %2953 = vdwg.mxu0
        %v2954 = vld [vmem:[%s5 + $0x4] sm:$0x1]
        %v2955 = vlaneseq
        %v2956 = vshrl.u32 %v2955, 7
        %v2957 = vsub.s32 0, %v2956
        %v2958 = vrot.slane %v2954, %v2957
        %v2959 = vadd.f32 %v2949, %v2958
        %v2960 = vmax.f32 %v2959, 0.0
        %v2961 = vpack.c.bf16 %v2960, %v2960
        %s2962 = scalar_lea.vmem [#allocation5], 256
        %v2963 = vld [vmem:[%s2962] sm:$0xf]
        %v2964 = vld [vmem:[%s2962 + $0x4] sm:$0xf]
        %v2965 = vld [vmem:[%s2962 + $0x8] sm:$0xf]
        %v2966 = vld [vmem:[%s2962 + $0xc] sm:$0xf]
        %v2967 = vld [vmem:[%s2962 + $0x10] sm:$0xf]
        %v2968 = vld [vmem:[%s2962 + $0x14] sm:$0xf]
        %v2969 = vld [vmem:[%s2962 + $0x18] sm:$0xf]
        %v2970 = vld [vmem:[%s2962 + $0x1c] sm:$0xf]
        %v2971 = vld [vmem:[%s2962 + $0x20] sm:$0xf]
        %v2972 = vld [vmem:[%s2962 + $0x24] sm:$0xf]
        %v2973 = vld [vmem:[%s2962 + $0x28] sm:$0xf]
        %v2974 = vld [vmem:[%s2962 + $0x2c] sm:$0xf]
        %v2975 = vld [vmem:[%s2962 + $0x30] sm:$0xf]
        %v2976 = vld [vmem:[%s2962 + $0x34] sm:$0xf]
        %v2977 = vld [vmem:[%s2962 + $0x38] sm:$0xf]
        %v2978 = vld [vmem:[%s2962 + $0x3c] sm:$0xf]
        %v2979 = vld [vmem:[%s7 + $0x4] sm:$0x1]
        %v2980 = vlaneseq
        %v2981 = vshrl.u32 %v2980, 7
        %v2982 = vsub.s32 0, %v2981
        %v2983 = vrot.slane %v2979, %v2982
        %v3000 = vunpack.c.l.b16 %v2963
        %v3001 = vunpack.c.l.b16 %v2964
        %v3002 = vunpack.c.l.b16 %v2965
        %v3003 = vunpack.c.l.b16 %v2966
        %v3004 = vunpack.c.l.b16 %v2967
        %v3005 = vunpack.c.l.b16 %v2968
        %v3006 = vunpack.c.l.b16 %v2969
        %v3007 = vunpack.c.l.b16 %v2970
        %v3008 = vunpack.c.l.b16 %v2971
        %v3009 = vunpack.c.l.b16 %v2972
        %v3010 = vunpack.c.l.b16 %v2973
        %v3011 = vunpack.c.l.b16 %v2974
        %v3012 = vunpack.c.l.b16 %v2975
        %v3013 = vunpack.c.l.b16 %v2976
        %v3014 = vunpack.c.l.b16 %v2977
        %v3015 = vunpack.c.l.b16 %v2978
        %v3016 = vpack.c.b16 %v3001, %v3000
        %v3017 = vpack.c.b16 %v3003, %v3002
        %v3018 = vpack.c.b16 %v3005, %v3004
        %v3019 = vpack.c.b16 %v3007, %v3006
        %v3020 = vpack.c.b16 %v3009, %v3008
        %v3021 = vpack.c.b16 %v3011, %v3010
        %v3022 = vpack.c.b16 %v3013, %v3012
        %v3023 = vpack.c.b16 %v3015, %v3014
        %3032 = vmatprep.subr.bf16.mxu0 0
        %3033 = vmatpush1.bf16.msra.mxu0 %v3016
        %3034 = vmatprep.subr.bf16.mxu0 0
        %3035 = vmatpush1.bf16.msra.mxu0 %v3017
        %3036 = vmatprep.subr.bf16.mxu0 0
        %3037 = vmatpush1.bf16.msra.mxu0 %v3018
        %3038 = vmatprep.subr.bf16.mxu0 0
        %3039 = vmatpush1.bf16.msra.mxu0 %v3019
        %3040 = vmatprep.subr.bf16.mxu0 0
        %3041 = vmatpush1.bf16.msra.mxu0 %v3020
        %3042 = vmatprep.subr.bf16.mxu0 0
        %3043 = vmatpush1.bf16.msra.mxu0 %v3021
        %3044 = vmatprep.subr.bf16.mxu0 0
        %3045 = vmatpush1.bf16.msra.mxu0 %v3022
        %3046 = vmatprep.subr.bf16.mxu0 0
        %3047 = vmatpush1.bf16.msra.mxu0 %v3023
        %3048 = vmatprep.subr.bf16.mxu0 0
        %3049 = vmatpush1.bf16.msra.mxu0 0
        %3050 = vmatprep.subr.bf16.mxu0 0
        %3051 = vmatpush1.bf16.msra.mxu0 0
        %3052 = vmatprep.subr.bf16.mxu0 0
        %3053 = vmatpush1.bf16.msra.mxu0 0
        %3054 = vmatprep.subr.bf16.mxu0 0
        %3055 = vmatpush1.bf16.msra.mxu0 0
        %3056 = vmatprep.subr.bf16.mxu0 0
        %3057 = vmatpush1.bf16.msra.mxu0 0
        %3058 = vmatprep.subr.bf16.mxu0 0
        %3059 = vmatpush1.bf16.msra.mxu0 0
        %3060 = vmatprep.subr.bf16.mxu0 0
        %3061 = vmatpush1.bf16.msra.mxu0 0
        %3062 = vmatprep.subr.bf16.mxu0 0
        %3063 = vmatpush1.bf16.msra.mxu0 0
        %3064 = vmatprep.mubr.bf16.mxu0 0
        %3065 = vmatmul.mubr.bf16.gmra.mrb[0].mxu0 %v2961
        %v3066 = vpop.f32.mrb[0].mxu0
        %v3067 = vadd.f32 %v2983, %v3066
        %v3068 = vpop.f32.mrb[0].mxu0
        %v3069 = vpop.f32.mrb[0].mxu0
        %v3070 = vpop.f32.mrb[0].mxu0
        %3071 = vdwg.mxu0
        %v3072 = vpack.c.bf16 %v3067, %v3067
        %s3073 = scalar_lea.vmem [#allocation2], 704
        %v3074 = vld [vmem:[%s3073] sm:$0xf]
        %v3075 = vld [vmem:[%s3073 + $0x4] sm:$0xf]
        %v3076 = vld [vmem:[%s3073 + $0x8] sm:$0xf]
        %v3077 = vld [vmem:[%s3073 + $0xc] sm:$0xf]
        %v3078 = vld [vmem:[%s3073 + $0x10] sm:$0xf]
        %v3079 = vld [vmem:[%s3073 + $0x14] sm:$0xf]
        %v3080 = vld [vmem:[%s3073 + $0x18] sm:$0xf]
        %v3081 = vld [vmem:[%s3073 + $0x1c] sm:$0xf]
        %v3082 = vld [vmem:[%s3073 + $0x20] sm:$0xf]
        %v3083 = vld [vmem:[%s3073 + $0x24] sm:$0xf]
        %v3084 = vld [vmem:[%s3073 + $0x28] sm:$0xf]
        %v3085 = vld [vmem:[%s3073 + $0x2c] sm:$0xf]
        %v3086 = vld [vmem:[%s3073 + $0x30] sm:$0xf]
        %v3087 = vld [vmem:[%s3073 + $0x34] sm:$0xf]
        %v3088 = vld [vmem:[%s3073 + $0x38] sm:$0xf]
        %v3089 = vld [vmem:[%s3073 + $0x3c] sm:$0xf]
        %v3090 = vld [vmem:[%s5 + $0x5] sm:$0x1]
        %v3091 = vlaneseq
        %v3092 = vshrl.u32 %v3091, 7
        %v3093 = vsub.s32 0, %v3092
        %v3094 = vrot.slane %v3090, %v3093
        %v3111 = vunpack.c.l.b16 %v3074
        %v3112 = vunpack.c.l.b16 %v3075
        %v3113 = vunpack.c.l.b16 %v3076
        %v3114 = vunpack.c.l.b16 %v3077
        %v3115 = vunpack.c.l.b16 %v3078
        %v3116 = vunpack.c.l.b16 %v3079
        %v3117 = vunpack.c.l.b16 %v3080
        %v3118 = vunpack.c.l.b16 %v3081
        %v3119 = vunpack.c.l.b16 %v3082
        %v3120 = vunpack.c.l.b16 %v3083
        %v3121 = vunpack.c.l.b16 %v3084
        %v3122 = vunpack.c.l.b16 %v3085
        %v3123 = vunpack.c.l.b16 %v3086
        %v3124 = vunpack.c.l.b16 %v3087
        %v3125 = vunpack.c.l.b16 %v3088
        %v3126 = vunpack.c.l.b16 %v3089
        %v3127 = vpack.c.b16 %v3112, %v3111
        %v3128 = vpack.c.b16 %v3114, %v3113
        %v3129 = vpack.c.b16 %v3116, %v3115
        %v3130 = vpack.c.b16 %v3118, %v3117
        %v3131 = vpack.c.b16 %v3120, %v3119
        %v3132 = vpack.c.b16 %v3122, %v3121
        %v3133 = vpack.c.b16 %v3124, %v3123
        %v3134 = vpack.c.b16 %v3126, %v3125
        %3143 = vmatprep.subr.bf16.mxu0 0
        %3144 = vmatpush1.bf16.msra.mxu0 %v3127
        %3145 = vmatprep.subr.bf16.mxu0 0
        %3146 = vmatpush1.bf16.msra.mxu0 %v3128
        %3147 = vmatprep.subr.bf16.mxu0 0
        %3148 = vmatpush1.bf16.msra.mxu0 %v3129
        %3149 = vmatprep.subr.bf16.mxu0 0
        %3150 = vmatpush1.bf16.msra.mxu0 %v3130
        %3151 = vmatprep.subr.bf16.mxu0 0
        %3152 = vmatpush1.bf16.msra.mxu0 %v3131
        %3153 = vmatprep.subr.bf16.mxu0 0
        %3154 = vmatpush1.bf16.msra.mxu0 %v3132
        %3155 = vmatprep.subr.bf16.mxu0 0
        %3156 = vmatpush1.bf16.msra.mxu0 %v3133
        %3157 = vmatprep.subr.bf16.mxu0 0
        %3158 = vmatpush1.bf16.msra.mxu0 %v3134
        %3159 = vmatprep.subr.bf16.mxu0 0
        %3160 = vmatpush1.bf16.msra.mxu0 0
        %3161 = vmatprep.subr.bf16.mxu0 0
        %3162 = vmatpush1.bf16.msra.mxu0 0
        %3163 = vmatprep.subr.bf16.mxu0 0
        %3164 = vmatpush1.bf16.msra.mxu0 0
        %3165 = vmatprep.subr.bf16.mxu0 0
        %3166 = vmatpush1.bf16.msra.mxu0 0
        %3167 = vmatprep.subr.bf16.mxu0 0
        %3168 = vmatpush1.bf16.msra.mxu0 0
        %3169 = vmatprep.subr.bf16.mxu0 0
        %3170 = vmatpush1.bf16.msra.mxu0 0
        %3171 = vmatprep.subr.bf16.mxu0 0
        %3172 = vmatpush1.bf16.msra.mxu0 0
        %3173 = vmatprep.subr.bf16.mxu0 0
        %3174 = vmatpush1.bf16.msra.mxu0 0
        %3175 = vmatprep.mubr.bf16.mxu0 0
        %3176 = vmatmul.mubr.bf16.gmra.mrb[0].mxu0 %v3072
        %v3177 = vpop.f32.mrb[0].mxu0
        %v3178 = vadd.f32 %v3094, %v3177
        %v3179 = vpop.f32.mrb[0].mxu0
        %v3180 = vpop.f32.mrb[0].mxu0
        %v3181 = vpop.f32.mrb[0].mxu0
        %3182 = vdwg.mxu0
        %v3183 = vmax.f32 %v3178, 0.0
        %v3184 = vpack.c.bf16 %v3183, %v3183
        %s3185 = scalar_lea.vmem [#allocation5], 320
        %v3186 = vld [vmem:[%s3185] sm:$0xf]
        %v3187 = vld [vmem:[%s3185 + $0x4] sm:$0xf]
        %v3188 = vld [vmem:[%s3185 + $0x8] sm:$0xf]
        %v3189 = vld [vmem:[%s3185 + $0xc] sm:$0xf]
        %v3190 = vld [vmem:[%s3185 + $0x10] sm:$0xf]
        %v3191 = vld [vmem:[%s3185 + $0x14] sm:$0xf]
        %v3192 = vld [vmem:[%s3185 + $0x18] sm:$0xf]
        %v3193 = vld [vmem:[%s3185 + $0x1c] sm:$0xf]
        %v3194 = vld [vmem:[%s3185 + $0x20] sm:$0xf]
        %v3195 = vld [vmem:[%s3185 + $0x24] sm:$0xf]
        %v3196 = vld [vmem:[%s3185 + $0x28] sm:$0xf]
        %v3197 = vld [vmem:[%s3185 + $0x2c] sm:$0xf]
        %v3198 = vld [vmem:[%s3185 + $0x30] sm:$0xf]
        %v3199 = vld [vmem:[%s3185 + $0x34] sm:$0xf]
        %v3200 = vld [vmem:[%s3185 + $0x38] sm:$0xf]
        %v3201 = vld [vmem:[%s3185 + $0x3c] sm:$0xf]
        %v3202 = vld [vmem:[%s7 + $0x5] sm:$0x1]
        %v3203 = vlaneseq
        %v3204 = vshrl.u32 %v3203, 7
        %v3205 = vsub.s32 0, %v3204
        %v3206 = vrot.slane %v3202, %v3205
        %v3223 = vunpack.c.l.b16 %v3186
        %v3224 = vunpack.c.l.b16 %v3187
        %v3225 = vunpack.c.l.b16 %v3188
        %v3226 = vunpack.c.l.b16 %v3189
        %v3227 = vunpack.c.l.b16 %v3190
        %v3228 = vunpack.c.l.b16 %v3191
        %v3229 = vunpack.c.l.b16 %v3192
        %v3230 = vunpack.c.l.b16 %v3193
        %v3231 = vunpack.c.l.b16 %v3194
        %v3232 = vunpack.c.l.b16 %v3195
        %v3233 = vunpack.c.l.b16 %v3196
        %v3234 = vunpack.c.l.b16 %v3197
        %v3235 = vunpack.c.l.b16 %v3198
        %v3236 = vunpack.c.l.b16 %v3199
        %v3237 = vunpack.c.l.b16 %v3200
        %v3238 = vunpack.c.l.b16 %v3201
        %v3239 = vpack.c.b16 %v3224, %v3223
        %v3240 = vpack.c.b16 %v3226, %v3225
        %v3241 = vpack.c.b16 %v3228, %v3227
        %v3242 = vpack.c.b16 %v3230, %v3229
        %v3243 = vpack.c.b16 %v3232, %v3231
        %v3244 = vpack.c.b16 %v3234, %v3233
        %v3245 = vpack.c.b16 %v3236, %v3235
        %v3246 = vpack.c.b16 %v3238, %v3237
        %3255 = vmatprep.subr.bf16.mxu0 0
        %3256 = vmatpush1.bf16.msra.mxu0 %v3239
        %3257 = vmatprep.subr.bf16.mxu0 0
        %3258 = vmatpush1.bf16.msra.mxu0 %v3240
        %3259 = vmatprep.subr.bf16.mxu0 0
        %3260 = vmatpush1.bf16.msra.mxu0 %v3241
        %3261 = vmatprep.subr.bf16.mxu0 0
        %3262 = vmatpush1.bf16.msra.mxu0 %v3242
        %3263 = vmatprep.subr.bf16.mxu0 0
        %3264 = vmatpush1.bf16.msra.mxu0 %v3243
        %3265 = vmatprep.subr.bf16.mxu0 0
        %3266 = vmatpush1.bf16.msra.mxu0 %v3244
        %3267 = vmatprep.subr.bf16.mxu0 0
        %3268 = vmatpush1.bf16.msra.mxu0 %v3245
        %3269 = vmatprep.subr.bf16.mxu0 0
        %3270 = vmatpush1.bf16.msra.mxu0 %v3246
        %3271 = vmatprep.subr.bf16.mxu0 0
        %3272 = vmatpush1.bf16.msra.mxu0 0
        %3273 = vmatprep.subr.bf16.mxu0 0
        %3274 = vmatpush1.bf16.msra.mxu0 0
        %3275 = vmatprep.subr.bf16.mxu0 0
        %3276 = vmatpush1.bf16.msra.mxu0 0
        %3277 = vmatprep.subr.bf16.mxu0 0
        %3278 = vmatpush1.bf16.msra.mxu0 0
        %3279 = vmatprep.subr.bf16.mxu0 0
        %3280 = vmatpush1.bf16.msra.mxu0 0
        %3281 = vmatprep.subr.bf16.mxu0 0
        %3282 = vmatpush1.bf16.msra.mxu0 0
        %3283 = vmatprep.subr.bf16.mxu0 0
        %3284 = vmatpush1.bf16.msra.mxu0 0
        %3285 = vmatprep.subr.bf16.mxu0 0
        %3286 = vmatpush1.bf16.msra.mxu0 0
        %3287 = vmatprep.mubr.bf16.mxu0 0
        %3288 = vmatmul.mubr.bf16.gmra.mrb[0].mxu0 %v3184
        %v3289 = vpop.f32.mrb[0].mxu0
        %v3290 = vadd.f32 %v3206, %v3289
        %v3291 = vpop.f32.mrb[0].mxu0
        %v3292 = vpop.f32.mrb[0].mxu0
        %v3293 = vpop.f32.mrb[0].mxu0
        %3294 = vdwg.mxu0
        %3295 = vst [vmem:[%s371] sm:$0x3] %v3290
        %v3296 = vld [vmem:[#allocation2] sm:$0xf]
        %v3297 = vld [vmem:[#allocation2 + $0x4] sm:$0xf]
        %v3298 = vld [vmem:[#allocation2 + $0x8] sm:$0xf]
        %v3299 = vld [vmem:[#allocation2 + $0xc] sm:$0xf]
        %v3300 = vld [vmem:[#allocation2 + $0x10] sm:$0xf]
        %v3301 = vld [vmem:[#allocation2 + $0x14] sm:$0xf]
        %v3302 = vld [vmem:[#allocation2 + $0x18] sm:$0xf]
        %v3303 = vld [vmem:[#allocation2 + $0x1c] sm:$0xf]
        %v3304 = vld [vmem:[#allocation2 + $0x20] sm:$0xf]
        %v3305 = vld [vmem:[#allocation2 + $0x24] sm:$0xf]
        %v3306 = vld [vmem:[#allocation2 + $0x28] sm:$0xf]
        %v3307 = vld [vmem:[#allocation2 + $0x2c] sm:$0xf]
        %v3308 = vld [vmem:[#allocation2 + $0x30] sm:$0xf]
        %v3309 = vld [vmem:[#allocation2 + $0x34] sm:$0xf]
        %v3310 = vld [vmem:[#allocation2 + $0x38] sm:$0xf]
        %v3311 = vld [vmem:[#allocation2 + $0x3c] sm:$0xf]
        %v3328 = vunpack.c.l.b16 %v3296
        %v3329 = vunpack.c.l.b16 %v3297
        %v3330 = vunpack.c.l.b16 %v3298
        %v3331 = vunpack.c.l.b16 %v3299
        %v3332 = vunpack.c.l.b16 %v3300
        %v3333 = vunpack.c.l.b16 %v3301
        %v3334 = vunpack.c.l.b16 %v3302
        %v3335 = vunpack.c.l.b16 %v3303
        %v3336 = vunpack.c.l.b16 %v3304
        %v3337 = vunpack.c.l.b16 %v3305
        %v3338 = vunpack.c.l.b16 %v3306
        %v3339 = vunpack.c.l.b16 %v3307
        %v3340 = vunpack.c.l.b16 %v3308
        %v3341 = vunpack.c.l.b16 %v3309
        %v3342 = vunpack.c.l.b16 %v3310
        %v3343 = vunpack.c.l.b16 %v3311
        %v3344 = vpack.c.b16 %v3329, %v3328
        %v3345 = vpack.c.b16 %v3331, %v3330
        %v3346 = vpack.c.b16 %v3333, %v3332
        %v3347 = vpack.c.b16 %v3335, %v3334
        %v3348 = vpack.c.b16 %v3337, %v3336
        %v3349 = vpack.c.b16 %v3339, %v3338
        %v3350 = vpack.c.b16 %v3341, %v3340
        %v3351 = vpack.c.b16 %v3343, %v3342
        %3360 = vmatprep.subr.bf16.mxu0 0
        %3361 = vmatpush1.bf16.msra.mxu0 %v3344
        %3362 = vmatprep.subr.bf16.mxu0 0
        %3363 = vmatpush1.bf16.msra.mxu0 %v3345
        %3364 = vmatprep.subr.bf16.mxu0 0
        %3365 = vmatpush1.bf16.msra.mxu0 %v3346
        %3366 = vmatprep.subr.bf16.mxu0 0
        %3367 = vmatpush1.bf16.msra.mxu0 %v3347
        %3368 = vmatprep.subr.bf16.mxu0 0
        %3369 = vmatpush1.bf16.msra.mxu0 %v3348
        %3370 = vmatprep.subr.bf16.mxu0 0
        %3371 = vmatpush1.bf16.msra.mxu0 %v3349
        %3372 = vmatprep.subr.bf16.mxu0 0
        %3373 = vmatpush1.bf16.msra.mxu0 %v3350
        %3374 = vmatprep.subr.bf16.mxu0 0
        %3375 = vmatpush1.bf16.msra.mxu0 %v3351
        %3376 = vmatprep.subr.bf16.mxu0 0
        %3377 = vmatpush1.bf16.msra.mxu0 0
        %3378 = vmatprep.subr.bf16.mxu0 0
        %3379 = vmatpush1.bf16.msra.mxu0 0
        %3380 = vmatprep.subr.bf16.mxu0 0
        %3381 = vmatpush1.bf16.msra.mxu0 0
        %3382 = vmatprep.subr.bf16.mxu0 0
        %3383 = vmatpush1.bf16.msra.mxu0 0
        %3384 = vmatprep.subr.bf16.mxu0 0
        %3385 = vmatpush1.bf16.msra.mxu0 0
        %3386 = vmatprep.subr.bf16.mxu0 0
        %3387 = vmatpush1.bf16.msra.mxu0 0
        %3388 = vmatprep.subr.bf16.mxu0 0
        %3389 = vmatpush1.bf16.msra.mxu0 0
        %3390 = vmatprep.subr.bf16.mxu0 0
        %3391 = vmatpush1.bf16.msra.mxu0 0
        %3392 = vmatprep.mubr.bf16.mxu0 0
        %3393 = vmatmul.mubr.bf16.gmra.mrb[0].mxu0 %v2436
        %v3394 = vpop.f32.mrb[0].mxu0
        %v3395 = vadd.f32 0.0, %v3394
        %v3396 = vpop.f32.mrb[0].mxu0
        %v3397 = vpop.f32.mrb[0].mxu0
        %v3398 = vadd.f32 0.0, %v3397
        %v3399 = vpop.f32.mrb[0].mxu0
        %3400 = vmatprep.mubr.bf16.mxu0 0
        %3401 = vmatmul.mubr.bf16.gmra.mrb[0].mxu0 %v2437
        %v3402 = vpop.f32.mrb[0].mxu0
        %v3403 = vadd.f32 0.0, %v3402
        %v3404 = vpop.f32.mrb[0].mxu0
        %v3405 = vpop.f32.mrb[0].mxu0
        %v3406 = vadd.f32 0.0, %v3405
        %v3407 = vpop.f32.mrb[0].mxu0
        %3408 = vdwg.mxu0
        %v3409 = vpack.c.bf16 %v3398, %v3395
        %v3410 = vpack.c.bf16 %v3406, %v3403
        %v3411 = vld [vmem:[%s736] sm:$0xf]
        %v3412 = vld [vmem:[%s736 + $0x4] sm:$0xf]
        %v3413 = vld [vmem:[%s736 + $0x8] sm:$0xf]
        %v3414 = vld [vmem:[%s736 + $0xc] sm:$0xf]
        %v3415 = vld [vmem:[%s736 + $0x10] sm:$0xf]
        %v3416 = vld [vmem:[%s736 + $0x14] sm:$0xf]
        %v3417 = vld [vmem:[%s736 + $0x18] sm:$0xf]
        %v3418 = vld [vmem:[%s736 + $0x1c] sm:$0xf]
        %v3419 = vld [vmem:[%s736 + $0x20] sm:$0xf]
        %v3420 = vld [vmem:[%s736 + $0x24] sm:$0xf]
        %v3421 = vld [vmem:[%s736 + $0x28] sm:$0xf]
        %v3422 = vld [vmem:[%s736 + $0x2c] sm:$0xf]
        %v3423 = vld [vmem:[%s736 + $0x30] sm:$0xf]
        %v3424 = vld [vmem:[%s736 + $0x34] sm:$0xf]
        %v3425 = vld [vmem:[%s736 + $0x38] sm:$0xf]
        %v3426 = vld [vmem:[%s736 + $0x3c] sm:$0xf]
        %v3443 = vunpack.c.l.b16 %v3411
        %v3444 = vunpack.c.l.b16 %v3412
        %v3445 = vunpack.c.l.b16 %v3413
        %v3446 = vunpack.c.l.b16 %v3414
        %v3447 = vunpack.c.l.b16 %v3415
        %v3448 = vunpack.c.l.b16 %v3416
        %v3449 = vunpack.c.l.b16 %v3417
        %v3450 = vunpack.c.l.b16 %v3418
        %v3451 = vunpack.c.l.b16 %v3419
        %v3452 = vunpack.c.l.b16 %v3420
        %v3453 = vunpack.c.l.b16 %v3421
        %v3454 = vunpack.c.l.b16 %v3422
        %v3455 = vunpack.c.l.b16 %v3423
        %v3456 = vunpack.c.l.b16 %v3424
        %v3457 = vunpack.c.l.b16 %v3425
        %v3458 = vunpack.c.l.b16 %v3426
        %v3459 = vpack.c.b16 %v3444, %v3443
        %v3460 = vpack.c.b16 %v3446, %v3445
        %v3461 = vpack.c.b16 %v3448, %v3447
        %v3462 = vpack.c.b16 %v3450, %v3449
        %v3463 = vpack.c.b16 %v3452, %v3451
        %v3464 = vpack.c.b16 %v3454, %v3453
        %v3465 = vpack.c.b16 %v3456, %v3455
        %v3466 = vpack.c.b16 %v3458, %v3457
        %3475 = vmatprep.subr.bf16.mxu0 0
        %3476 = vmatpush1.bf16.msra.mxu0 %v3459
        %3477 = vmatprep.subr.bf16.mxu0 0
        %3478 = vmatpush1.bf16.msra.mxu0 %v3460
        %3479 = vmatprep.subr.bf16.mxu0 0
        %3480 = vmatpush1.bf16.msra.mxu0 %v3461
        %3481 = vmatprep.subr.bf16.mxu0 0
        %3482 = vmatpush1.bf16.msra.mxu0 %v3462
        %3483 = vmatprep.subr.bf16.mxu0 0
        %3484 = vmatpush1.bf16.msra.mxu0 %v3463
        %3485 = vmatprep.subr.bf16.mxu0 0
        %3486 = vmatpush1.bf16.msra.mxu0 %v3464
        %3487 = vmatprep.subr.bf16.mxu0 0
        %3488 = vmatpush1.bf16.msra.mxu0 %v3465
        %3489 = vmatprep.subr.bf16.mxu0 0
        %3490 = vmatpush1.bf16.msra.mxu0 %v3466
        %3491 = vmatprep.subr.bf16.mxu0 0
        %3492 = vmatpush1.bf16.msra.mxu0 0
        %3493 = vmatprep.subr.bf16.mxu0 0
        %3494 = vmatpush1.bf16.msra.mxu0 0
        %3495 = vmatprep.subr.bf16.mxu0 0
        %3496 = vmatpush1.bf16.msra.mxu0 0
        %3497 = vmatprep.subr.bf16.mxu0 0
        %3498 = vmatpush1.bf16.msra.mxu0 0
        %3499 = vmatprep.subr.bf16.mxu0 0
        %3500 = vmatpush1.bf16.msra.mxu0 0
        %3501 = vmatprep.subr.bf16.mxu0 0
        %3502 = vmatpush1.bf16.msra.mxu0 0
        %3503 = vmatprep.subr.bf16.mxu0 0
        %3504 = vmatpush1.bf16.msra.mxu0 0
        %3505 = vmatprep.subr.bf16.mxu0 0
        %3506 = vmatpush1.bf16.msra.mxu0 0
        %3507 = vmatprep.mubr.bf16.mxu0 0
        %3508 = vmatmul.mubr.bf16.gmra.mrb[0].mxu0 %v2436
        %v3509 = vpop.f32.mrb[0].mxu0
        %v3510 = vadd.f32 0.0, %v3509
        %v3511 = vpop.f32.mrb[0].mxu0
        %v3512 = vpop.f32.mrb[0].mxu0
        %v3513 = vadd.f32 0.0, %v3512
        %v3514 = vpop.f32.mrb[0].mxu0
        %3515 = vmatprep.mubr.bf16.mxu0 0
        %3516 = vmatmul.mubr.bf16.gmra.mrb[0].mxu0 %v2437
        %v3517 = vpop.f32.mrb[0].mxu0
        %v3518 = vadd.f32 0.0, %v3517
        %v3519 = vpop.f32.mrb[0].mxu0
        %v3520 = vpop.f32.mrb[0].mxu0
        %v3521 = vadd.f32 0.0, %v3520
        %v3522 = vpop.f32.mrb[0].mxu0
        %3523 = vdwg.mxu0
        %v3524 = vpack.c.bf16 %v3513, %v3510
        %v3525 = vpack.c.bf16 %v3521, %v3518
        %v3526 = vld [vmem:[%s852] sm:$0xf]
        %v3527 = vld [vmem:[%s852 + $0x4] sm:$0xf]
        %v3528 = vld [vmem:[%s852 + $0x8] sm:$0xf]
        %v3529 = vld [vmem:[%s852 + $0xc] sm:$0xf]
        %v3530 = vld [vmem:[%s852 + $0x10] sm:$0xf]
        %v3531 = vld [vmem:[%s852 + $0x14] sm:$0xf]
        %v3532 = vld [vmem:[%s852 + $0x18] sm:$0xf]
        %v3533 = vld [vmem:[%s852 + $0x1c] sm:$0xf]
        %v3534 = vld [vmem:[%s852 + $0x20] sm:$0xf]
        %v3535 = vld [vmem:[%s852 + $0x24] sm:$0xf]
        %v3536 = vld [vmem:[%s852 + $0x28] sm:$0xf]
        %v3537 = vld [vmem:[%s852 + $0x2c] sm:$0xf]
        %v3538 = vld [vmem:[%s852 + $0x30] sm:$0xf]
        %v3539 = vld [vmem:[%s852 + $0x34] sm:$0xf]
        %v3540 = vld [vmem:[%s852 + $0x38] sm:$0xf]
        %v3541 = vld [vmem:[%s852 + $0x3c] sm:$0xf]
        %v3558 = vunpack.c.l.b16 %v3526
        %v3559 = vunpack.c.l.b16 %v3527
        %v3560 = vunpack.c.l.b16 %v3528
        %v3561 = vunpack.c.l.b16 %v3529
        %v3562 = vunpack.c.l.b16 %v3530
        %v3563 = vunpack.c.l.b16 %v3531
        %v3564 = vunpack.c.l.b16 %v3532
        %v3565 = vunpack.c.l.b16 %v3533
        %v3566 = vunpack.c.l.b16 %v3534
        %v3567 = vunpack.c.l.b16 %v3535
        %v3568 = vunpack.c.l.b16 %v3536
        %v3569 = vunpack.c.l.b16 %v3537
        %v3570 = vunpack.c.l.b16 %v3538
        %v3571 = vunpack.c.l.b16 %v3539
        %v3572 = vunpack.c.l.b16 %v3540
        %v3573 = vunpack.c.l.b16 %v3541
        %v3574 = vpack.c.b16 %v3559, %v3558
        %v3575 = vpack.c.b16 %v3561, %v3560
        %v3576 = vpack.c.b16 %v3563, %v3562
        %v3577 = vpack.c.b16 %v3565, %v3564
        %v3578 = vpack.c.b16 %v3567, %v3566
        %v3579 = vpack.c.b16 %v3569, %v3568
        %v3580 = vpack.c.b16 %v3571, %v3570
        %v3581 = vpack.c.b16 %v3573, %v3572
        %3590 = vmatprep.subr.bf16.mxu0 0
        %3591 = vmatpush1.bf16.msra.mxu0 %v3574
        %3592 = vmatprep.subr.bf16.mxu0 0
        %3593 = vmatpush1.bf16.msra.mxu0 %v3575
        %3594 = vmatprep.subr.bf16.mxu0 0
        %3595 = vmatpush1.bf16.msra.mxu0 %v3576
        %3596 = vmatprep.subr.bf16.mxu0 0
        %3597 = vmatpush1.bf16.msra.mxu0 %v3577
        %3598 = vmatprep.subr.bf16.mxu0 0
        %3599 = vmatpush1.bf16.msra.mxu0 %v3578
        %3600 = vmatprep.subr.bf16.mxu0 0
        %3601 = vmatpush1.bf16.msra.mxu0 %v3579
        %3602 = vmatprep.subr.bf16.mxu0 0
        %3603 = vmatpush1.bf16.msra.mxu0 %v3580
        %3604 = vmatprep.subr.bf16.mxu0 0
        %3605 = vmatpush1.bf16.msra.mxu0 %v3581
        %3606 = vmatprep.subr.bf16.mxu0 0
        %3607 = vmatpush1.bf16.msra.mxu0 0
        %3608 = vmatprep.subr.bf16.mxu0 0
        %3609 = vmatpush1.bf16.msra.mxu0 0
        %3610 = vmatprep.subr.bf16.mxu0 0
        %3611 = vmatpush1.bf16.msra.mxu0 0
        %3612 = vmatprep.subr.bf16.mxu0 0
        %3613 = vmatpush1.bf16.msra.mxu0 0
        %3614 = vmatprep.subr.bf16.mxu0 0
        %3615 = vmatpush1.bf16.msra.mxu0 0
        %3616 = vmatprep.subr.bf16.mxu0 0
        %3617 = vmatpush1.bf16.msra.mxu0 0
        %3618 = vmatprep.subr.bf16.mxu0 0
        %3619 = vmatpush1.bf16.msra.mxu0 0
        %3620 = vmatprep.subr.bf16.mxu0 0
        %3621 = vmatpush1.bf16.msra.mxu0 0
        %3622 = vmatprep.mubr.bf16.mxu0 0
        %3623 = vmatmul.mubr.bf16.gmra.mrb[0].mxu0 %v3072
        %v3624 = vpop.f32.mrb[0].mxu0
        %v3625 = vadd.f32 0.0, %v3624
        %v3626 = vpop.f32.mrb[0].mxu0
        %v3627 = vpop.f32.mrb[0].mxu0
        %v3628 = vpop.f32.mrb[0].mxu0
        %3629 = vdwg.mxu0
        %v3630 = vpack.c.bf16 %v3625, %v3625
        %3631 = vmatprep.subr.bf16.mxu0 0
        %3632 = vmatpush1.bf16.msra.mxu0 %v3524
        %3633 = vmatprep.subr.bf16.mxu0 0
        %3634 = vmatpush1.bf16.msra.mxu0 %v3525
        %3635 = vmatprep.subr.bf16.mxu0 0
        %3636 = vmatpush1.bf16.msra.mxu0 0
        %3637 = vmatprep.subr.bf16.mxu0 0
        %3638 = vmatpush1.bf16.msra.mxu0 0
        %3639 = vmatprep.subr.bf16.mxu0 0
        %3640 = vmatpush1.bf16.msra.mxu0 0
        %3641 = vmatprep.subr.bf16.mxu0 0
        %3642 = vmatpush1.bf16.msra.mxu0 0
        %3643 = vmatprep.subr.bf16.mxu0 0
        %3644 = vmatpush1.bf16.msra.mxu0 0
        %3645 = vmatprep.subr.bf16.mxu0 0
        %3646 = vmatpush1.bf16.msra.mxu0 0
        %3647 = vmatprep.subr.bf16.mxu0 0
        %3648 = vmatpush1.bf16.msra.mxu0 0
        %3649 = vmatprep.subr.bf16.mxu0 0
        %3650 = vmatpush1.bf16.msra.mxu0 0
        %3651 = vmatprep.subr.bf16.mxu0 0
        %3652 = vmatpush1.bf16.msra.mxu0 0
        %3653 = vmatprep.subr.bf16.mxu0 0
        %3654 = vmatpush1.bf16.msra.mxu0 0
        %3655 = vmatprep.subr.bf16.mxu0 0
        %3656 = vmatpush1.bf16.msra.mxu0 0
        %3657 = vmatprep.subr.bf16.mxu0 0
        %3658 = vmatpush1.bf16.msra.mxu0 0
        %3659 = vmatprep.subr.bf16.mxu0 0
        %3660 = vmatpush1.bf16.msra.mxu0 0
        %3661 = vmatprep.subr.bf16.mxu0 0
        %3662 = vmatpush1.bf16.msra.mxu0 0
        %3663 = vmatprep.mubr.bf16.mxu0 0
        %3664 = vmatmul.mubr.bf16.gmra.mrb[0].mxu0 %v960
        %v3665 = vpop.f32.mrb[0].mxu0
        %v3666 = vadd.f32 0.0, %v3665
        %v3667 = vpop.f32.mrb[0].mxu0
        %v3668 = vpop.f32.mrb[0].mxu0
        %v3669 = vadd.f32 0.0, %v3668
        %v3670 = vpop.f32.mrb[0].mxu0
        %3671 = vmatprep.mubr.bf16.mxu0 0
        %3672 = vmatmul.mubr.bf16.gmra.mrb[0].mxu0 %v963
        %v3673 = vpop.f32.mrb[0].mxu0
        %v3674 = vadd.f32 0.0, %v3673
        %v3675 = vpop.f32.mrb[0].mxu0
        %v3676 = vpop.f32.mrb[0].mxu0
        %v3677 = vadd.f32 0.0, %v3676
        %v3678 = vpop.f32.mrb[0].mxu0
        %3679 = vmatprep.mubr.bf16.mxu0 0
        %3680 = vmatmul.mubr.bf16.gmra.mrb[0].mxu0 %v966
        %v3681 = vpop.f32.mrb[0].mxu0
        %v3682 = vadd.f32 0.0, %v3681
        %v3683 = vpop.f32.mrb[0].mxu0
        %v3684 = vpop.f32.mrb[0].mxu0
        %v3685 = vadd.f32 0.0, %v3684
        %v3686 = vpop.f32.mrb[0].mxu0
        %3687 = vmatprep.mubr.bf16.mxu0 0
        %3688 = vmatmul.mubr.bf16.gmra.mrb[0].mxu0 %v969
        %v3689 = vpop.f32.mrb[0].mxu0
        %v3690 = vadd.f32 0.0, %v3689
        %v3691 = vpop.f32.mrb[0].mxu0
        %v3692 = vpop.f32.mrb[0].mxu0
        %v3693 = vadd.f32 0.0, %v3692
        %v3694 = vpop.f32.mrb[0].mxu0
        %3695 = vdwg.mxu0
        %3696 = vmatprep.subr.bf16.mxu0 0
        %3697 = vmatpush1.bf16.msra.mxu0 %v3409
        %3698 = vmatprep.subr.bf16.mxu0 0
        %3699 = vmatpush1.bf16.msra.mxu0 %v3410
        %3700 = vmatprep.subr.bf16.mxu0 0
        %3701 = vmatpush1.bf16.msra.mxu0 0
        %3702 = vmatprep.subr.bf16.mxu0 0
        %3703 = vmatpush1.bf16.msra.mxu0 0
        %3704 = vmatprep.subr.bf16.mxu0 0
        %3705 = vmatpush1.bf16.msra.mxu0 0
        %3706 = vmatprep.subr.bf16.mxu0 0
        %3707 = vmatpush1.bf16.msra.mxu0 0
        %3708 = vmatprep.subr.bf16.mxu0 0
        %3709 = vmatpush1.bf16.msra.mxu0 0
        %3710 = vmatprep.subr.bf16.mxu0 0
        %3711 = vmatpush1.bf16.msra.mxu0 0
        %3712 = vmatprep.subr.bf16.mxu0 0
        %3713 = vmatpush1.bf16.msra.mxu0 0
        %3714 = vmatprep.subr.bf16.mxu0 0
        %3715 = vmatpush1.bf16.msra.mxu0 0
        %3716 = vmatprep.subr.bf16.mxu0 0
        %3717 = vmatpush1.bf16.msra.mxu0 0
        %3718 = vmatprep.subr.bf16.mxu0 0
        %3719 = vmatpush1.bf16.msra.mxu0 0
        %3720 = vmatprep.subr.bf16.mxu0 0
        %3721 = vmatpush1.bf16.msra.mxu0 0
        %3722 = vmatprep.subr.bf16.mxu0 0
        %3723 = vmatpush1.bf16.msra.mxu0 0
        %3724 = vmatprep.subr.bf16.mxu0 0
        %3725 = vmatpush1.bf16.msra.mxu0 0
        %3726 = vmatprep.subr.bf16.mxu0 0
        %3727 = vmatpush1.bf16.msra.mxu0 0
        %3728 = vmatprep.mubr.bf16.mxu0 0
        %3729 = vmatmul.mubr.bf16.gmra.mrb[0].mxu0 %v1037
        %v3730 = vpop.f32.mrb[0].mxu0
        %v3731 = vadd.f32 %v3666, %v3730
        %v3732 = vpop.f32.mrb[0].mxu0
        %v3733 = vpop.f32.mrb[0].mxu0
        %v3734 = vadd.f32 %v3669, %v3733
        %v3735 = vpop.f32.mrb[0].mxu0
        %3736 = vmatprep.mubr.bf16.mxu0 0
        %3737 = vmatmul.mubr.bf16.gmra.mrb[0].mxu0 %v1040
        %v3738 = vpop.f32.mrb[0].mxu0
        %v3739 = vadd.f32 %v3674, %v3738
        %v3740 = vpop.f32.mrb[0].mxu0
        %v3741 = vpop.f32.mrb[0].mxu0
        %v3742 = vadd.f32 %v3677, %v3741
        %v3743 = vpop.f32.mrb[0].mxu0
        %3744 = vmatprep.mubr.bf16.mxu0 0
        %3745 = vmatmul.mubr.bf16.gmra.mrb[0].mxu0 %v1043
        %v3746 = vpop.f32.mrb[0].mxu0
        %v3747 = vadd.f32 %v3682, %v3746
        %v3748 = vpop.f32.mrb[0].mxu0
        %v3749 = vpop.f32.mrb[0].mxu0
        %v3750 = vadd.f32 %v3685, %v3749
        %v3751 = vpop.f32.mrb[0].mxu0
        %3752 = vmatprep.mubr.bf16.mxu0 0
        %3753 = vmatmul.mubr.bf16.gmra.mrb[0].mxu0 %v1046
        %v3754 = vpop.f32.mrb[0].mxu0
        %v3755 = vadd.f32 %v3690, %v3754
        %v3756 = vpop.f32.mrb[0].mxu0
        %v3757 = vpop.f32.mrb[0].mxu0
        %v3758 = vadd.f32 %v3693, %v3757
        %v3759 = vpop.f32.mrb[0].mxu0
        %3760 = vdwg.mxu0
        %v3761 = vld [vmem:[%s1113] sm:$0xf]
        %v3762 = vld [vmem:[%s1113 + $0x4] sm:$0xf]
        %v3763 = vld [vmem:[%s1113 + $0x8] sm:$0xf]
        %v3764 = vld [vmem:[%s1113 + $0xc] sm:$0xf]
        %v3765 = vld [vmem:[%s1113 + $0x10] sm:$0xf]
        %v3766 = vld [vmem:[%s1113 + $0x14] sm:$0xf]
        %v3767 = vld [vmem:[%s1113 + $0x18] sm:$0xf]
        %v3768 = vld [vmem:[%s1113 + $0x1c] sm:$0xf]
        %v3769 = vld [vmem:[%s1113 + $0x20] sm:$0xf]
        %v3770 = vld [vmem:[%s1113 + $0x24] sm:$0xf]
        %v3771 = vld [vmem:[%s1113 + $0x28] sm:$0xf]
        %v3772 = vld [vmem:[%s1113 + $0x2c] sm:$0xf]
        %v3773 = vld [vmem:[%s1113 + $0x30] sm:$0xf]
        %v3774 = vld [vmem:[%s1113 + $0x34] sm:$0xf]
        %v3775 = vld [vmem:[%s1113 + $0x38] sm:$0xf]
        %v3776 = vld [vmem:[%s1113 + $0x3c] sm:$0xf]
        %v3793 = vunpack.c.l.b16 %v3761
        %v3794 = vunpack.c.l.b16 %v3762
        %v3795 = vunpack.c.l.b16 %v3763
        %v3796 = vunpack.c.l.b16 %v3764
        %v3797 = vunpack.c.l.b16 %v3765
        %v3798 = vunpack.c.l.b16 %v3766
        %v3799 = vunpack.c.l.b16 %v3767
        %v3800 = vunpack.c.l.b16 %v3768
        %v3801 = vunpack.c.l.b16 %v3769
        %v3802 = vunpack.c.l.b16 %v3770
        %v3803 = vunpack.c.l.b16 %v3771
        %v3804 = vunpack.c.l.b16 %v3772
        %v3805 = vunpack.c.l.b16 %v3773
        %v3806 = vunpack.c.l.b16 %v3774
        %v3807 = vunpack.c.l.b16 %v3775
        %v3808 = vunpack.c.l.b16 %v3776
        %v3809 = vpack.c.b16 %v3794, %v3793
        %v3810 = vpack.c.b16 %v3796, %v3795
        %v3811 = vpack.c.b16 %v3798, %v3797
        %v3812 = vpack.c.b16 %v3800, %v3799
        %v3813 = vpack.c.b16 %v3802, %v3801
        %v3814 = vpack.c.b16 %v3804, %v3803
        %v3815 = vpack.c.b16 %v3806, %v3805
        %v3816 = vpack.c.b16 %v3808, %v3807
        %3825 = vmatprep.subr.bf16.mxu0 0
        %3826 = vmatpush1.bf16.msra.mxu0 %v3809
        %3827 = vmatprep.subr.bf16.mxu0 0
        %3828 = vmatpush1.bf16.msra.mxu0 %v3810
        %3829 = vmatprep.subr.bf16.mxu0 0
        %3830 = vmatpush1.bf16.msra.mxu0 %v3811
        %3831 = vmatprep.subr.bf16.mxu0 0
        %3832 = vmatpush1.bf16.msra.mxu0 %v3812
        %3833 = vmatprep.subr.bf16.mxu0 0
        %3834 = vmatpush1.bf16.msra.mxu0 %v3813
        %3835 = vmatprep.subr.bf16.mxu0 0
        %3836 = vmatpush1.bf16.msra.mxu0 %v3814
        %3837 = vmatprep.subr.bf16.mxu0 0
        %3838 = vmatpush1.bf16.msra.mxu0 %v3815
        %3839 = vmatprep.subr.bf16.mxu0 0
        %3840 = vmatpush1.bf16.msra.mxu0 %v3816
        %3841 = vmatprep.subr.bf16.mxu0 0
        %3842 = vmatpush1.bf16.msra.mxu0 0
        %3843 = vmatprep.subr.bf16.mxu0 0
        %3844 = vmatpush1.bf16.msra.mxu0 0
        %3845 = vmatprep.subr.bf16.mxu0 0
        %3846 = vmatpush1.bf16.msra.mxu0 0
        %3847 = vmatprep.subr.bf16.mxu0 0
        %3848 = vmatpush1.bf16.msra.mxu0 0
        %3849 = vmatprep.subr.bf16.mxu0 0
        %3850 = vmatpush1.bf16.msra.mxu0 0
        %3851 = vmatprep.subr.bf16.mxu0 0
        %3852 = vmatpush1.bf16.msra.mxu0 0
        %3853 = vmatprep.subr.bf16.mxu0 0
        %3854 = vmatpush1.bf16.msra.mxu0 0
        %3855 = vmatprep.subr.bf16.mxu0 0
        %3856 = vmatpush1.bf16.msra.mxu0 0
        %3857 = vmatprep.mubr.bf16.mxu0 0
        %3858 = vmatmul.mubr.bf16.gmra.mrb[0].mxu0 %v1524
        %v3859 = vpop.f32.mrb[0].mxu0
        %v3860 = vadd.f32 0.0, %v3859
        %v3861 = vpop.f32.mrb[0].mxu0
        %v3862 = vpop.f32.mrb[0].mxu0
        %v3863 = vadd.f32 0.0, %v3862
        %v3864 = vpop.f32.mrb[0].mxu0
        %3865 = vmatprep.mubr.bf16.mxu0 0
        %3866 = vmatmul.mubr.bf16.gmra.mrb[0].mxu0 %v1525
        %v3867 = vpop.f32.mrb[0].mxu0
        %v3868 = vadd.f32 0.0, %v3867
        %v3869 = vpop.f32.mrb[0].mxu0
        %v3870 = vpop.f32.mrb[0].mxu0
        %v3871 = vadd.f32 0.0, %v3870
        %v3872 = vpop.f32.mrb[0].mxu0
        %3873 = vmatprep.mubr.bf16.mxu0 0
        %3874 = vmatmul.mubr.bf16.gmra.mrb[0].mxu0 %v1526
        %v3875 = vpop.f32.mrb[0].mxu0
        %v3876 = vadd.f32 0.0, %v3875
        %v3877 = vpop.f32.mrb[0].mxu0
        %v3878 = vpop.f32.mrb[0].mxu0
        %v3879 = vadd.f32 0.0, %v3878
        %v3880 = vpop.f32.mrb[0].mxu0
        %3881 = vmatprep.mubr.bf16.mxu0 0
        %3882 = vmatmul.mubr.bf16.gmra.mrb[0].mxu0 %v1527
        %v3883 = vpop.f32.mrb[0].mxu0
        %v3884 = vadd.f32 0.0, %v3883
        %v3885 = vpop.f32.mrb[0].mxu0
        %v3886 = vpop.f32.mrb[0].mxu0
        %v3887 = vadd.f32 0.0, %v3886
        %v3888 = vpop.f32.mrb[0].mxu0
        %3889 = vdwg.mxu0
        %v3890 = vadd.f32 %v3731, %v3860
        %v3891 = vadd.f32 %v3734, %v3863
        %v3892 = vadd.f32 %v3739, %v3868
        %v3893 = vadd.f32 %v3742, %v3871
        %v3894 = vadd.f32 %v3747, %v3876
        %v3895 = vadd.f32 %v3750, %v3879
        %v3896 = vadd.f32 %v3755, %v3884
        %v3897 = vadd.f32 %v3758, %v3887
        %v3899 = vsel %vm1288, %v3630, 0
        %3901 = vmatprep.subr.bf16.mxu0 0
        %3902 = vmatpush1.bf16.msra.mxu0 %v3899
        %3903 = vmatprep.subr.bf16.mxu0 0
        %3904 = vmatpush1.bf16.msra.mxu0 0
        %3905 = vmatprep.subr.bf16.mxu0 0
        %3906 = vmatpush1.bf16.msra.mxu0 0
        %3907 = vmatprep.subr.bf16.mxu0 0
        %3908 = vmatpush1.bf16.msra.mxu0 0
        %3909 = vmatprep.subr.bf16.mxu0 0
        %3910 = vmatpush1.bf16.msra.mxu0 0
        %3911 = vmatprep.subr.bf16.mxu0 0
        %3912 = vmatpush1.bf16.msra.mxu0 0
        %3913 = vmatprep.subr.bf16.mxu0 0
        %3914 = vmatpush1.bf16.msra.mxu0 0
        %3915 = vmatprep.subr.bf16.mxu0 0
        %3916 = vmatpush1.bf16.msra.mxu0 0
        %3917 = vmatprep.subr.bf16.mxu0 0
        %3918 = vmatpush1.bf16.msra.mxu0 0
        %3919 = vmatprep.subr.bf16.mxu0 0
        %3920 = vmatpush1.bf16.msra.mxu0 0
        %3921 = vmatprep.subr.bf16.mxu0 0
        %3922 = vmatpush1.bf16.msra.mxu0 0
        %3923 = vmatprep.subr.bf16.mxu0 0
        %3924 = vmatpush1.bf16.msra.mxu0 0
        %3925 = vmatprep.subr.bf16.mxu0 0
        %3926 = vmatpush1.bf16.msra.mxu0 0
        %3927 = vmatprep.subr.bf16.mxu0 0
        %3928 = vmatpush1.bf16.msra.mxu0 0
        %3929 = vmatprep.subr.bf16.mxu0 0
        %3930 = vmatpush1.bf16.msra.mxu0 0
        %3931 = vmatprep.subr.bf16.mxu0 0
        %3932 = vmatpush1.bf16.msra.mxu0 0
        %3933 = vmatprep.mubr.bf16.mxu0 0
        %3934 = vmatmul.mubr.bf16.gmra.mrb[0].mxu0 %v1277
        %v3935 = vpop.f32.mrb[0].mxu0
        %v3936 = vadd.f32 0.0, %v3935
        %v3937 = vpop.f32.mrb[0].mxu0
        %v3938 = vpop.f32.mrb[0].mxu0
        %v3939 = vadd.f32 0.0, %v3938
        %v3940 = vpop.f32.mrb[0].mxu0
        %3941 = vmatprep.mubr.bf16.mxu0 0
        %3942 = vmatmul.mubr.bf16.gmra.mrb[0].mxu0 %v1280
        %v3943 = vpop.f32.mrb[0].mxu0
        %v3944 = vadd.f32 0.0, %v3943
        %v3945 = vpop.f32.mrb[0].mxu0
        %v3946 = vpop.f32.mrb[0].mxu0
        %v3947 = vadd.f32 0.0, %v3946
        %v3948 = vpop.f32.mrb[0].mxu0
        %3949 = vmatprep.mubr.bf16.mxu0 0
        %3950 = vmatmul.mubr.bf16.gmra.mrb[0].mxu0 %v1283
        %v3951 = vpop.f32.mrb[0].mxu0
        %v3952 = vadd.f32 0.0, %v3951
        %v3953 = vpop.f32.mrb[0].mxu0
        %v3954 = vpop.f32.mrb[0].mxu0
        %v3955 = vadd.f32 0.0, %v3954
        %v3956 = vpop.f32.mrb[0].mxu0
        %3957 = vmatprep.mubr.bf16.mxu0 0
        %3958 = vmatmul.mubr.bf16.gmra.mrb[0].mxu0 %v1286
        %v3959 = vpop.f32.mrb[0].mxu0
        %v3960 = vadd.f32 0.0, %v3959
        %v3961 = vpop.f32.mrb[0].mxu0
        %v3962 = vpop.f32.mrb[0].mxu0
        %v3963 = vadd.f32 0.0, %v3962
        %v3964 = vpop.f32.mrb[0].mxu0
        %3965 = vdwg.mxu0
        %v3966 = vadd.f32 %v3890, %v3936
        %v3967 = vadd.f32 %v3891, %v3939
        %v3968 = vadd.f32 %v3892, %v3944
        %v3969 = vadd.f32 %v3893, %v3947
        %v3970 = vadd.f32 %v3894, %v3952
        %v3971 = vadd.f32 %v3895, %v3955
        %v3972 = vadd.f32 %v3896, %v3960
        %v3973 = vadd.f32 %v3897, %v3963
        %v3974 = vld [vmem:[%s5] sm:$0x1]
        %v3975 = vlaneseq
        %v3976 = vshrl.u32 %v3975, 7
        %v3977 = vsub.s32 0, %v3976
        %v3978 = vrot.slane %v3974, %v3977
        %v3979 = vadd.f32 %v3966, %v3978
        %v3980 = vadd.f32 %v3967, %v3978
        %v3981 = vadd.f32 %v3968, %v3978
        %v3982 = vadd.f32 %v3969, %v3978
        %v3983 = vadd.f32 %v3970, %v3978
        %v3984 = vadd.f32 %v3971, %v3978
        %v3985 = vadd.f32 %v3972, %v3978
        %v3986 = vadd.f32 %v3973, %v3978
        %v3987 = vmax.f32 %v3979, 0.0
        %v3988 = vmax.f32 %v3980, 0.0
        %v3989 = vmax.f32 %v3981, 0.0
        %v3990 = vmax.f32 %v3982, 0.0
        %v3991 = vmax.f32 %v3983, 0.0
        %v3992 = vmax.f32 %v3984, 0.0
        %v3993 = vmax.f32 %v3985, 0.0
        %v3994 = vmax.f32 %v3986, 0.0
        %v3995 = vpack.c.bf16 %v3988, %v3987
        %v3996 = vpack.c.bf16 %v3990, %v3989
        %v3997 = vpack.c.bf16 %v3992, %v3991
        %v3998 = vpack.c.bf16 %v3994, %v3993
        %v3999 = vld [vmem:[#allocation5] sm:$0xf]
        %v4000 = vld [vmem:[#allocation5 + $0x4] sm:$0xf]
        %v4001 = vld [vmem:[#allocation5 + $0x8] sm:$0xf]
        %v4002 = vld [vmem:[#allocation5 + $0xc] sm:$0xf]
        %v4003 = vld [vmem:[#allocation5 + $0x10] sm:$0xf]
        %v4004 = vld [vmem:[#allocation5 + $0x14] sm:$0xf]
        %v4005 = vld [vmem:[#allocation5 + $0x18] sm:$0xf]
        %v4006 = vld [vmem:[#allocation5 + $0x1c] sm:$0xf]
        %v4007 = vld [vmem:[#allocation5 + $0x20] sm:$0xf]
        %v4008 = vld [vmem:[#allocation5 + $0x24] sm:$0xf]
        %v4009 = vld [vmem:[#allocation5 + $0x28] sm:$0xf]
        %v4010 = vld [vmem:[#allocation5 + $0x2c] sm:$0xf]
        %v4011 = vld [vmem:[#allocation5 + $0x30] sm:$0xf]
        %v4012 = vld [vmem:[#allocation5 + $0x34] sm:$0xf]
        %v4013 = vld [vmem:[#allocation5 + $0x38] sm:$0xf]
        %v4014 = vld [vmem:[#allocation5 + $0x3c] sm:$0xf]
        %v4015 = vld [vmem:[%s7] sm:$0x1]
        %v4016 = vlaneseq
        %v4017 = vshrl.u32 %v4016, 7
        %v4018 = vsub.s32 0, %v4017
        %v4019 = vrot.slane %v4015, %v4018
        %v4036 = vunpack.c.l.b16 %v3999
        %v4037 = vunpack.c.l.b16 %v4000
        %v4038 = vunpack.c.l.b16 %v4001
        %v4039 = vunpack.c.l.b16 %v4002
        %v4040 = vunpack.c.l.b16 %v4003
        %v4041 = vunpack.c.l.b16 %v4004
        %v4042 = vunpack.c.l.b16 %v4005
        %v4043 = vunpack.c.l.b16 %v4006
        %v4044 = vunpack.c.l.b16 %v4007
        %v4045 = vunpack.c.l.b16 %v4008
        %v4046 = vunpack.c.l.b16 %v4009
        %v4047 = vunpack.c.l.b16 %v4010
        %v4048 = vunpack.c.l.b16 %v4011
        %v4049 = vunpack.c.l.b16 %v4012
        %v4050 = vunpack.c.l.b16 %v4013
        %v4051 = vunpack.c.l.b16 %v4014
        %v4052 = vpack.c.b16 %v4037, %v4036
        %v4053 = vpack.c.b16 %v4039, %v4038
        %v4054 = vpack.c.b16 %v4041, %v4040
        %v4055 = vpack.c.b16 %v4043, %v4042
        %v4056 = vpack.c.b16 %v4045, %v4044
        %v4057 = vpack.c.b16 %v4047, %v4046
        %v4058 = vpack.c.b16 %v4049, %v4048
        %v4059 = vpack.c.b16 %v4051, %v4050
        %4068 = vmatprep.subr.bf16.mxu0 0
        %4069 = vmatpush1.bf16.msra.mxu0 %v4052
        %4070 = vmatprep.subr.bf16.mxu0 0
        %4071 = vmatpush1.bf16.msra.mxu0 %v4053
        %4072 = vmatprep.subr.bf16.mxu0 0
        %4073 = vmatpush1.bf16.msra.mxu0 %v4054
        %4074 = vmatprep.subr.bf16.mxu0 0
        %4075 = vmatpush1.bf16.msra.mxu0 %v4055
        %4076 = vmatprep.subr.bf16.mxu0 0
        %4077 = vmatpush1.bf16.msra.mxu0 %v4056
        %4078 = vmatprep.subr.bf16.mxu0 0
        %4079 = vmatpush1.bf16.msra.mxu0 %v4057
        %4080 = vmatprep.subr.bf16.mxu0 0
        %4081 = vmatpush1.bf16.msra.mxu0 %v4058
        %4082 = vmatprep.subr.bf16.mxu0 0
        %4083 = vmatpush1.bf16.msra.mxu0 %v4059
        %4084 = vmatprep.subr.bf16.mxu0 0
        %4085 = vmatpush1.bf16.msra.mxu0 0
        %4086 = vmatprep.subr.bf16.mxu0 0
        %4087 = vmatpush1.bf16.msra.mxu0 0
        %4088 = vmatprep.subr.bf16.mxu0 0
        %4089 = vmatpush1.bf16.msra.mxu0 0
        %4090 = vmatprep.subr.bf16.mxu0 0
        %4091 = vmatpush1.bf16.msra.mxu0 0
        %4092 = vmatprep.subr.bf16.mxu0 0
        %4093 = vmatpush1.bf16.msra.mxu0 0
        %4094 = vmatprep.subr.bf16.mxu0 0
        %4095 = vmatpush1.bf16.msra.mxu0 0
        %4096 = vmatprep.subr.bf16.mxu0 0
        %4097 = vmatpush1.bf16.msra.mxu0 0
        %4098 = vmatprep.subr.bf16.mxu0 0
        %4099 = vmatpush1.bf16.msra.mxu0 0
        %4100 = vmatprep.mubr.bf16.mxu0 0
        %4101 = vmatmul.mubr.bf16.gmra.mrb[0].mxu0 %v3995
        %v4102 = vpop.f32.mrb[0].mxu0
        %v4103 = vadd.f32 %v4019, %v4102
        %v4104 = vpop.f32.mrb[0].mxu0
        %v4105 = vpop.f32.mrb[0].mxu0
        %v4106 = vadd.f32 %v4019, %v4105
        %v4107 = vpop.f32.mrb[0].mxu0
        %4108 = vmatprep.mubr.bf16.mxu0 0
        %4109 = vmatmul.mubr.bf16.gmra.mrb[0].mxu0 %v3996
        %v4110 = vpop.f32.mrb[0].mxu0
        %v4111 = vadd.f32 %v4019, %v4110
        %v4112 = vpop.f32.mrb[0].mxu0
        %v4113 = vpop.f32.mrb[0].mxu0
        %v4114 = vadd.f32 %v4019, %v4113
        %v4115 = vpop.f32.mrb[0].mxu0
        %4116 = vmatprep.mubr.bf16.mxu0 0
        %4117 = vmatmul.mubr.bf16.gmra.mrb[0].mxu0 %v3997
        %v4118 = vpop.f32.mrb[0].mxu0
        %v4119 = vadd.f32 %v4019, %v4118
        %v4120 = vpop.f32.mrb[0].mxu0
        %v4121 = vpop.f32.mrb[0].mxu0
        %v4122 = vadd.f32 %v4019, %v4121
        %v4123 = vpop.f32.mrb[0].mxu0
        %4124 = vmatprep.mubr.bf16.mxu0 0
        %4125 = vmatmul.mubr.bf16.gmra.mrb[0].mxu0 %v3998
        %v4126 = vpop.f32.mrb[0].mxu0
        %v4127 = vadd.f32 %v4019, %v4126
        %v4128 = vpop.f32.mrb[0].mxu0
        %v4129 = vpop.f32.mrb[0].mxu0
        %v4130 = vadd.f32 %v4019, %v4129
        %v4131 = vpop.f32.mrb[0].mxu0
        %4132 = vdwg.mxu0
        %v4133 = vpack.c.bf16 %v4106, %v4103
        %v4134 = vpack.c.bf16 %v4114, %v4111
        %v4135 = vpack.c.bf16 %v4122, %v4119
        %v4136 = vpack.c.bf16 %v4130, %v4127
        %v4137 = vld [vmem:[%s1528] sm:$0xf]
        %v4138 = vld [vmem:[%s1528 + $0x4] sm:$0xf]
        %v4139 = vld [vmem:[%s1528 + $0x8] sm:$0xf]
        %v4140 = vld [vmem:[%s1528 + $0xc] sm:$0xf]
        %v4141 = vld [vmem:[%s1528 + $0x10] sm:$0xf]
        %v4142 = vld [vmem:[%s1528 + $0x14] sm:$0xf]
        %v4143 = vld [vmem:[%s1528 + $0x18] sm:$0xf]
        %v4144 = vld [vmem:[%s1528 + $0x1c] sm:$0xf]
        %v4145 = vld [vmem:[%s1528 + $0x20] sm:$0xf]
        %v4146 = vld [vmem:[%s1528 + $0x24] sm:$0xf]
        %v4147 = vld [vmem:[%s1528 + $0x28] sm:$0xf]
        %v4148 = vld [vmem:[%s1528 + $0x2c] sm:$0xf]
        %v4149 = vld [vmem:[%s1528 + $0x30] sm:$0xf]
        %v4150 = vld [vmem:[%s1528 + $0x34] sm:$0xf]
        %v4151 = vld [vmem:[%s1528 + $0x38] sm:$0xf]
        %v4152 = vld [vmem:[%s1528 + $0x3c] sm:$0xf]
        %v4153 = vld [vmem:[%s5 + $0x1] sm:$0x1]
        %v4154 = vlaneseq
        %v4155 = vshrl.u32 %v4154, 7
        %v4156 = vsub.s32 0, %v4155
        %v4157 = vrot.slane %v4153, %v4156
        %v4174 = vunpack.c.l.b16 %v4137
        %v4175 = vunpack.c.l.b16 %v4138
        %v4176 = vunpack.c.l.b16 %v4139
        %v4177 = vunpack.c.l.b16 %v4140
        %v4178 = vunpack.c.l.b16 %v4141
        %v4179 = vunpack.c.l.b16 %v4142
        %v4180 = vunpack.c.l.b16 %v4143
        %v4181 = vunpack.c.l.b16 %v4144
        %v4182 = vunpack.c.l.b16 %v4145
        %v4183 = vunpack.c.l.b16 %v4146
        %v4184 = vunpack.c.l.b16 %v4147
        %v4185 = vunpack.c.l.b16 %v4148
        %v4186 = vunpack.c.l.b16 %v4149
        %v4187 = vunpack.c.l.b16 %v4150
        %v4188 = vunpack.c.l.b16 %v4151
        %v4189 = vunpack.c.l.b16 %v4152
        %v4190 = vpack.c.b16 %v4175, %v4174
        %v4191 = vpack.c.b16 %v4177, %v4176
        %v4192 = vpack.c.b16 %v4179, %v4178
        %v4193 = vpack.c.b16 %v4181, %v4180
        %v4194 = vpack.c.b16 %v4183, %v4182
        %v4195 = vpack.c.b16 %v4185, %v4184
        %v4196 = vpack.c.b16 %v4187, %v4186
        %v4197 = vpack.c.b16 %v4189, %v4188
        %4206 = vmatprep.subr.bf16.mxu0 0
        %4207 = vmatpush1.bf16.msra.mxu0 %v4190
        %4208 = vmatprep.subr.bf16.mxu0 0
        %4209 = vmatpush1.bf16.msra.mxu0 %v4191
        %4210 = vmatprep.subr.bf16.mxu0 0
        %4211 = vmatpush1.bf16.msra.mxu0 %v4192
        %4212 = vmatprep.subr.bf16.mxu0 0
        %4213 = vmatpush1.bf16.msra.mxu0 %v4193
        %4214 = vmatprep.subr.bf16.mxu0 0
        %4215 = vmatpush1.bf16.msra.mxu0 %v4194
        %4216 = vmatprep.subr.bf16.mxu0 0
        %4217 = vmatpush1.bf16.msra.mxu0 %v4195
        %4218 = vmatprep.subr.bf16.mxu0 0
        %4219 = vmatpush1.bf16.msra.mxu0 %v4196
        %4220 = vmatprep.subr.bf16.mxu0 0
        %4221 = vmatpush1.bf16.msra.mxu0 %v4197
        %4222 = vmatprep.subr.bf16.mxu0 0
        %4223 = vmatpush1.bf16.msra.mxu0 0
        %4224 = vmatprep.subr.bf16.mxu0 0
        %4225 = vmatpush1.bf16.msra.mxu0 0
        %4226 = vmatprep.subr.bf16.mxu0 0
        %4227 = vmatpush1.bf16.msra.mxu0 0
        %4228 = vmatprep.subr.bf16.mxu0 0
        %4229 = vmatpush1.bf16.msra.mxu0 0
        %4230 = vmatprep.subr.bf16.mxu0 0
        %4231 = vmatpush1.bf16.msra.mxu0 0
        %4232 = vmatprep.subr.bf16.mxu0 0
        %4233 = vmatpush1.bf16.msra.mxu0 0
        %4234 = vmatprep.subr.bf16.mxu0 0
        %4235 = vmatpush1.bf16.msra.mxu0 0
        %4236 = vmatprep.subr.bf16.mxu0 0
        %4237 = vmatpush1.bf16.msra.mxu0 0
        %4238 = vmatprep.mubr.bf16.mxu0 0
        %4239 = vmatmul.mubr.bf16.gmra.mrb[0].mxu0 %v4133
        %v4240 = vpop.f32.mrb[0].mxu0
        %v4241 = vadd.f32 %v4157, %v4240
        %v4242 = vpop.f32.mrb[0].mxu0
        %v4243 = vpop.f32.mrb[0].mxu0
        %v4244 = vadd.f32 %v4157, %v4243
        %v4245 = vpop.f32.mrb[0].mxu0
        %4246 = vmatprep.mubr.bf16.mxu0 0
        %4247 = vmatmul.mubr.bf16.gmra.mrb[0].mxu0 %v4134
        %v4248 = vpop.f32.mrb[0].mxu0
        %v4249 = vadd.f32 %v4157, %v4248
        %v4250 = vpop.f32.mrb[0].mxu0
        %v4251 = vpop.f32.mrb[0].mxu0
        %v4252 = vadd.f32 %v4157, %v4251
        %v4253 = vpop.f32.mrb[0].mxu0
        %4254 = vmatprep.mubr.bf16.mxu0 0
        %4255 = vmatmul.mubr.bf16.gmra.mrb[0].mxu0 %v4135
        %v4256 = vpop.f32.mrb[0].mxu0
        %v4257 = vadd.f32 %v4157, %v4256
        %v4258 = vpop.f32.mrb[0].mxu0
        %v4259 = vpop.f32.mrb[0].mxu0
        %v4260 = vadd.f32 %v4157, %v4259
        %v4261 = vpop.f32.mrb[0].mxu0
        %4262 = vmatprep.mubr.bf16.mxu0 0
        %4263 = vmatmul.mubr.bf16.gmra.mrb[0].mxu0 %v4136
        %v4264 = vpop.f32.mrb[0].mxu0
        %v4265 = vadd.f32 %v4157, %v4264
        %v4266 = vpop.f32.mrb[0].mxu0
        %v4267 = vpop.f32.mrb[0].mxu0
        %v4268 = vadd.f32 %v4157, %v4267
        %v4269 = vpop.f32.mrb[0].mxu0
        %4270 = vdwg.mxu0
        %v4271 = vmax.f32 %v4241, 0.0
        %v4272 = vmax.f32 %v4244, 0.0
        %v4273 = vmax.f32 %v4249, 0.0
        %v4274 = vmax.f32 %v4252, 0.0
        %v4275 = vmax.f32 %v4257, 0.0
        %v4276 = vmax.f32 %v4260, 0.0
        %v4277 = vmax.f32 %v4265, 0.0
        %v4278 = vmax.f32 %v4268, 0.0
        %v4279 = vpack.c.bf16 %v4272, %v4271
        %v4280 = vpack.c.bf16 %v4274, %v4273
        %v4281 = vpack.c.bf16 %v4276, %v4275
        %v4282 = vpack.c.bf16 %v4278, %v4277
        %v4283 = vld [vmem:[%s1675] sm:$0xf]
        %v4284 = vld [vmem:[%s1675 + $0x4] sm:$0xf]
        %v4285 = vld [vmem:[%s1675 + $0x8] sm:$0xf]
        %v4286 = vld [vmem:[%s1675 + $0xc] sm:$0xf]
        %v4287 = vld [vmem:[%s1675 + $0x10] sm:$0xf]
        %v4288 = vld [vmem:[%s1675 + $0x14] sm:$0xf]
        %v4289 = vld [vmem:[%s1675 + $0x18] sm:$0xf]
        %v4290 = vld [vmem:[%s1675 + $0x1c] sm:$0xf]
        %v4291 = vld [vmem:[%s1675 + $0x20] sm:$0xf]
        %v4292 = vld [vmem:[%s1675 + $0x24] sm:$0xf]
        %v4293 = vld [vmem:[%s1675 + $0x28] sm:$0xf]
        %v4294 = vld [vmem:[%s1675 + $0x2c] sm:$0xf]
        %v4295 = vld [vmem:[%s1675 + $0x30] sm:$0xf]
        %v4296 = vld [vmem:[%s1675 + $0x34] sm:$0xf]
        %v4297 = vld [vmem:[%s1675 + $0x38] sm:$0xf]
        %v4298 = vld [vmem:[%s1675 + $0x3c] sm:$0xf]
        %v4299 = vld [vmem:[%s7 + $0x1] sm:$0x1]
        %v4300 = vlaneseq
        %v4301 = vshrl.u32 %v4300, 7
        %v4302 = vsub.s32 0, %v4301
        %v4303 = vrot.slane %v4299, %v4302
        %v4320 = vunpack.c.l.b16 %v4283
        %v4321 = vunpack.c.l.b16 %v4284
        %v4322 = vunpack.c.l.b16 %v4285
        %v4323 = vunpack.c.l.b16 %v4286
        %v4324 = vunpack.c.l.b16 %v4287
        %v4325 = vunpack.c.l.b16 %v4288
        %v4326 = vunpack.c.l.b16 %v4289
        %v4327 = vunpack.c.l.b16 %v4290
        %v4328 = vunpack.c.l.b16 %v4291
        %v4329 = vunpack.c.l.b16 %v4292
        %v4330 = vunpack.c.l.b16 %v4293
        %v4331 = vunpack.c.l.b16 %v4294
        %v4332 = vunpack.c.l.b16 %v4295
        %v4333 = vunpack.c.l.b16 %v4296
        %v4334 = vunpack.c.l.b16 %v4297
        %v4335 = vunpack.c.l.b16 %v4298
        %v4336 = vpack.c.b16 %v4321, %v4320
        %v4337 = vpack.c.b16 %v4323, %v4322
        %v4338 = vpack.c.b16 %v4325, %v4324
        %v4339 = vpack.c.b16 %v4327, %v4326
        %v4340 = vpack.c.b16 %v4329, %v4328
        %v4341 = vpack.c.b16 %v4331, %v4330
        %v4342 = vpack.c.b16 %v4333, %v4332
        %v4343 = vpack.c.b16 %v4335, %v4334
        %4352 = vmatprep.subr.bf16.mxu0 0
        %4353 = vmatpush1.bf16.msra.mxu0 %v4336
        %4354 = vmatprep.subr.bf16.mxu0 0
        %4355 = vmatpush1.bf16.msra.mxu0 %v4337
        %4356 = vmatprep.subr.bf16.mxu0 0
        %4357 = vmatpush1.bf16.msra.mxu0 %v4338
        %4358 = vmatprep.subr.bf16.mxu0 0
        %4359 = vmatpush1.bf16.msra.mxu0 %v4339
        %4360 = vmatprep.subr.bf16.mxu0 0
        %4361 = vmatpush1.bf16.msra.mxu0 %v4340
        %4362 = vmatprep.subr.bf16.mxu0 0
        %4363 = vmatpush1.bf16.msra.mxu0 %v4341
        %4364 = vmatprep.subr.bf16.mxu0 0
        %4365 = vmatpush1.bf16.msra.mxu0 %v4342
        %4366 = vmatprep.subr.bf16.mxu0 0
        %4367 = vmatpush1.bf16.msra.mxu0 %v4343
        %4368 = vmatprep.subr.bf16.mxu0 0
        %4369 = vmatpush1.bf16.msra.mxu0 0
        %4370 = vmatprep.subr.bf16.mxu0 0
        %4371 = vmatpush1.bf16.msra.mxu0 0
        %4372 = vmatprep.subr.bf16.mxu0 0
        %4373 = vmatpush1.bf16.msra.mxu0 0
        %4374 = vmatprep.subr.bf16.mxu0 0
        %4375 = vmatpush1.bf16.msra.mxu0 0
        %4376 = vmatprep.subr.bf16.mxu0 0
        %4377 = vmatpush1.bf16.msra.mxu0 0
        %4378 = vmatprep.subr.bf16.mxu0 0
        %4379 = vmatpush1.bf16.msra.mxu0 0
        %4380 = vmatprep.subr.bf16.mxu0 0
        %4381 = vmatpush1.bf16.msra.mxu0 0
        %4382 = vmatprep.subr.bf16.mxu0 0
        %4383 = vmatpush1.bf16.msra.mxu0 0
        %4384 = vmatprep.mubr.bf16.mxu0 0
        %4385 = vmatmul.mubr.bf16.gmra.mrb[0].mxu0 %v4279
        %v4386 = vpop.f32.mrb[0].mxu0
        %v4387 = vadd.f32 %v4303, %v4386
        %v4388 = vpop.f32.mrb[0].mxu0
        %v4389 = vpop.f32.mrb[0].mxu0
        %v4390 = vadd.f32 %v4303, %v4389
        %v4391 = vpop.f32.mrb[0].mxu0
        %4392 = vmatprep.mubr.bf16.mxu0 0
        %4393 = vmatmul.mubr.bf16.gmra.mrb[0].mxu0 %v4280
        %v4394 = vpop.f32.mrb[0].mxu0
        %v4395 = vadd.f32 %v4303, %v4394
        %v4396 = vpop.f32.mrb[0].mxu0
        %v4397 = vpop.f32.mrb[0].mxu0
        %v4398 = vadd.f32 %v4303, %v4397
        %v4399 = vpop.f32.mrb[0].mxu0
        %4400 = vmatprep.mubr.bf16.mxu0 0
        %4401 = vmatmul.mubr.bf16.gmra.mrb[0].mxu0 %v4281
        %v4402 = vpop.f32.mrb[0].mxu0
        %v4403 = vadd.f32 %v4303, %v4402
        %v4404 = vpop.f32.mrb[0].mxu0
        %v4405 = vpop.f32.mrb[0].mxu0
        %v4406 = vadd.f32 %v4303, %v4405
        %v4407 = vpop.f32.mrb[0].mxu0
        %4408 = vmatprep.mubr.bf16.mxu0 0
        %4409 = vmatmul.mubr.bf16.gmra.mrb[0].mxu0 %v4282
        %v4410 = vpop.f32.mrb[0].mxu0
        %v4411 = vadd.f32 %v4303, %v4410
        %v4412 = vpop.f32.mrb[0].mxu0
        %v4413 = vpop.f32.mrb[0].mxu0
        %v4414 = vadd.f32 %v4303, %v4413
        %v4415 = vpop.f32.mrb[0].mxu0
        %4416 = vdwg.mxu0
        %v4417 = vpack.c.bf16 %v4390, %v4387
        %v4418 = vpack.c.bf16 %v4398, %v4395
        %v4419 = vpack.c.bf16 %v4406, %v4403
        %v4420 = vpack.c.bf16 %v4414, %v4411
        %v4421 = vld [vmem:[%s1814] sm:$0xf]
        %v4422 = vld [vmem:[%s1814 + $0x4] sm:$0xf]
        %v4423 = vld [vmem:[%s1814 + $0x8] sm:$0xf]
        %v4424 = vld [vmem:[%s1814 + $0xc] sm:$0xf]
        %v4425 = vld [vmem:[%s1814 + $0x10] sm:$0xf]
        %v4426 = vld [vmem:[%s1814 + $0x14] sm:$0xf]
        %v4427 = vld [vmem:[%s1814 + $0x18] sm:$0xf]
        %v4428 = vld [vmem:[%s1814 + $0x1c] sm:$0xf]
        %v4429 = vld [vmem:[%s1814 + $0x20] sm:$0xf]
        %v4430 = vld [vmem:[%s1814 + $0x24] sm:$0xf]
        %v4431 = vld [vmem:[%s1814 + $0x28] sm:$0xf]
        %v4432 = vld [vmem:[%s1814 + $0x2c] sm:$0xf]
        %v4433 = vld [vmem:[%s1814 + $0x30] sm:$0xf]
        %v4434 = vld [vmem:[%s1814 + $0x34] sm:$0xf]
        %v4435 = vld [vmem:[%s1814 + $0x38] sm:$0xf]
        %v4436 = vld [vmem:[%s1814 + $0x3c] sm:$0xf]
        %v4453 = vunpack.c.l.b16 %v4421
        %v4454 = vunpack.c.l.b16 %v4422
        %v4455 = vunpack.c.l.b16 %v4423
        %v4456 = vunpack.c.l.b16 %v4424
        %v4457 = vunpack.c.l.b16 %v4425
        %v4458 = vunpack.c.l.b16 %v4426
        %v4459 = vunpack.c.l.b16 %v4427
        %v4460 = vunpack.c.l.b16 %v4428
        %v4461 = vunpack.c.l.b16 %v4429
        %v4462 = vunpack.c.l.b16 %v4430
        %v4463 = vunpack.c.l.b16 %v4431
        %v4464 = vunpack.c.l.b16 %v4432
        %v4465 = vunpack.c.l.b16 %v4433
        %v4466 = vunpack.c.l.b16 %v4434
        %v4467 = vunpack.c.l.b16 %v4435
        %v4468 = vunpack.c.l.b16 %v4436
        %v4469 = vpack.c.b16 %v4454, %v4453
        %v4470 = vpack.c.b16 %v4456, %v4455
        %v4471 = vpack.c.b16 %v4458, %v4457
        %v4472 = vpack.c.b16 %v4460, %v4459
        %v4473 = vpack.c.b16 %v4462, %v4461
        %v4474 = vpack.c.b16 %v4464, %v4463
        %v4475 = vpack.c.b16 %v4466, %v4465
        %v4476 = vpack.c.b16 %v4468, %v4467
        %4485 = vmatprep.subr.bf16.mxu0 0
        %4486 = vmatpush1.bf16.msra.mxu0 %v4469
        %4487 = vmatprep.subr.bf16.mxu0 0
        %4488 = vmatpush1.bf16.msra.mxu0 %v4470
        %4489 = vmatprep.subr.bf16.mxu0 0
        %4490 = vmatpush1.bf16.msra.mxu0 %v4471
        %4491 = vmatprep.subr.bf16.mxu0 0
        %4492 = vmatpush1.bf16.msra.mxu0 %v4472
        %4493 = vmatprep.subr.bf16.mxu0 0
        %4494 = vmatpush1.bf16.msra.mxu0 %v4473
        %4495 = vmatprep.subr.bf16.mxu0 0
        %4496 = vmatpush1.bf16.msra.mxu0 %v4474
        %4497 = vmatprep.subr.bf16.mxu0 0
        %4498 = vmatpush1.bf16.msra.mxu0 %v4475
        %4499 = vmatprep.subr.bf16.mxu0 0
        %4500 = vmatpush1.bf16.msra.mxu0 %v4476
        %4501 = vmatprep.subr.bf16.mxu0 0
        %4502 = vmatpush1.bf16.msra.mxu0 0
        %4503 = vmatprep.subr.bf16.mxu0 0
        %4504 = vmatpush1.bf16.msra.mxu0 0
        %4505 = vmatprep.subr.bf16.mxu0 0
        %4506 = vmatpush1.bf16.msra.mxu0 0
        %4507 = vmatprep.subr.bf16.mxu0 0
        %4508 = vmatpush1.bf16.msra.mxu0 0
        %4509 = vmatprep.subr.bf16.mxu0 0
        %4510 = vmatpush1.bf16.msra.mxu0 0
        %4511 = vmatprep.subr.bf16.mxu0 0
        %4512 = vmatpush1.bf16.msra.mxu0 0
        %4513 = vmatprep.subr.bf16.mxu0 0
        %4514 = vmatpush1.bf16.msra.mxu0 0
        %4515 = vmatprep.subr.bf16.mxu0 0
        %4516 = vmatpush1.bf16.msra.mxu0 0
        %4517 = vmatprep.mubr.bf16.mxu0 0
        %4518 = vmatmul.mubr.bf16.gmra.mrb[0].mxu0 %v4417
        %v4519 = vpop.f32.mrb[0].mxu0
        %v4520 = vadd.f32 0.0, %v4519
        %v4521 = vpop.f32.mrb[0].mxu0
        %v4522 = vpop.f32.mrb[0].mxu0
        %v4523 = vadd.f32 0.0, %v4522
        %v4524 = vpop.f32.mrb[0].mxu0
        %4525 = vmatprep.mubr.bf16.mxu0 0
        %4526 = vmatmul.mubr.bf16.gmra.mrb[0].mxu0 %v4418
        %v4527 = vpop.f32.mrb[0].mxu0
        %v4528 = vadd.f32 0.0, %v4527
        %v4529 = vpop.f32.mrb[0].mxu0
        %v4530 = vpop.f32.mrb[0].mxu0
        %v4531 = vadd.f32 0.0, %v4530
        %v4532 = vpop.f32.mrb[0].mxu0
        %4533 = vmatprep.mubr.bf16.mxu0 0
        %4534 = vmatmul.mubr.bf16.gmra.mrb[0].mxu0 %v4419
        %v4535 = vpop.f32.mrb[0].mxu0
        %v4536 = vadd.f32 0.0, %v4535
        %v4537 = vpop.f32.mrb[0].mxu0
        %v4538 = vpop.f32.mrb[0].mxu0
        %v4539 = vadd.f32 0.0, %v4538
        %v4540 = vpop.f32.mrb[0].mxu0
        %4541 = vmatprep.mubr.bf16.mxu0 0
        %4542 = vmatmul.mubr.bf16.gmra.mrb[0].mxu0 %v4420
        %v4543 = vpop.f32.mrb[0].mxu0
        %v4544 = vadd.f32 0.0, %v4543
        %v4545 = vpop.f32.mrb[0].mxu0
        %v4546 = vpop.f32.mrb[0].mxu0
        %v4547 = vadd.f32 0.0, %v4546
        %v4548 = vpop.f32.mrb[0].mxu0
        %4549 = vdwg.mxu0
        %v4550 = vpack.c.bf16 %v4523, %v4520
        %v4551 = vpack.c.bf16 %v4531, %v4528
        %v4552 = vpack.c.bf16 %v4539, %v4536
        %v4553 = vpack.c.bf16 %v4547, %v4544
        %v4554 = vld [vmem:[%s1948] sm:$0xf]
        %v4555 = vld [vmem:[%s1948 + $0x4] sm:$0xf]
        %v4556 = vld [vmem:[%s1948 + $0x8] sm:$0xf]
        %v4557 = vld [vmem:[%s1948 + $0xc] sm:$0xf]
        %v4558 = vld [vmem:[%s1948 + $0x10] sm:$0xf]
        %v4559 = vld [vmem:[%s1948 + $0x14] sm:$0xf]
        %v4560 = vld [vmem:[%s1948 + $0x18] sm:$0xf]
        %v4561 = vld [vmem:[%s1948 + $0x1c] sm:$0xf]
        %v4562 = vld [vmem:[%s1948 + $0x20] sm:$0xf]
        %v4563 = vld [vmem:[%s1948 + $0x24] sm:$0xf]
        %v4564 = vld [vmem:[%s1948 + $0x28] sm:$0xf]
        %v4565 = vld [vmem:[%s1948 + $0x2c] sm:$0xf]
        %v4566 = vld [vmem:[%s1948 + $0x30] sm:$0xf]
        %v4567 = vld [vmem:[%s1948 + $0x34] sm:$0xf]
        %v4568 = vld [vmem:[%s1948 + $0x38] sm:$0xf]
        %v4569 = vld [vmem:[%s1948 + $0x3c] sm:$0xf]
        %v4586 = vunpack.c.l.b16 %v4554
        %v4587 = vunpack.c.l.b16 %v4555
        %v4588 = vunpack.c.l.b16 %v4556
        %v4589 = vunpack.c.l.b16 %v4557
        %v4590 = vunpack.c.l.b16 %v4558
        %v4591 = vunpack.c.l.b16 %v4559
        %v4592 = vunpack.c.l.b16 %v4560
        %v4593 = vunpack.c.l.b16 %v4561
        %v4594 = vunpack.c.l.b16 %v4562
        %v4595 = vunpack.c.l.b16 %v4563
        %v4596 = vunpack.c.l.b16 %v4564
        %v4597 = vunpack.c.l.b16 %v4565
        %v4598 = vunpack.c.l.b16 %v4566
        %v4599 = vunpack.c.l.b16 %v4567
        %v4600 = vunpack.c.l.b16 %v4568
        %v4601 = vunpack.c.l.b16 %v4569
        %v4602 = vpack.c.b16 %v4587, %v4586
        %v4603 = vpack.c.b16 %v4589, %v4588
        %v4604 = vpack.c.b16 %v4591, %v4590
        %v4605 = vpack.c.b16 %v4593, %v4592
        %v4606 = vpack.c.b16 %v4595, %v4594
        %v4607 = vpack.c.b16 %v4597, %v4596
        %v4608 = vpack.c.b16 %v4599, %v4598
        %v4609 = vpack.c.b16 %v4601, %v4600
        %4618 = vmatprep.subr.bf16.mxu0 0
        %4619 = vmatpush1.bf16.msra.mxu0 %v4602
        %4620 = vmatprep.subr.bf16.mxu0 0
        %4621 = vmatpush1.bf16.msra.mxu0 %v4603
        %4622 = vmatprep.subr.bf16.mxu0 0
        %4623 = vmatpush1.bf16.msra.mxu0 %v4604
        %4624 = vmatprep.subr.bf16.mxu0 0
        %4625 = vmatpush1.bf16.msra.mxu0 %v4605
        %4626 = vmatprep.subr.bf16.mxu0 0
        %4627 = vmatpush1.bf16.msra.mxu0 %v4606
        %4628 = vmatprep.subr.bf16.mxu0 0
        %4629 = vmatpush1.bf16.msra.mxu0 %v4607
        %4630 = vmatprep.subr.bf16.mxu0 0
        %4631 = vmatpush1.bf16.msra.mxu0 %v4608
        %4632 = vmatprep.subr.bf16.mxu0 0
        %4633 = vmatpush1.bf16.msra.mxu0 %v4609
        %4634 = vmatprep.subr.bf16.mxu0 0
        %4635 = vmatpush1.bf16.msra.mxu0 0
        %4636 = vmatprep.subr.bf16.mxu0 0
        %4637 = vmatpush1.bf16.msra.mxu0 0
        %4638 = vmatprep.subr.bf16.mxu0 0
        %4639 = vmatpush1.bf16.msra.mxu0 0
        %4640 = vmatprep.subr.bf16.mxu0 0
        %4641 = vmatpush1.bf16.msra.mxu0 0
        %4642 = vmatprep.subr.bf16.mxu0 0
        %4643 = vmatpush1.bf16.msra.mxu0 0
        %4644 = vmatprep.subr.bf16.mxu0 0
        %4645 = vmatpush1.bf16.msra.mxu0 0
        %4646 = vmatprep.subr.bf16.mxu0 0
        %4647 = vmatpush1.bf16.msra.mxu0 0
        %4648 = vmatprep.subr.bf16.mxu0 0
        %4649 = vmatpush1.bf16.msra.mxu0 0
        %4650 = vmatprep.mubr.bf16.mxu0 0
        %4651 = vmatmul.mubr.bf16.gmra.mrb[0].mxu0 %v3072
        %v4652 = vpop.f32.mrb[0].mxu0
        %v4653 = vadd.f32 0.0, %v4652
        %v4654 = vpop.f32.mrb[0].mxu0
        %v4655 = vpop.f32.mrb[0].mxu0
        %v4656 = vpop.f32.mrb[0].mxu0
        %4657 = vdwg.mxu0
        %v4658 = vpack.c.bf16 %v4653, %v4653
        %v4659 = vld [vmem:[%s2054] sm:$0xf]
        %v4660 = vld [vmem:[%s2054 + $0x4] sm:$0xf]
        %v4661 = vld [vmem:[%s2054 + $0x8] sm:$0xf]
        %v4662 = vld [vmem:[%s2054 + $0xc] sm:$0xf]
        %v4663 = vld [vmem:[%s2054 + $0x10] sm:$0xf]
        %v4664 = vld [vmem:[%s2054 + $0x14] sm:$0xf]
        %v4665 = vld [vmem:[%s2054 + $0x18] sm:$0xf]
        %v4666 = vld [vmem:[%s2054 + $0x1c] sm:$0xf]
        %v4667 = vld [vmem:[%s2054 + $0x20] sm:$0xf]
        %v4668 = vld [vmem:[%s2054 + $0x24] sm:$0xf]
        %v4669 = vld [vmem:[%s2054 + $0x28] sm:$0xf]
        %v4670 = vld [vmem:[%s2054 + $0x2c] sm:$0xf]
        %v4671 = vld [vmem:[%s2054 + $0x30] sm:$0xf]
        %v4672 = vld [vmem:[%s2054 + $0x34] sm:$0xf]
        %v4673 = vld [vmem:[%s2054 + $0x38] sm:$0xf]
        %v4674 = vld [vmem:[%s2054 + $0x3c] sm:$0xf]
        %4675 = vmatprep.subr.bf16.mxu0 0
        %4676 = vmatpush1.bf16.msra.mxu0 %v4550
        %4677 = vmatprep.subr.bf16.mxu0 0
        %4678 = vmatpush1.bf16.msra.mxu0 %v4551
        %4679 = vmatprep.subr.bf16.mxu0 0
        %4680 = vmatpush1.bf16.msra.mxu0 %v4552
        %4681 = vmatprep.subr.bf16.mxu0 0
        %4682 = vmatpush1.bf16.msra.mxu0 %v4553
        %4683 = vmatprep.subr.bf16.mxu0 0
        %4684 = vmatpush1.bf16.msra.mxu0 0
        %4685 = vmatprep.subr.bf16.mxu0 0
        %4686 = vmatpush1.bf16.msra.mxu0 0
        %4687 = vmatprep.subr.bf16.mxu0 0
        %4688 = vmatpush1.bf16.msra.mxu0 0
        %4689 = vmatprep.subr.bf16.mxu0 0
        %4690 = vmatpush1.bf16.msra.mxu0 0
        %4691 = vmatprep.subr.bf16.mxu0 0
        %4692 = vmatpush1.bf16.msra.mxu0 0
        %4693 = vmatprep.subr.bf16.mxu0 0
        %4694 = vmatpush1.bf16.msra.mxu0 0
        %4695 = vmatprep.subr.bf16.mxu0 0
        %4696 = vmatpush1.bf16.msra.mxu0 0
        %4697 = vmatprep.subr.bf16.mxu0 0
        %4698 = vmatpush1.bf16.msra.mxu0 0
        %4699 = vmatprep.subr.bf16.mxu0 0
        %4700 = vmatpush1.bf16.msra.mxu0 0
        %4701 = vmatprep.subr.bf16.mxu0 0
        %4702 = vmatpush1.bf16.msra.mxu0 0
        %4703 = vmatprep.subr.bf16.mxu0 0
        %4704 = vmatpush1.bf16.msra.mxu0 0
        %4705 = vmatprep.subr.bf16.mxu0 0
        %4706 = vmatpush1.bf16.msra.mxu0 0
        %4707 = vmatprep.mubr.bf16.mxu0 0
        %4708 = vmatmul.mubr.bf16.gmra.mrb[0].mxu0 %v2089
        %v4709 = vpop.f32.mrb[0].mxu0
        %v4710 = vadd.f32 0.0, %v4709
        %v4711 = vpop.f32.mrb[0].mxu0
        %v4712 = vpop.f32.mrb[0].mxu0
        %v4713 = vadd.f32 0.0, %v4712
        %v4714 = vpop.f32.mrb[0].mxu0
        %4715 = vmatprep.mubr.bf16.mxu0 0
        %4716 = vmatmul.mubr.bf16.gmra.mrb[0].mxu0 %v2092
        %v4717 = vpop.f32.mrb[0].mxu0
        %v4718 = vadd.f32 0.0, %v4717
        %v4719 = vpop.f32.mrb[0].mxu0
        %v4720 = vpop.f32.mrb[0].mxu0
        %v4721 = vadd.f32 0.0, %v4720
        %v4722 = vpop.f32.mrb[0].mxu0
        %4723 = vdwg.mxu0
        %v4740 = vunpack.c.l.b16 %v4659
        %v4741 = vunpack.c.l.b16 %v4660
        %v4742 = vunpack.c.l.b16 %v4661
        %v4743 = vunpack.c.l.b16 %v4662
        %v4744 = vunpack.c.l.b16 %v4663
        %v4745 = vunpack.c.l.b16 %v4664
        %v4746 = vunpack.c.l.b16 %v4665
        %v4747 = vunpack.c.l.b16 %v4666
        %v4748 = vunpack.c.l.b16 %v4667
        %v4749 = vunpack.c.l.b16 %v4668
        %v4750 = vunpack.c.l.b16 %v4669
        %v4751 = vunpack.c.l.b16 %v4670
        %v4752 = vunpack.c.l.b16 %v4671
        %v4753 = vunpack.c.l.b16 %v4672
        %v4754 = vunpack.c.l.b16 %v4673
        %v4755 = vunpack.c.l.b16 %v4674
        %v4756 = vpack.c.b16 %v4741, %v4740
        %v4757 = vpack.c.b16 %v4743, %v4742
        %v4758 = vpack.c.b16 %v4745, %v4744
        %v4759 = vpack.c.b16 %v4747, %v4746
        %v4760 = vpack.c.b16 %v4749, %v4748
        %v4761 = vpack.c.b16 %v4751, %v4750
        %v4762 = vpack.c.b16 %v4753, %v4752
        %v4763 = vpack.c.b16 %v4755, %v4754
        %4772 = vmatprep.subr.bf16.mxu0 0
        %4773 = vmatpush1.bf16.msra.mxu0 %v4756
        %4774 = vmatprep.subr.bf16.mxu0 0
        %4775 = vmatpush1.bf16.msra.mxu0 %v4757
        %4776 = vmatprep.subr.bf16.mxu0 0
        %4777 = vmatpush1.bf16.msra.mxu0 %v4758
        %4778 = vmatprep.subr.bf16.mxu0 0
        %4779 = vmatpush1.bf16.msra.mxu0 %v4759
        %4780 = vmatprep.subr.bf16.mxu0 0
        %4781 = vmatpush1.bf16.msra.mxu0 %v4760
        %4782 = vmatprep.subr.bf16.mxu0 0
        %4783 = vmatpush1.bf16.msra.mxu0 %v4761
        %4784 = vmatprep.subr.bf16.mxu0 0
        %4785 = vmatpush1.bf16.msra.mxu0 %v4762
        %4786 = vmatprep.subr.bf16.mxu0 0
        %4787 = vmatpush1.bf16.msra.mxu0 %v4763
        %4788 = vmatprep.subr.bf16.mxu0 0
        %4789 = vmatpush1.bf16.msra.mxu0 0
        %4790 = vmatprep.subr.bf16.mxu0 0
        %4791 = vmatpush1.bf16.msra.mxu0 0
        %4792 = vmatprep.subr.bf16.mxu0 0
        %4793 = vmatpush1.bf16.msra.mxu0 0
        %4794 = vmatprep.subr.bf16.mxu0 0
        %4795 = vmatpush1.bf16.msra.mxu0 0
        %4796 = vmatprep.subr.bf16.mxu0 0
        %4797 = vmatpush1.bf16.msra.mxu0 0
        %4798 = vmatprep.subr.bf16.mxu0 0
        %4799 = vmatpush1.bf16.msra.mxu0 0
        %4800 = vmatprep.subr.bf16.mxu0 0
        %4801 = vmatpush1.bf16.msra.mxu0 0
        %4802 = vmatprep.subr.bf16.mxu0 0
        %4803 = vmatpush1.bf16.msra.mxu0 0
        %4804 = vmatprep.mubr.bf16.mxu0 0
        %4805 = vmatmul.mubr.bf16.gmra.mrb[0].mxu0 %v2436
        %v4806 = vpop.f32.mrb[0].mxu0
        %v4807 = vadd.f32 %v4710, %v4806
        %v4808 = vpop.f32.mrb[0].mxu0
        %v4809 = vpop.f32.mrb[0].mxu0
        %v4810 = vadd.f32 %v4713, %v4809
        %v4811 = vpop.f32.mrb[0].mxu0
        %4812 = vmatprep.mubr.bf16.mxu0 0
        %4813 = vmatmul.mubr.bf16.gmra.mrb[0].mxu0 %v2437
        %v4814 = vpop.f32.mrb[0].mxu0
        %v4815 = vadd.f32 %v4718, %v4814
        %v4816 = vpop.f32.mrb[0].mxu0
        %v4817 = vpop.f32.mrb[0].mxu0
        %v4818 = vadd.f32 %v4721, %v4817
        %v4819 = vpop.f32.mrb[0].mxu0
        %4820 = vdwg.mxu0
        %v4822 = vsel %vm1288, %v4658, 0
        %4824 = vmatprep.subr.bf16.mxu0 0
        %4825 = vmatpush1.bf16.msra.mxu0 %v4822
        %4826 = vmatprep.subr.bf16.mxu0 0
        %4827 = vmatpush1.bf16.msra.mxu0 0
        %4828 = vmatprep.subr.bf16.mxu0 0
        %4829 = vmatpush1.bf16.msra.mxu0 0
        %4830 = vmatprep.subr.bf16.mxu0 0
        %4831 = vmatpush1.bf16.msra.mxu0 0
        %4832 = vmatprep.subr.bf16.mxu0 0
        %4833 = vmatpush1.bf16.msra.mxu0 0
        %4834 = vmatprep.subr.bf16.mxu0 0
        %4835 = vmatpush1.bf16.msra.mxu0 0
        %4836 = vmatprep.subr.bf16.mxu0 0
        %4837 = vmatpush1.bf16.msra.mxu0 0
        %4838 = vmatprep.subr.bf16.mxu0 0
        %4839 = vmatpush1.bf16.msra.mxu0 0
        %4840 = vmatprep.subr.bf16.mxu0 0
        %4841 = vmatpush1.bf16.msra.mxu0 0
        %4842 = vmatprep.subr.bf16.mxu0 0
        %4843 = vmatpush1.bf16.msra.mxu0 0
        %4844 = vmatprep.subr.bf16.mxu0 0
        %4845 = vmatpush1.bf16.msra.mxu0 0
        %4846 = vmatprep.subr.bf16.mxu0 0
        %4847 = vmatpush1.bf16.msra.mxu0 0
        %4848 = vmatprep.subr.bf16.mxu0 0
        %4849 = vmatpush1.bf16.msra.mxu0 0
        %4850 = vmatprep.subr.bf16.mxu0 0
        %4851 = vmatpush1.bf16.msra.mxu0 0
        %4852 = vmatprep.subr.bf16.mxu0 0
        %4853 = vmatpush1.bf16.msra.mxu0 0
        %4854 = vmatprep.subr.bf16.mxu0 0
        %4855 = vmatpush1.bf16.msra.mxu0 0
        %4856 = vmatprep.mubr.bf16.mxu0 0
        %4857 = vmatmul.mubr.bf16.gmra.mrb[0].mxu0 %v2241
        %v4858 = vpop.f32.mrb[0].mxu0
        %v4859 = vadd.f32 0.0, %v4858
        %v4860 = vpop.f32.mrb[0].mxu0
        %v4861 = vpop.f32.mrb[0].mxu0
        %v4862 = vadd.f32 0.0, %v4861
        %v4863 = vpop.f32.mrb[0].mxu0
        %4864 = vmatprep.mubr.bf16.mxu0 0
        %4865 = vmatmul.mubr.bf16.gmra.mrb[0].mxu0 %v2244
        %v4866 = vpop.f32.mrb[0].mxu0
        %v4867 = vadd.f32 0.0, %v4866
        %v4868 = vpop.f32.mrb[0].mxu0
        %v4869 = vpop.f32.mrb[0].mxu0
        %v4870 = vadd.f32 0.0, %v4869
        %v4871 = vpop.f32.mrb[0].mxu0
        %4872 = vdwg.mxu0
        %v4873 = vadd.f32 %v4807, %v4859
        %v4874 = vadd.f32 %v4810, %v4862
        %v4875 = vadd.f32 %v4815, %v4867
        %v4876 = vadd.f32 %v4818, %v4870
        %v4877 = vld [vmem:[%s5 + $0x2] sm:$0x1]
        %v4878 = vlaneseq
        %v4879 = vshrl.u32 %v4878, 7
        %v4880 = vsub.s32 0, %v4879
        %v4881 = vrot.slane %v4877, %v4880
        %v4882 = vadd.f32 %v4873, %v4881
        %v4883 = vadd.f32 %v4874, %v4881
        %v4884 = vadd.f32 %v4875, %v4881
        %v4885 = vadd.f32 %v4876, %v4881
        %v4886 = vmax.f32 %v4882, 0.0
        %v4887 = vmax.f32 %v4883, 0.0
        %v4888 = vmax.f32 %v4884, 0.0
        %v4889 = vmax.f32 %v4885, 0.0
        %v4890 = vpack.c.bf16 %v4887, %v4886
        %v4891 = vpack.c.bf16 %v4889, %v4888
        %v4892 = vld [vmem:[%s2317] sm:$0xf]
        %v4893 = vld [vmem:[%s2317 + $0x4] sm:$0xf]
        %v4894 = vld [vmem:[%s2317 + $0x8] sm:$0xf]
        %v4895 = vld [vmem:[%s2317 + $0xc] sm:$0xf]
        %v4896 = vld [vmem:[%s2317 + $0x10] sm:$0xf]
        %v4897 = vld [vmem:[%s2317 + $0x14] sm:$0xf]
        %v4898 = vld [vmem:[%s2317 + $0x18] sm:$0xf]
        %v4899 = vld [vmem:[%s2317 + $0x1c] sm:$0xf]
        %v4900 = vld [vmem:[%s2317 + $0x20] sm:$0xf]
        %v4901 = vld [vmem:[%s2317 + $0x24] sm:$0xf]
        %v4902 = vld [vmem:[%s2317 + $0x28] sm:$0xf]
        %v4903 = vld [vmem:[%s2317 + $0x2c] sm:$0xf]
        %v4904 = vld [vmem:[%s2317 + $0x30] sm:$0xf]
        %v4905 = vld [vmem:[%s2317 + $0x34] sm:$0xf]
        %v4906 = vld [vmem:[%s2317 + $0x38] sm:$0xf]
        %v4907 = vld [vmem:[%s2317 + $0x3c] sm:$0xf]
        %v4908 = vld [vmem:[%s7 + $0x2] sm:$0x1]
        %v4909 = vlaneseq
        %v4910 = vshrl.u32 %v4909, 7
        %v4911 = vsub.s32 0, %v4910
        %v4912 = vrot.slane %v4908, %v4911
        %v4929 = vunpack.c.l.b16 %v4892
        %v4930 = vunpack.c.l.b16 %v4893
        %v4931 = vunpack.c.l.b16 %v4894
        %v4932 = vunpack.c.l.b16 %v4895
        %v4933 = vunpack.c.l.b16 %v4896
        %v4934 = vunpack.c.l.b16 %v4897
        %v4935 = vunpack.c.l.b16 %v4898
        %v4936 = vunpack.c.l.b16 %v4899
        %v4937 = vunpack.c.l.b16 %v4900
        %v4938 = vunpack.c.l.b16 %v4901
        %v4939 = vunpack.c.l.b16 %v4902
        %v4940 = vunpack.c.l.b16 %v4903
        %v4941 = vunpack.c.l.b16 %v4904
        %v4942 = vunpack.c.l.b16 %v4905
        %v4943 = vunpack.c.l.b16 %v4906
        %v4944 = vunpack.c.l.b16 %v4907
        %v4945 = vpack.c.b16 %v4930, %v4929
        %v4946 = vpack.c.b16 %v4932, %v4931
        %v4947 = vpack.c.b16 %v4934, %v4933
        %v4948 = vpack.c.b16 %v4936, %v4935
        %v4949 = vpack.c.b16 %v4938, %v4937
        %v4950 = vpack.c.b16 %v4940, %v4939
        %v4951 = vpack.c.b16 %v4942, %v4941
        %v4952 = vpack.c.b16 %v4944, %v4943
        %4961 = vmatprep.subr.bf16.mxu0 0
        %4962 = vmatpush1.bf16.msra.mxu0 %v4945
        %4963 = vmatprep.subr.bf16.mxu0 0
        %4964 = vmatpush1.bf16.msra.mxu0 %v4946
        %4965 = vmatprep.subr.bf16.mxu0 0
        %4966 = vmatpush1.bf16.msra.mxu0 %v4947
        %4967 = vmatprep.subr.bf16.mxu0 0
        %4968 = vmatpush1.bf16.msra.mxu0 %v4948
        %4969 = vmatprep.subr.bf16.mxu0 0
        %4970 = vmatpush1.bf16.msra.mxu0 %v4949
        %4971 = vmatprep.subr.bf16.mxu0 0
        %4972 = vmatpush1.bf16.msra.mxu0 %v4950
        %4973 = vmatprep.subr.bf16.mxu0 0
        %4974 = vmatpush1.bf16.msra.mxu0 %v4951
        %4975 = vmatprep.subr.bf16.mxu0 0
        %4976 = vmatpush1.bf16.msra.mxu0 %v4952
        %4977 = vmatprep.subr.bf16.mxu0 0
        %4978 = vmatpush1.bf16.msra.mxu0 0
        %4979 = vmatprep.subr.bf16.mxu0 0
        %4980 = vmatpush1.bf16.msra.mxu0 0
        %4981 = vmatprep.subr.bf16.mxu0 0
        %4982 = vmatpush1.bf16.msra.mxu0 0
        %4983 = vmatprep.subr.bf16.mxu0 0
        %4984 = vmatpush1.bf16.msra.mxu0 0
        %4985 = vmatprep.subr.bf16.mxu0 0
        %4986 = vmatpush1.bf16.msra.mxu0 0
        %4987 = vmatprep.subr.bf16.mxu0 0
        %4988 = vmatpush1.bf16.msra.mxu0 0
        %4989 = vmatprep.subr.bf16.mxu0 0
        %4990 = vmatpush1.bf16.msra.mxu0 0
        %4991 = vmatprep.subr.bf16.mxu0 0
        %4992 = vmatpush1.bf16.msra.mxu0 0
        %4993 = vmatprep.mubr.bf16.mxu0 0
        %4994 = vmatmul.mubr.bf16.gmra.mrb[0].mxu0 %v4890
        %v4995 = vpop.f32.mrb[0].mxu0
        %v4996 = vadd.f32 %v4912, %v4995
        %v4997 = vpop.f32.mrb[0].mxu0
        %v4998 = vpop.f32.mrb[0].mxu0
        %v4999 = vadd.f32 %v4912, %v4998
        %v5000 = vpop.f32.mrb[0].mxu0
        %5001 = vmatprep.mubr.bf16.mxu0 0
        %5002 = vmatmul.mubr.bf16.gmra.mrb[0].mxu0 %v4891
        %v5003 = vpop.f32.mrb[0].mxu0
        %v5004 = vadd.f32 %v4912, %v5003
        %v5005 = vpop.f32.mrb[0].mxu0
        %v5006 = vpop.f32.mrb[0].mxu0
        %v5007 = vadd.f32 %v4912, %v5006
        %v5008 = vpop.f32.mrb[0].mxu0
        %5009 = vdwg.mxu0
        %v5010 = vpack.c.bf16 %v4999, %v4996
        %v5011 = vpack.c.bf16 %v5007, %v5004
        %v5012 = vld [vmem:[%s2438] sm:$0xf]
        %v5013 = vld [vmem:[%s2438 + $0x4] sm:$0xf]
        %v5014 = vld [vmem:[%s2438 + $0x8] sm:$0xf]
        %v5015 = vld [vmem:[%s2438 + $0xc] sm:$0xf]
        %v5016 = vld [vmem:[%s2438 + $0x10] sm:$0xf]
        %v5017 = vld [vmem:[%s2438 + $0x14] sm:$0xf]
        %v5018 = vld [vmem:[%s2438 + $0x18] sm:$0xf]
        %v5019 = vld [vmem:[%s2438 + $0x1c] sm:$0xf]
        %v5020 = vld [vmem:[%s2438 + $0x20] sm:$0xf]
        %v5021 = vld [vmem:[%s2438 + $0x24] sm:$0xf]
        %v5022 = vld [vmem:[%s2438 + $0x28] sm:$0xf]
        %v5023 = vld [vmem:[%s2438 + $0x2c] sm:$0xf]
        %v5024 = vld [vmem:[%s2438 + $0x30] sm:$0xf]
        %v5025 = vld [vmem:[%s2438 + $0x34] sm:$0xf]
        %v5026 = vld [vmem:[%s2438 + $0x38] sm:$0xf]
        %v5027 = vld [vmem:[%s2438 + $0x3c] sm:$0xf]
        %v5028 = vld [vmem:[%s5 + $0x3] sm:$0x1]
        %v5029 = vlaneseq
        %v5030 = vshrl.u32 %v5029, 7
        %v5031 = vsub.s32 0, %v5030
        %v5032 = vrot.slane %v5028, %v5031
        %v5049 = vunpack.c.l.b16 %v5012
        %v5050 = vunpack.c.l.b16 %v5013
        %v5051 = vunpack.c.l.b16 %v5014
        %v5052 = vunpack.c.l.b16 %v5015
        %v5053 = vunpack.c.l.b16 %v5016
        %v5054 = vunpack.c.l.b16 %v5017
        %v5055 = vunpack.c.l.b16 %v5018
        %v5056 = vunpack.c.l.b16 %v5019
        %v5057 = vunpack.c.l.b16 %v5020
        %v5058 = vunpack.c.l.b16 %v5021
        %v5059 = vunpack.c.l.b16 %v5022
        %v5060 = vunpack.c.l.b16 %v5023
        %v5061 = vunpack.c.l.b16 %v5024
        %v5062 = vunpack.c.l.b16 %v5025
        %v5063 = vunpack.c.l.b16 %v5026
        %v5064 = vunpack.c.l.b16 %v5027
        %v5065 = vpack.c.b16 %v5050, %v5049
        %v5066 = vpack.c.b16 %v5052, %v5051
        %v5067 = vpack.c.b16 %v5054, %v5053
        %v5068 = vpack.c.b16 %v5056, %v5055
        %v5069 = vpack.c.b16 %v5058, %v5057
        %v5070 = vpack.c.b16 %v5060, %v5059
        %v5071 = vpack.c.b16 %v5062, %v5061
        %v5072 = vpack.c.b16 %v5064, %v5063
        %5081 = vmatprep.subr.bf16.mxu0 0
        %5082 = vmatpush1.bf16.msra.mxu0 %v5065
        %5083 = vmatprep.subr.bf16.mxu0 0
        %5084 = vmatpush1.bf16.msra.mxu0 %v5066
        %5085 = vmatprep.subr.bf16.mxu0 0
        %5086 = vmatpush1.bf16.msra.mxu0 %v5067
        %5087 = vmatprep.subr.bf16.mxu0 0
        %5088 = vmatpush1.bf16.msra.mxu0 %v5068
        %5089 = vmatprep.subr.bf16.mxu0 0
        %5090 = vmatpush1.bf16.msra.mxu0 %v5069
        %5091 = vmatprep.subr.bf16.mxu0 0
        %5092 = vmatpush1.bf16.msra.mxu0 %v5070
        %5093 = vmatprep.subr.bf16.mxu0 0
        %5094 = vmatpush1.bf16.msra.mxu0 %v5071
        %5095 = vmatprep.subr.bf16.mxu0 0
        %5096 = vmatpush1.bf16.msra.mxu0 %v5072
        %5097 = vmatprep.subr.bf16.mxu0 0
        %5098 = vmatpush1.bf16.msra.mxu0 0
        %5099 = vmatprep.subr.bf16.mxu0 0
        %5100 = vmatpush1.bf16.msra.mxu0 0
        %5101 = vmatprep.subr.bf16.mxu0 0
        %5102 = vmatpush1.bf16.msra.mxu0 0
        %5103 = vmatprep.subr.bf16.mxu0 0
        %5104 = vmatpush1.bf16.msra.mxu0 0
        %5105 = vmatprep.subr.bf16.mxu0 0
        %5106 = vmatpush1.bf16.msra.mxu0 0
        %5107 = vmatprep.subr.bf16.mxu0 0
        %5108 = vmatpush1.bf16.msra.mxu0 0
        %5109 = vmatprep.subr.bf16.mxu0 0
        %5110 = vmatpush1.bf16.msra.mxu0 0
        %5111 = vmatprep.subr.bf16.mxu0 0
        %5112 = vmatpush1.bf16.msra.mxu0 0
        %5113 = vmatprep.mubr.bf16.mxu0 0
        %5114 = vmatmul.mubr.bf16.gmra.mrb[0].mxu0 %v5010
        %v5115 = vpop.f32.mrb[0].mxu0
        %v5116 = vadd.f32 %v5032, %v5115
        %v5117 = vpop.f32.mrb[0].mxu0
        %v5118 = vpop.f32.mrb[0].mxu0
        %v5119 = vadd.f32 %v5032, %v5118
        %v5120 = vpop.f32.mrb[0].mxu0
        %5121 = vmatprep.mubr.bf16.mxu0 0
        %5122 = vmatmul.mubr.bf16.gmra.mrb[0].mxu0 %v5011
        %v5123 = vpop.f32.mrb[0].mxu0
        %v5124 = vadd.f32 %v5032, %v5123
        %v5125 = vpop.f32.mrb[0].mxu0
        %v5126 = vpop.f32.mrb[0].mxu0
        %v5127 = vadd.f32 %v5032, %v5126
        %v5128 = vpop.f32.mrb[0].mxu0
        %5129 = vdwg.mxu0
        %v5130 = vmax.f32 %v5116, 0.0
        %v5131 = vmax.f32 %v5119, 0.0
        %v5132 = vmax.f32 %v5124, 0.0
        %v5133 = vmax.f32 %v5127, 0.0
        %v5134 = vpack.c.bf16 %v5131, %v5130
        %v5135 = vpack.c.bf16 %v5133, %v5132
        %v5136 = vld [vmem:[%s2563] sm:$0xf]
        %v5137 = vld [vmem:[%s2563 + $0x4] sm:$0xf]
        %v5138 = vld [vmem:[%s2563 + $0x8] sm:$0xf]
        %v5139 = vld [vmem:[%s2563 + $0xc] sm:$0xf]
        %v5140 = vld [vmem:[%s2563 + $0x10] sm:$0xf]
        %v5141 = vld [vmem:[%s2563 + $0x14] sm:$0xf]
        %v5142 = vld [vmem:[%s2563 + $0x18] sm:$0xf]
        %v5143 = vld [vmem:[%s2563 + $0x1c] sm:$0xf]
        %v5144 = vld [vmem:[%s2563 + $0x20] sm:$0xf]
        %v5145 = vld [vmem:[%s2563 + $0x24] sm:$0xf]
        %v5146 = vld [vmem:[%s2563 + $0x28] sm:$0xf]
        %v5147 = vld [vmem:[%s2563 + $0x2c] sm:$0xf]
        %v5148 = vld [vmem:[%s2563 + $0x30] sm:$0xf]
        %v5149 = vld [vmem:[%s2563 + $0x34] sm:$0xf]
        %v5150 = vld [vmem:[%s2563 + $0x38] sm:$0xf]
        %v5151 = vld [vmem:[%s2563 + $0x3c] sm:$0xf]
        %v5152 = vld [vmem:[%s7 + $0x3] sm:$0x1]
        %v5153 = vlaneseq
        %v5154 = vshrl.u32 %v5153, 7
        %v5155 = vsub.s32 0, %v5154
        %v5156 = vrot.slane %v5152, %v5155
        %v5173 = vunpack.c.l.b16 %v5136
        %v5174 = vunpack.c.l.b16 %v5137
        %v5175 = vunpack.c.l.b16 %v5138
        %v5176 = vunpack.c.l.b16 %v5139
        %v5177 = vunpack.c.l.b16 %v5140
        %v5178 = vunpack.c.l.b16 %v5141
        %v5179 = vunpack.c.l.b16 %v5142
        %v5180 = vunpack.c.l.b16 %v5143
        %v5181 = vunpack.c.l.b16 %v5144
        %v5182 = vunpack.c.l.b16 %v5145
        %v5183 = vunpack.c.l.b16 %v5146
        %v5184 = vunpack.c.l.b16 %v5147
        %v5185 = vunpack.c.l.b16 %v5148
        %v5186 = vunpack.c.l.b16 %v5149
        %v5187 = vunpack.c.l.b16 %v5150
        %v5188 = vunpack.c.l.b16 %v5151
        %v5189 = vpack.c.b16 %v5174, %v5173
        %v5190 = vpack.c.b16 %v5176, %v5175
        %v5191 = vpack.c.b16 %v5178, %v5177
        %v5192 = vpack.c.b16 %v5180, %v5179
        %v5193 = vpack.c.b16 %v5182, %v5181
        %v5194 = vpack.c.b16 %v5184, %v5183
        %v5195 = vpack.c.b16 %v5186, %v5185
        %v5196 = vpack.c.b16 %v5188, %v5187
        %5205 = vmatprep.subr.bf16.mxu0 0
        %5206 = vmatpush1.bf16.msra.mxu0 %v5189
        %5207 = vmatprep.subr.bf16.mxu0 0
        %5208 = vmatpush1.bf16.msra.mxu0 %v5190
        %5209 = vmatprep.subr.bf16.mxu0 0
        %5210 = vmatpush1.bf16.msra.mxu0 %v5191
        %5211 = vmatprep.subr.bf16.mxu0 0
        %5212 = vmatpush1.bf16.msra.mxu0 %v5192
        %5213 = vmatprep.subr.bf16.mxu0 0
        %5214 = vmatpush1.bf16.msra.mxu0 %v5193
        %5215 = vmatprep.subr.bf16.mxu0 0
        %5216 = vmatpush1.bf16.msra.mxu0 %v5194
        %5217 = vmatprep.subr.bf16.mxu0 0
        %5218 = vmatpush1.bf16.msra.mxu0 %v5195
        %5219 = vmatprep.subr.bf16.mxu0 0
        %5220 = vmatpush1.bf16.msra.mxu0 %v5196
        %5221 = vmatprep.subr.bf16.mxu0 0
        %5222 = vmatpush1.bf16.msra.mxu0 0
        %5223 = vmatprep.subr.bf16.mxu0 0
        %5224 = vmatpush1.bf16.msra.mxu0 0
        %5225 = vmatprep.subr.bf16.mxu0 0
        %5226 = vmatpush1.bf16.msra.mxu0 0
        %5227 = vmatprep.subr.bf16.mxu0 0
        %5228 = vmatpush1.bf16.msra.mxu0 0
        %5229 = vmatprep.subr.bf16.mxu0 0
        %5230 = vmatpush1.bf16.msra.mxu0 0
        %5231 = vmatprep.subr.bf16.mxu0 0
        %5232 = vmatpush1.bf16.msra.mxu0 0
        %5233 = vmatprep.subr.bf16.mxu0 0
        %5234 = vmatpush1.bf16.msra.mxu0 0
        %5235 = vmatprep.subr.bf16.mxu0 0
        %5236 = vmatpush1.bf16.msra.mxu0 0
        %5237 = vmatprep.mubr.bf16.mxu0 0
        %5238 = vmatmul.mubr.bf16.gmra.mrb[0].mxu0 %v5134
        %v5239 = vpop.f32.mrb[0].mxu0
        %v5240 = vadd.f32 %v5156, %v5239
        %v5241 = vpop.f32.mrb[0].mxu0
        %v5242 = vpop.f32.mrb[0].mxu0
        %v5243 = vadd.f32 %v5156, %v5242
        %v5244 = vpop.f32.mrb[0].mxu0
        %5245 = vmatprep.mubr.bf16.mxu0 0
        %5246 = vmatmul.mubr.bf16.gmra.mrb[0].mxu0 %v5135
        %v5247 = vpop.f32.mrb[0].mxu0
        %v5248 = vadd.f32 %v5156, %v5247
        %v5249 = vpop.f32.mrb[0].mxu0
        %v5250 = vpop.f32.mrb[0].mxu0
        %v5251 = vadd.f32 %v5156, %v5250
        %v5252 = vpop.f32.mrb[0].mxu0
        %5253 = vdwg.mxu0
        %v5254 = vpack.c.bf16 %v5243, %v5240
        %v5255 = vpack.c.bf16 %v5251, %v5248
        %5256 = vmatprep.subr.bf16.mxu0 0
        %5257 = vmatpush1.bf16.msra.mxu0 %v5254
        %5258 = vmatprep.subr.bf16.mxu0 0
        %5259 = vmatpush1.bf16.msra.mxu0 %v5255
        %5260 = vmatprep.subr.bf16.mxu0 0
        %5261 = vmatpush1.bf16.msra.mxu0 0
        %5262 = vmatprep.subr.bf16.mxu0 0
        %5263 = vmatpush1.bf16.msra.mxu0 0
        %5264 = vmatprep.subr.bf16.mxu0 0
        %5265 = vmatpush1.bf16.msra.mxu0 0
        %5266 = vmatprep.subr.bf16.mxu0 0
        %5267 = vmatpush1.bf16.msra.mxu0 0
        %5268 = vmatprep.subr.bf16.mxu0 0
        %5269 = vmatpush1.bf16.msra.mxu0 0
        %5270 = vmatprep.subr.bf16.mxu0 0
        %5271 = vmatpush1.bf16.msra.mxu0 0
        %5272 = vmatprep.subr.bf16.mxu0 0
        %5273 = vmatpush1.bf16.msra.mxu0 0
        %5274 = vmatprep.subr.bf16.mxu0 0
        %5275 = vmatpush1.bf16.msra.mxu0 0
        %5276 = vmatprep.subr.bf16.mxu0 0
        %5277 = vmatpush1.bf16.msra.mxu0 0
        %5278 = vmatprep.subr.bf16.mxu0 0
        %5279 = vmatpush1.bf16.msra.mxu0 0
        %5280 = vmatprep.subr.bf16.mxu0 0
        %5281 = vmatpush1.bf16.msra.mxu0 0
        %5282 = vmatprep.subr.bf16.mxu0 0
        %5283 = vmatpush1.bf16.msra.mxu0 0
        %5284 = vmatprep.subr.bf16.mxu0 0
        %5285 = vmatpush1.bf16.msra.mxu0 0
        %5286 = vmatprep.subr.bf16.mxu0 0
        %5287 = vmatpush1.bf16.msra.mxu0 0
        %5288 = vmatprep.mubr.bf16.mxu0 0
        %5289 = vmatmul.mubr.bf16.gmra.mrb[0].mxu0 %v2701
        %v5290 = vpop.f32.mrb[0].mxu0
        %v5291 = vadd.f32 0.0, %v5290
        %v5292 = vpop.f32.mrb[0].mxu0
        %v5293 = vpop.f32.mrb[0].mxu0
        %v5294 = vpop.f32.mrb[0].mxu0
        %5295 = vdwg.mxu0
        %v5296 = vpack.c.bf16 %v5291, %v5291
        %v5297 = vld [vmem:[%s2744] sm:$0xf]
        %v5298 = vld [vmem:[%s2744 + $0x4] sm:$0xf]
        %v5299 = vld [vmem:[%s2744 + $0x8] sm:$0xf]
        %v5300 = vld [vmem:[%s2744 + $0xc] sm:$0xf]
        %v5301 = vld [vmem:[%s2744 + $0x10] sm:$0xf]
        %v5302 = vld [vmem:[%s2744 + $0x14] sm:$0xf]
        %v5303 = vld [vmem:[%s2744 + $0x18] sm:$0xf]
        %v5304 = vld [vmem:[%s2744 + $0x1c] sm:$0xf]
        %v5305 = vld [vmem:[%s2744 + $0x20] sm:$0xf]
        %v5306 = vld [vmem:[%s2744 + $0x24] sm:$0xf]
        %v5307 = vld [vmem:[%s2744 + $0x28] sm:$0xf]
        %v5308 = vld [vmem:[%s2744 + $0x2c] sm:$0xf]
        %v5309 = vld [vmem:[%s2744 + $0x30] sm:$0xf]
        %v5310 = vld [vmem:[%s2744 + $0x34] sm:$0xf]
        %v5311 = vld [vmem:[%s2744 + $0x38] sm:$0xf]
        %v5312 = vld [vmem:[%s2744 + $0x3c] sm:$0xf]
        %v5313 = vld [vmem:[%s2761] sm:$0xf]
        %v5314 = vld [vmem:[%s2761 + $0x4] sm:$0xf]
        %v5315 = vld [vmem:[%s2761 + $0x8] sm:$0xf]
        %v5316 = vld [vmem:[%s2761 + $0xc] sm:$0xf]
        %v5317 = vld [vmem:[%s2761 + $0x10] sm:$0xf]
        %v5318 = vld [vmem:[%s2761 + $0x14] sm:$0xf]
        %v5319 = vld [vmem:[%s2761 + $0x18] sm:$0xf]
        %v5320 = vld [vmem:[%s2761 + $0x1c] sm:$0xf]
        %v5321 = vld [vmem:[%s2761 + $0x20] sm:$0xf]
        %v5322 = vld [vmem:[%s2761 + $0x24] sm:$0xf]
        %v5323 = vld [vmem:[%s2761 + $0x28] sm:$0xf]
        %v5324 = vld [vmem:[%s2761 + $0x2c] sm:$0xf]
        %v5325 = vld [vmem:[%s2761 + $0x30] sm:$0xf]
        %v5326 = vld [vmem:[%s2761 + $0x34] sm:$0xf]
        %v5327 = vld [vmem:[%s2761 + $0x38] sm:$0xf]
        %v5328 = vld [vmem:[%s2761 + $0x3c] sm:$0xf]
        %v5345 = vunpack.c.l.b16 %v5313
        %v5346 = vunpack.c.l.b16 %v5314
        %v5347 = vunpack.c.l.b16 %v5315
        %v5348 = vunpack.c.l.b16 %v5316
        %v5349 = vunpack.c.l.b16 %v5317
        %v5350 = vunpack.c.l.b16 %v5318
        %v5351 = vunpack.c.l.b16 %v5319
        %v5352 = vunpack.c.l.b16 %v5320
        %v5353 = vunpack.c.l.b16 %v5321
        %v5354 = vunpack.c.l.b16 %v5322
        %v5355 = vunpack.c.l.b16 %v5323
        %v5356 = vunpack.c.l.b16 %v5324
        %v5357 = vunpack.c.l.b16 %v5325
        %v5358 = vunpack.c.l.b16 %v5326
        %v5359 = vunpack.c.l.b16 %v5327
        %v5360 = vunpack.c.l.b16 %v5328
        %v5361 = vpack.c.b16 %v5346, %v5345
        %v5362 = vpack.c.b16 %v5348, %v5347
        %v5363 = vpack.c.b16 %v5350, %v5349
        %v5364 = vpack.c.b16 %v5352, %v5351
        %v5365 = vpack.c.b16 %v5354, %v5353
        %v5366 = vpack.c.b16 %v5356, %v5355
        %v5367 = vpack.c.b16 %v5358, %v5357
        %v5368 = vpack.c.b16 %v5360, %v5359
        %5377 = vmatprep.subr.bf16.mxu0 0
        %5378 = vmatpush1.bf16.msra.mxu0 %v5361
        %5379 = vmatprep.subr.bf16.mxu0 0
        %5380 = vmatpush1.bf16.msra.mxu0 %v5362
        %5381 = vmatprep.subr.bf16.mxu0 0
        %5382 = vmatpush1.bf16.msra.mxu0 %v5363
        %5383 = vmatprep.subr.bf16.mxu0 0
        %5384 = vmatpush1.bf16.msra.mxu0 %v5364
        %5385 = vmatprep.subr.bf16.mxu0 0
        %5386 = vmatpush1.bf16.msra.mxu0 %v5365
        %5387 = vmatprep.subr.bf16.mxu0 0
        %5388 = vmatpush1.bf16.msra.mxu0 %v5366
        %5389 = vmatprep.subr.bf16.mxu0 0
        %5390 = vmatpush1.bf16.msra.mxu0 %v5367
        %5391 = vmatprep.subr.bf16.mxu0 0
        %5392 = vmatpush1.bf16.msra.mxu0 %v5368
        %5393 = vmatprep.subr.bf16.mxu0 0
        %5394 = vmatpush1.bf16.msra.mxu0 0
        %5395 = vmatprep.subr.bf16.mxu0 0
        %5396 = vmatpush1.bf16.msra.mxu0 0
        %5397 = vmatprep.subr.bf16.mxu0 0
        %5398 = vmatpush1.bf16.msra.mxu0 0
        %5399 = vmatprep.subr.bf16.mxu0 0
        %5400 = vmatpush1.bf16.msra.mxu0 0
        %5401 = vmatprep.subr.bf16.mxu0 0
        %5402 = vmatpush1.bf16.msra.mxu0 0
        %5403 = vmatprep.subr.bf16.mxu0 0
        %5404 = vmatpush1.bf16.msra.mxu0 0
        %5405 = vmatprep.subr.bf16.mxu0 0
        %5406 = vmatpush1.bf16.msra.mxu0 0
        %5407 = vmatprep.subr.bf16.mxu0 0
        %5408 = vmatpush1.bf16.msra.mxu0 0
        %5409 = vmatprep.mubr.bf16.mxu0 0
        %5410 = vmatmul.mubr.bf16.gmra.mrb[0].mxu0 %v3072
        %v5411 = vpop.f32.mrb[0].mxu0
        %v5412 = vadd.f32 0.0, %v5411
        %v5413 = vpop.f32.mrb[0].mxu0
        %v5414 = vpop.f32.mrb[0].mxu0
        %v5415 = vpop.f32.mrb[0].mxu0
        %5416 = vdwg.mxu0
        %v5433 = vunpack.c.l.b16 %v5297
        %v5434 = vunpack.c.l.b16 %v5298
        %v5435 = vunpack.c.l.b16 %v5299
        %v5436 = vunpack.c.l.b16 %v5300
        %v5437 = vunpack.c.l.b16 %v5301
        %v5438 = vunpack.c.l.b16 %v5302
        %v5439 = vunpack.c.l.b16 %v5303
        %v5440 = vunpack.c.l.b16 %v5304
        %v5441 = vunpack.c.l.b16 %v5305
        %v5442 = vunpack.c.l.b16 %v5306
        %v5443 = vunpack.c.l.b16 %v5307
        %v5444 = vunpack.c.l.b16 %v5308
        %v5445 = vunpack.c.l.b16 %v5309
        %v5446 = vunpack.c.l.b16 %v5310
        %v5447 = vunpack.c.l.b16 %v5311
        %v5448 = vunpack.c.l.b16 %v5312
        %v5449 = vpack.c.b16 %v5434, %v5433
        %v5450 = vpack.c.b16 %v5436, %v5435
        %v5451 = vpack.c.b16 %v5438, %v5437
        %v5452 = vpack.c.b16 %v5440, %v5439
        %v5453 = vpack.c.b16 %v5442, %v5441
        %v5454 = vpack.c.b16 %v5444, %v5443
        %v5455 = vpack.c.b16 %v5446, %v5445
        %v5456 = vpack.c.b16 %v5448, %v5447
        %5465 = vmatprep.subr.bf16.mxu0 0
        %5466 = vmatpush1.bf16.msra.mxu0 %v5449
        %5467 = vmatprep.subr.bf16.mxu0 0
        %5468 = vmatpush1.bf16.msra.mxu0 %v5450
        %5469 = vmatprep.subr.bf16.mxu0 0
        %5470 = vmatpush1.bf16.msra.mxu0 %v5451
        %5471 = vmatprep.subr.bf16.mxu0 0
        %5472 = vmatpush1.bf16.msra.mxu0 %v5452
        %5473 = vmatprep.subr.bf16.mxu0 0
        %5474 = vmatpush1.bf16.msra.mxu0 %v5453
        %5475 = vmatprep.subr.bf16.mxu0 0
        %5476 = vmatpush1.bf16.msra.mxu0 %v5454
        %5477 = vmatprep.subr.bf16.mxu0 0
        %5478 = vmatpush1.bf16.msra.mxu0 %v5455
        %5479 = vmatprep.subr.bf16.mxu0 0
        %5480 = vmatpush1.bf16.msra.mxu0 %v5456
        %5481 = vmatprep.subr.bf16.mxu0 0
        %5482 = vmatpush1.bf16.msra.mxu0 0
        %5483 = vmatprep.subr.bf16.mxu0 0
        %5484 = vmatpush1.bf16.msra.mxu0 0
        %5485 = vmatprep.subr.bf16.mxu0 0
        %5486 = vmatpush1.bf16.msra.mxu0 0
        %5487 = vmatprep.subr.bf16.mxu0 0
        %5488 = vmatpush1.bf16.msra.mxu0 0
        %5489 = vmatprep.subr.bf16.mxu0 0
        %5490 = vmatpush1.bf16.msra.mxu0 0
        %5491 = vmatprep.subr.bf16.mxu0 0
        %5492 = vmatpush1.bf16.msra.mxu0 0
        %5493 = vmatprep.subr.bf16.mxu0 0
        %5494 = vmatpush1.bf16.msra.mxu0 0
        %5495 = vmatprep.subr.bf16.mxu0 0
        %5496 = vmatpush1.bf16.msra.mxu0 0
        %5497 = vmatprep.mubr.bf16.mxu0 0
        %5498 = vmatmul.mubr.bf16.gmra.mrb[0].mxu0 %v5296
        %v5499 = vpop.f32.mrb[0].mxu0
        %v5500 = vadd.f32 %v5412, %v5499
        %v5501 = vpop.f32.mrb[0].mxu0
        %v5502 = vpop.f32.mrb[0].mxu0
        %v5503 = vpop.f32.mrb[0].mxu0
        %5504 = vdwg.mxu0
        %v5505 = vld [vmem:[%s5 + $0x4] sm:$0x1]
        %v5506 = vlaneseq
        %v5507 = vshrl.u32 %v5506, 7
        %v5508 = vsub.s32 0, %v5507
        %v5509 = vrot.slane %v5505, %v5508
        %v5510 = vadd.f32 %v5500, %v5509
        %v5511 = vmax.f32 %v5510, 0.0
        %v5512 = vpack.c.bf16 %v5511, %v5511
        %v5513 = vld [vmem:[%s2962] sm:$0xf]
        %v5514 = vld [vmem:[%s2962 + $0x4] sm:$0xf]
        %v5515 = vld [vmem:[%s2962 + $0x8] sm:$0xf]
        %v5516 = vld [vmem:[%s2962 + $0xc] sm:$0xf]
        %v5517 = vld [vmem:[%s2962 + $0x10] sm:$0xf]
        %v5518 = vld [vmem:[%s2962 + $0x14] sm:$0xf]
        %v5519 = vld [vmem:[%s2962 + $0x18] sm:$0xf]
        %v5520 = vld [vmem:[%s2962 + $0x1c] sm:$0xf]
        %v5521 = vld [vmem:[%s2962 + $0x20] sm:$0xf]
        %v5522 = vld [vmem:[%s2962 + $0x24] sm:$0xf]
        %v5523 = vld [vmem:[%s2962 + $0x28] sm:$0xf]
        %v5524 = vld [vmem:[%s2962 + $0x2c] sm:$0xf]
        %v5525 = vld [vmem:[%s2962 + $0x30] sm:$0xf]
        %v5526 = vld [vmem:[%s2962 + $0x34] sm:$0xf]
        %v5527 = vld [vmem:[%s2962 + $0x38] sm:$0xf]
        %v5528 = vld [vmem:[%s2962 + $0x3c] sm:$0xf]
        %v5529 = vld [vmem:[%s7 + $0x4] sm:$0x1]
        %v5530 = vlaneseq
        %v5531 = vshrl.u32 %v5530, 7
        %v5532 = vsub.s32 0, %v5531
        %v5533 = vrot.slane %v5529, %v5532
        %v5550 = vunpack.c.l.b16 %v5513
        %v5551 = vunpack.c.l.b16 %v5514
        %v5552 = vunpack.c.l.b16 %v5515
        %v5553 = vunpack.c.l.b16 %v5516
        %v5554 = vunpack.c.l.b16 %v5517
        %v5555 = vunpack.c.l.b16 %v5518
        %v5556 = vunpack.c.l.b16 %v5519
        %v5557 = vunpack.c.l.b16 %v5520
        %v5558 = vunpack.c.l.b16 %v5521
        %v5559 = vunpack.c.l.b16 %v5522
        %v5560 = vunpack.c.l.b16 %v5523
        %v5561 = vunpack.c.l.b16 %v5524
        %v5562 = vunpack.c.l.b16 %v5525
        %v5563 = vunpack.c.l.b16 %v5526
        %v5564 = vunpack.c.l.b16 %v5527
        %v5565 = vunpack.c.l.b16 %v5528
        %v5566 = vpack.c.b16 %v5551, %v5550
        %v5567 = vpack.c.b16 %v5553, %v5552
        %v5568 = vpack.c.b16 %v5555, %v5554
        %v5569 = vpack.c.b16 %v5557, %v5556
        %v5570 = vpack.c.b16 %v5559, %v5558
        %v5571 = vpack.c.b16 %v5561, %v5560
        %v5572 = vpack.c.b16 %v5563, %v5562
        %v5573 = vpack.c.b16 %v5565, %v5564
        %5582 = vmatprep.subr.bf16.mxu0 0
        %5583 = vmatpush1.bf16.msra.mxu0 %v5566
        %5584 = vmatprep.subr.bf16.mxu0 0
        %5585 = vmatpush1.bf16.msra.mxu0 %v5567
        %5586 = vmatprep.subr.bf16.mxu0 0
        %5587 = vmatpush1.bf16.msra.mxu0 %v5568
        %5588 = vmatprep.subr.bf16.mxu0 0
        %5589 = vmatpush1.bf16.msra.mxu0 %v5569
        %5590 = vmatprep.subr.bf16.mxu0 0
        %5591 = vmatpush1.bf16.msra.mxu0 %v5570
        %5592 = vmatprep.subr.bf16.mxu0 0
        %5593 = vmatpush1.bf16.msra.mxu0 %v5571
        %5594 = vmatprep.subr.bf16.mxu0 0
        %5595 = vmatpush1.bf16.msra.mxu0 %v5572
        %5596 = vmatprep.subr.bf16.mxu0 0
        %5597 = vmatpush1.bf16.msra.mxu0 %v5573
        %5598 = vmatprep.subr.bf16.mxu0 0
        %5599 = vmatpush1.bf16.msra.mxu0 0
        %5600 = vmatprep.subr.bf16.mxu0 0
        %5601 = vmatpush1.bf16.msra.mxu0 0
        %5602 = vmatprep.subr.bf16.mxu0 0
        %5603 = vmatpush1.bf16.msra.mxu0 0
        %5604 = vmatprep.subr.bf16.mxu0 0
        %5605 = vmatpush1.bf16.msra.mxu0 0
        %5606 = vmatprep.subr.bf16.mxu0 0
        %5607 = vmatpush1.bf16.msra.mxu0 0
        %5608 = vmatprep.subr.bf16.mxu0 0
        %5609 = vmatpush1.bf16.msra.mxu0 0
        %5610 = vmatprep.subr.bf16.mxu0 0
        %5611 = vmatpush1.bf16.msra.mxu0 0
        %5612 = vmatprep.subr.bf16.mxu0 0
        %5613 = vmatpush1.bf16.msra.mxu0 0
        %5614 = vmatprep.mubr.bf16.mxu0 0
        %5615 = vmatmul.mubr.bf16.gmra.mrb[0].mxu0 %v5512
        %v5616 = vpop.f32.mrb[0].mxu0
        %v5617 = vadd.f32 %v5533, %v5616
        %v5618 = vpop.f32.mrb[0].mxu0
        %v5619 = vpop.f32.mrb[0].mxu0
        %v5620 = vpop.f32.mrb[0].mxu0
        %5621 = vdwg.mxu0
        %v5622 = vpack.c.bf16 %v5617, %v5617
        %v5623 = vld [vmem:[%s3073] sm:$0xf]
        %v5624 = vld [vmem:[%s3073 + $0x4] sm:$0xf]
        %v5625 = vld [vmem:[%s3073 + $0x8] sm:$0xf]
        %v5626 = vld [vmem:[%s3073 + $0xc] sm:$0xf]
        %v5627 = vld [vmem:[%s3073 + $0x10] sm:$0xf]
        %v5628 = vld [vmem:[%s3073 + $0x14] sm:$0xf]
        %v5629 = vld [vmem:[%s3073 + $0x18] sm:$0xf]
        %v5630 = vld [vmem:[%s3073 + $0x1c] sm:$0xf]
        %v5631 = vld [vmem:[%s3073 + $0x20] sm:$0xf]
        %v5632 = vld [vmem:[%s3073 + $0x24] sm:$0xf]
        %v5633 = vld [vmem:[%s3073 + $0x28] sm:$0xf]
        %v5634 = vld [vmem:[%s3073 + $0x2c] sm:$0xf]
        %v5635 = vld [vmem:[%s3073 + $0x30] sm:$0xf]
        %v5636 = vld [vmem:[%s3073 + $0x34] sm:$0xf]
        %v5637 = vld [vmem:[%s3073 + $0x38] sm:$0xf]
        %v5638 = vld [vmem:[%s3073 + $0x3c] sm:$0xf]
        %v5639 = vld [vmem:[%s5 + $0x5] sm:$0x1]
        %v5640 = vlaneseq
        %v5641 = vshrl.u32 %v5640, 7
        %v5642 = vsub.s32 0, %v5641
        %v5643 = vrot.slane %v5639, %v5642
        %v5660 = vunpack.c.l.b16 %v5623
        %v5661 = vunpack.c.l.b16 %v5624
        %v5662 = vunpack.c.l.b16 %v5625
        %v5663 = vunpack.c.l.b16 %v5626
        %v5664 = vunpack.c.l.b16 %v5627
        %v5665 = vunpack.c.l.b16 %v5628
        %v5666 = vunpack.c.l.b16 %v5629
        %v5667 = vunpack.c.l.b16 %v5630
        %v5668 = vunpack.c.l.b16 %v5631
        %v5669 = vunpack.c.l.b16 %v5632
        %v5670 = vunpack.c.l.b16 %v5633
        %v5671 = vunpack.c.l.b16 %v5634
        %v5672 = vunpack.c.l.b16 %v5635
        %v5673 = vunpack.c.l.b16 %v5636
        %v5674 = vunpack.c.l.b16 %v5637
        %v5675 = vunpack.c.l.b16 %v5638
        %v5676 = vpack.c.b16 %v5661, %v5660
        %v5677 = vpack.c.b16 %v5663, %v5662
        %v5678 = vpack.c.b16 %v5665, %v5664
        %v5679 = vpack.c.b16 %v5667, %v5666
        %v5680 = vpack.c.b16 %v5669, %v5668
        %v5681 = vpack.c.b16 %v5671, %v5670
        %v5682 = vpack.c.b16 %v5673, %v5672
        %v5683 = vpack.c.b16 %v5675, %v5674
        %5692 = vmatprep.subr.bf16.mxu0 0
        %5693 = vmatpush1.bf16.msra.mxu0 %v5676
        %5694 = vmatprep.subr.bf16.mxu0 0
        %5695 = vmatpush1.bf16.msra.mxu0 %v5677
        %5696 = vmatprep.subr.bf16.mxu0 0
        %5697 = vmatpush1.bf16.msra.mxu0 %v5678
        %5698 = vmatprep.subr.bf16.mxu0 0
        %5699 = vmatpush1.bf16.msra.mxu0 %v5679
        %5700 = vmatprep.subr.bf16.mxu0 0
        %5701 = vmatpush1.bf16.msra.mxu0 %v5680
        %5702 = vmatprep.subr.bf16.mxu0 0
        %5703 = vmatpush1.bf16.msra.mxu0 %v5681
        %5704 = vmatprep.subr.bf16.mxu0 0
        %5705 = vmatpush1.bf16.msra.mxu0 %v5682
        %5706 = vmatprep.subr.bf16.mxu0 0
        %5707 = vmatpush1.bf16.msra.mxu0 %v5683
        %5708 = vmatprep.subr.bf16.mxu0 0
        %5709 = vmatpush1.bf16.msra.mxu0 0
        %5710 = vmatprep.subr.bf16.mxu0 0
        %5711 = vmatpush1.bf16.msra.mxu0 0
        %5712 = vmatprep.subr.bf16.mxu0 0
        %5713 = vmatpush1.bf16.msra.mxu0 0
        %5714 = vmatprep.subr.bf16.mxu0 0
        %5715 = vmatpush1.bf16.msra.mxu0 0
        %5716 = vmatprep.subr.bf16.mxu0 0
        %5717 = vmatpush1.bf16.msra.mxu0 0
        %5718 = vmatprep.subr.bf16.mxu0 0
        %5719 = vmatpush1.bf16.msra.mxu0 0
        %5720 = vmatprep.subr.bf16.mxu0 0
        %5721 = vmatpush1.bf16.msra.mxu0 0
        %5722 = vmatprep.subr.bf16.mxu0 0
        %5723 = vmatpush1.bf16.msra.mxu0 0
        %5724 = vmatprep.mubr.bf16.mxu0 0
        %5725 = vmatmul.mubr.bf16.gmra.mrb[0].mxu0 %v5622
        %v5726 = vpop.f32.mrb[0].mxu0
        %v5727 = vadd.f32 %v5643, %v5726
        %v5728 = vpop.f32.mrb[0].mxu0
        %v5729 = vpop.f32.mrb[0].mxu0
        %v5730 = vpop.f32.mrb[0].mxu0
        %5731 = vdwg.mxu0
        %v5732 = vmax.f32 %v5727, 0.0
        %v5733 = vpack.c.bf16 %v5732, %v5732
        %v5734 = vld [vmem:[%s3185] sm:$0xf]
        %v5735 = vld [vmem:[%s3185 + $0x4] sm:$0xf]
        %v5736 = vld [vmem:[%s3185 + $0x8] sm:$0xf]
        %v5737 = vld [vmem:[%s3185 + $0xc] sm:$0xf]
        %v5738 = vld [vmem:[%s3185 + $0x10] sm:$0xf]
        %v5739 = vld [vmem:[%s3185 + $0x14] sm:$0xf]
        %v5740 = vld [vmem:[%s3185 + $0x18] sm:$0xf]
        %v5741 = vld [vmem:[%s3185 + $0x1c] sm:$0xf]
        %v5742 = vld [vmem:[%s3185 + $0x20] sm:$0xf]
        %v5743 = vld [vmem:[%s3185 + $0x24] sm:$0xf]
        %v5744 = vld [vmem:[%s3185 + $0x28] sm:$0xf]
        %v5745 = vld [vmem:[%s3185 + $0x2c] sm:$0xf]
        %v5746 = vld [vmem:[%s3185 + $0x30] sm:$0xf]
        %v5747 = vld [vmem:[%s3185 + $0x34] sm:$0xf]
        %v5748 = vld [vmem:[%s3185 + $0x38] sm:$0xf]
        %v5749 = vld [vmem:[%s3185 + $0x3c] sm:$0xf]
        %v5750 = vld [vmem:[%s7 + $0x5] sm:$0x1]
        %v5751 = vlaneseq
        %v5752 = vshrl.u32 %v5751, 7
        %v5753 = vsub.s32 0, %v5752
        %v5754 = vrot.slane %v5750, %v5753
        %v5771 = vunpack.c.l.b16 %v5734
        %v5772 = vunpack.c.l.b16 %v5735
        %v5773 = vunpack.c.l.b16 %v5736
        %v5774 = vunpack.c.l.b16 %v5737
        %v5775 = vunpack.c.l.b16 %v5738
        %v5776 = vunpack.c.l.b16 %v5739
        %v5777 = vunpack.c.l.b16 %v5740
        %v5778 = vunpack.c.l.b16 %v5741
        %v5779 = vunpack.c.l.b16 %v5742
        %v5780 = vunpack.c.l.b16 %v5743
        %v5781 = vunpack.c.l.b16 %v5744
        %v5782 = vunpack.c.l.b16 %v5745
        %v5783 = vunpack.c.l.b16 %v5746
        %v5784 = vunpack.c.l.b16 %v5747
        %v5785 = vunpack.c.l.b16 %v5748
        %v5786 = vunpack.c.l.b16 %v5749
        %v5787 = vpack.c.b16 %v5772, %v5771
        %v5788 = vpack.c.b16 %v5774, %v5773
        %v5789 = vpack.c.b16 %v5776, %v5775
        %v5790 = vpack.c.b16 %v5778, %v5777
        %v5791 = vpack.c.b16 %v5780, %v5779
        %v5792 = vpack.c.b16 %v5782, %v5781
        %v5793 = vpack.c.b16 %v5784, %v5783
        %v5794 = vpack.c.b16 %v5786, %v5785
        %5803 = vmatprep.subr.bf16.mxu0 0
        %5804 = vmatpush1.bf16.msra.mxu0 %v5787
        %5805 = vmatprep.subr.bf16.mxu0 0
        %5806 = vmatpush1.bf16.msra.mxu0 %v5788
        %5807 = vmatprep.subr.bf16.mxu0 0
        %5808 = vmatpush1.bf16.msra.mxu0 %v5789
        %5809 = vmatprep.subr.bf16.mxu0 0
        %5810 = vmatpush1.bf16.msra.mxu0 %v5790
        %5811 = vmatprep.subr.bf16.mxu0 0
        %5812 = vmatpush1.bf16.msra.mxu0 %v5791
        %5813 = vmatprep.subr.bf16.mxu0 0
        %5814 = vmatpush1.bf16.msra.mxu0 %v5792
        %5815 = vmatprep.subr.bf16.mxu0 0
        %5816 = vmatpush1.bf16.msra.mxu0 %v5793
        %5817 = vmatprep.subr.bf16.mxu0 0
        %5818 = vmatpush1.bf16.msra.mxu0 %v5794
        %5819 = vmatprep.subr.bf16.mxu0 0
        %5820 = vmatpush1.bf16.msra.mxu0 0
        %5821 = vmatprep.subr.bf16.mxu0 0
        %5822 = vmatpush1.bf16.msra.mxu0 0
        %5823 = vmatprep.subr.bf16.mxu0 0
        %5824 = vmatpush1.bf16.msra.mxu0 0
        %5825 = vmatprep.subr.bf16.mxu0 0
        %5826 = vmatpush1.bf16.msra.mxu0 0
        %5827 = vmatprep.subr.bf16.mxu0 0
        %5828 = vmatpush1.bf16.msra.mxu0 0
        %5829 = vmatprep.subr.bf16.mxu0 0
        %5830 = vmatpush1.bf16.msra.mxu0 0
        %5831 = vmatprep.subr.bf16.mxu0 0
        %5832 = vmatpush1.bf16.msra.mxu0 0
        %5833 = vmatprep.subr.bf16.mxu0 0
        %5834 = vmatpush1.bf16.msra.mxu0 0
        %5835 = vmatprep.mubr.bf16.mxu0 0
        %5836 = vmatmul.mubr.bf16.gmra.mrb[0].mxu0 %v5733
        %v5837 = vpop.f32.mrb[0].mxu0
        %v5838 = vadd.f32 %v5754, %v5837
        %v5839 = vpop.f32.mrb[0].mxu0
        %v5840 = vpop.f32.mrb[0].mxu0
        %v5841 = vpop.f32.mrb[0].mxu0
        %5842 = vdwg.mxu0
        %s5843 = scalar_lea.vmem %s371, 2 [#allocation7]
        %5844 = vst [vmem:[%s5843] sm:$0x3] %v5838
        %s5845 = sand.u32 %s220, 1
        %s5846 = scalar_lea.sflag [#allocation4], %s5845
        %s5847 = sand.u32 %s220, 1
        %s5848 = smul.addr %s5847, 4
        %s5849 = scalar_lea.vmem [#allocation7], %s5848
        // Predicated region
        $region61: #{tpu_custom_call.1} parent=51 // pred_check
          %p5850 = pneg %p230
        $region62: #{tpu_custom_call.1} parent=51 // pred_check_branch
          %5852 = sbr.rel (%p5850) target = $region64
        $region63: #{tpu_custom_call.1} parent=51 // pred_region
          %s5854 = ssub.s32 64, 64
          %5855 = vsyncadd %s5846, %s5854
          %s5856 = smul.addr %s24, 2
          %s5857 = smul.addr %s5856, 32
          %s5858 = scalar_lea.hbm %s8, %s5857
          %s5859 = sshll.u32 %s5849, 4
          %s5860 = int_to_ptr.vmem [resolvable:$true] %s5859
          %5865 = dma.vmem_to_hbm [thread:$0]  %s5860, 64, %s5858, %s5846, 32, 32, 2
        $region64: #{tpu_custom_call.1} parent=51 // pred_fallthru
          _
      $region52: #{tpu_custom_call.1} parent=5 // pred_fallthru
        _
      %p5866 = scmp.le.s32.totalorder 2, %s19
      // Predicated region
      $region65: #{tpu_custom_call.1} parent=5 // pred_check
        %p5867 = pneg %p5866
      $region66: #{tpu_custom_call.1} parent=5 // pred_check_branch
        %5869 = sbr.rel (%p5867) target = $region68
      $region67: #{tpu_custom_call.1} parent=5 // pred_region
        %s5870 = ssub.s32 %s19, 2
        // Predicated region
        $region69: #{tpu_custom_call.1} parent=67 // pred_check
          %p5871 = pneg %p236
        $region70: #{tpu_custom_call.1} parent=67 // pred_check_branch
          %5873 = sbr.rel (%p5871) target = $region72
        $region71: #{tpu_custom_call.1} parent=67 // pred_region
          %s5874 = sand.u32 %s221, 1
          %s5875 = scalar_lea.sflag [#allocation4], %s5874
          %s5876 = sand.u32 %s221, 1
          %s5877 = smul.addr %s5876, 4
          %s5878 = scalar_lea.vmem [#allocation7], %s5877
          %5879 = dma.done %s5875, 64
        $region72: #{tpu_custom_call.1} parent=67 // pred_fallthru
          _
      $region68: #{tpu_custom_call.1} parent=5 // pred_fallthru
        _
    $region6: #{tpu_custom_call.1} parent=1 // loop_footer
      %s23 = sadd.s32 1, %s19
    $region7: #{tpu_custom_call.1} parent=1 // loop_footer_branch
      %18 = sbr.rel target = $region3
    $region8: #{tpu_custom_call.1} parent=1 // loop_exit
      _
    %5880 = vsyncpa [#allocation3], 1
    %s5881 = scalar_lea.sflag [#allocation3], 1
    %5882 = vsyncpa %s5881, 1
    %5883 = vsyncpa [#allocation6], 1
    %5884 = vsyncpa [#allocation4], 1
    %s5885 = scalar_lea.sflag [#allocation4], 1
    %5886 = vsyncpa %s5885, 1

</llo_original>
